<compile_context>
chip_gen: v6e
topology: v6e:2x2x1
jax: 0.10.0
libtpu: 0.0.40
codegen_flags: <defaults>
</compile_context>

<pallas_src>
import functools

import jax
import jax.numpy as jnp
from jax.experimental import pallas as pl
from jax.experimental.pallas import tpu as pltpu

SEQ = 8
FEAT = 2048


def _edist_kernel(q_ref, s_ref, onehot_ref, out_ref):
    # q_ref: (tq, 8, D) bf16, s_ref: (ns, 8, D) bf16,
    # onehot_ref: (ns, way) f32 (already scaled by -1/count), out_ref: (tq, way) f32.
    # Means over the seq axis accumulated in f32 (inputs are bf16 only to cut DMA).
    q = jnp.mean(q_ref[...].astype(jnp.float32), axis=1)     # (tq, D)
    s = jnp.mean(s_ref[...].astype(jnp.float32), axis=1)     # (ns, D)

    d = q.shape[1]
    # ||q||^2 per row -> (tq, 1): lane reduce on the XLU (idle slot here).
    q_sq = jnp.sum(q * q, axis=-1, keepdims=True)
    # ||s||^2 laid out directly as a (1, ns) row via an MXU contraction
    # (avoids an unaligned (ns, 1) transpose); f32 accumulation.
    ones_row = jnp.ones((1, d), jnp.float32)
    s_sq = jax.lax.dot_general(
        ones_row, s * s, (((1,), (1,)), ((), ())),
        preferred_element_type=jnp.float32)                  # (1, ns)
    # q . s^T on the MXU in native bf16 with f32 accumulation.
    qs = jax.lax.dot_general(
        q.astype(jnp.bfloat16), s.astype(jnp.bfloat16),
        (((1,), (1,)), ((), ())),
        preferred_element_type=jnp.float32)                  # (tq, ns)

    # Pairwise Euclidean distances (torch.cdist, p=2); clamp for cancellation.
    d2 = jnp.maximum(q_sq + s_sq - 2.0 * qs, 0.0)
    dist = jnp.sqrt(d2)                                      # (tq, ns)

    # Per-class negated mean: onehot_ref already folds -(1/count) per class,
    # so the epilogue is a single matmul + store.
    out_ref[...] = jnp.dot(dist, onehot_ref[...],
                           preferred_element_type=jnp.float32)


@functools.partial(jax.jit, static_argnames=("way", "tq"))
def e_dist_forward(support_set, support_labels, queries, *, way, tq=8):
    """JAX/Pallas equivalent of e_dist.forward; returns the 'logits' array."""
    assert tq % 8 == 0, "query tile must be a multiple of 8 (sublane constraint)"

    # bf16 staging halves bytes moved HBM->VMEM (kernel is DMA/latency bound).
    supports = support_set.reshape(-1, SEQ, FEAT).astype(jnp.bfloat16)
    queries3 = queries.reshape(-1, SEQ, FEAT).astype(jnp.bfloat16)
    ns = supports.shape[0]
    nq = queries3.shape[0]

    labels = support_labels.astype(jnp.int32)
    # One-hot class membership (replaces torch.unique + index_select loop),
    # with the negation and the per-class 1/count folded in. Absent classes
    # have a zero column -> logit column stays 0, matching the reference.
    onehot = (labels[:, None] == jnp.arange(way, dtype=jnp.int32)[None, :]).astype(jnp.float32)
    counts = jnp.sum(onehot, axis=0)                                    # (way,)
    inv_counts = jnp.where(counts > 0, 1.0 / counts, 0.0)
    onehot_scaled = -(onehot * inv_counts[None, :])                     # (ns, way)

    # Pad the query axis up to a multiple of the tile; padded rows are sliced
    # off after the call (they never influence valid rows).
    nq_pad = ((nq + tq - 1) // tq) * tq
    if nq_pad != nq:
        queries3 = jnp.pad(queries3, ((0, nq_pad - nq), (0, 0), (0, 0)))
    num_tiles = nq_pad // tq

    cost = pl.CostEstimate(
        flops=2 * nq_pad * ns * FEAT            # q . s^T
              + 2 * ns * FEAT                   # ||s||^2 row
              + 2 * nq_pad * ns * way,          # per-class reduction matmul
        transcendentals=nq_pad * ns,            # sqrt
        bytes_accessed=queries3.size * 2 + supports.size * 2
                       + onehot_scaled.size * 4 + nq_pad * way * 4,
    )

    out = pl.pallas_call(
        _edist_kernel,
        out_shape=jax.ShapeDtypeStruct((nq_pad, way), jnp.float32),
        grid=(num_tiles,),
        in_specs=[
            pl.BlockSpec((tq, SEQ, FEAT), lambda i: (i, 0, 0)),   # tiled queries
            pl.BlockSpec((ns, SEQ, FEAT), lambda i: (0, 0, 0)),   # supports resident
            pl.BlockSpec((ns, way), lambda i: (0, 0)),            # scaled one-hot resident
        ],
        out_specs=pl.BlockSpec((tq, way), lambda i: (i, 0)),
        compiler_params=pltpu.CompilerParams(
            dimension_semantics=("parallel",)),                   # megacore-shardable
        cost_estimate=cost,
    )(queries3, supports, onehot_scaled)
    return out[:nq]


def _reference(support_set, support_labels, queries, way):
    """Pure-JAX f32 reference mirroring the PyTorch forward."""
    supports = support_set.reshape(-1, SEQ, FEAT)
    queries3 = queries.reshape(-1, SEQ, FEAT)
    q = queries3.mean(axis=1)                       # (nq, 2048)
    nq = q.shape[0]
    dist_all = jnp.zeros((nq, way), jnp.float32)
    for c in range(way):
        mask = support_labels == c
        if not bool(jnp.any(mask)):
            continue
        class_k = supports[mask]                    # (shots_c, 8, 2048)
        proto = class_k.mean(axis=1)                # (shots_c, 2048)
        diff = q[:, None, :] - proto[None, :, :]
        distmat = jnp.sqrt(jnp.sum(diff * diff, axis=-1))   # exact cdist, p=2
        dist_all = dist_all.at[:, c].set(-distmat.mean(axis=1))
    return dist_all


if __name__ == "__main__":
    key = jax.random.PRNGKey(0)
    k_s, k_q = jax.random.split(key)

    way = 5
    shot = 2
    n_support = way * shot        # 10
    n_queries = 20                # 4 queries per class -> exercises grid tiling

    support_set = jax.random.normal(k_s, (n_support, SEQ, FEAT), dtype=jnp.float32)
    queries = jax.random.normal(k_q, (n_queries, SEQ, FEAT), dtype=jnp.float32)
    support_labels = jnp.array(
        [c for c in range(way) for _ in range(shot)], dtype=jnp.int32)

    logits = e_dist_forward(support_set, support_labels, queries, way=way)
    logits = jax.block_until_ready(logits)

    ref = _reference(support_set, support_labels, queries, way)
    assert logits.shape == (n_queries, way)
    assert jnp.allclose(logits, ref, rtol=1e-3, atol=5e-2), (
        f"max abs err {jnp.max(jnp.abs(logits - ref))}")

    print("KERNEL_OK")
</pallas_src>

<mosaic_0001>
module attributes {stable_mosaic.version = 11 : i64} {
  func.func @_edist_kernel(%arg0: i32, %arg1: memref<8x8x2048xbf16, #tpu.memory_space<vmem>>, %arg2: memref<10x8x2048xbf16, #tpu.memory_space<vmem>>, %arg3: memref<10x5xf32, #tpu.memory_space<vmem>>, %arg4: memref<8x5xf32, #tpu.memory_space<vmem>>) attributes {dimension_semantics = [#tpu.dimension_semantics<parallel>], iteration_bounds = array<i64: 3>, scalar_prefetch = 0 : i64, scratch_operands = 0 : i64, tpu.core_type = #tpu.core_type<tc>, window_params = [{transform_indices = @transform_0, window_bounds = array<i64: 8, 8, 2048>}, {pipeline_mode = #tpu.pipeline_mode<synchronous>, transform_indices = @transform_1, window_bounds = array<i64: 10, 8, 2048>}, {pipeline_mode = #tpu.pipeline_mode<synchronous>, transform_indices = @transform_2, window_bounds = array<i64: 10, 5>}, {transform_indices = @transform_3, window_bounds = array<i64: 8, 5>}]} {
    %c0 = arith.constant 0 : index
    %c0_0 = arith.constant 0 : index
    %c0_1 = arith.constant 0 : index
    %0 = vector.load %arg1[%c0, %c0_0, %c0_1] : memref<8x8x2048xbf16, #tpu.memory_space<vmem>>, vector<8x8x2048xbf16>
    %1 = arith.extf %0 : vector<8x8x2048xbf16> to vector<8x8x2048xf32>
    %cst = arith.constant dense<0.000000e+00> : vector<8x2048xf32>
    %2 = vector.multi_reduction <add>, %1, %cst [1] : vector<8x8x2048xf32> to vector<8x2048xf32>
    %cst_2 = arith.constant 8.000000e+00 : f32
    %3 = vector.broadcast %cst_2 : f32 to vector<8x2048xf32>
    %4 = arith.divf %2, %3 : vector<8x2048xf32>
    %c0_3 = arith.constant 0 : index
    %c0_4 = arith.constant 0 : index
    %c0_5 = arith.constant 0 : index
    %5 = vector.load %arg2[%c0_3, %c0_4, %c0_5] : memref<10x8x2048xbf16, #tpu.memory_space<vmem>>, vector<10x8x2048xbf16>
    %6 = arith.extf %5 : vector<10x8x2048xbf16> to vector<10x8x2048xf32>
    %cst_6 = arith.constant dense<0.000000e+00> : vector<10x2048xf32>
    %7 = vector.multi_reduction <add>, %6, %cst_6 [1] : vector<10x8x2048xf32> to vector<10x2048xf32>
    %cst_7 = arith.constant 8.000000e+00 : f32
    %8 = vector.broadcast %cst_7 : f32 to vector<10x2048xf32>
    %9 = arith.divf %7, %8 : vector<10x2048xf32>
    %10 = arith.mulf %4, %4 : vector<8x2048xf32>
    %cst_8 = arith.constant dense<0.000000e+00> : vector<8xf32>
    %11 = vector.multi_reduction <add>, %10, %cst_8 [1] : vector<8x2048xf32> to vector<8xf32>
    %12 = vector.shape_cast %11 : vector<8xf32> to vector<8x1xf32>
    %cst_9 = arith.constant 1.000000e+00 : f32
    %13 = vector.broadcast %cst_9 : f32 to vector<1x2048xf32>
    %14 = arith.mulf %9, %9 : vector<10x2048xf32>
    %cst_10 = arith.constant dense<0.000000e+00> : vector<1x10xf32>
    %15 = tpu.matmul %13, %14, %cst_10 {dimension_numbers = #tpu.dot_dimension_numbers<[1], [1], [0], [0], [0, 0, 1, 0], [], []>} : vector<1x2048xf32>, vector<10x2048xf32>, vector<1x10xf32> -> vector<1x10xf32>
    %16 = arith.truncf %4 : vector<8x2048xf32> to vector<8x2048xbf16>
    %17 = arith.truncf %9 : vector<10x2048xf32> to vector<10x2048xbf16>
    %cst_11 = arith.constant dense<0.000000e+00> : vector<8x10xf32>
    %18 = tpu.matmul %16, %17, %cst_11 {dimension_numbers = #tpu.dot_dimension_numbers<[1], [1], [0], [0], [0, 0, 1, 0], [], []>} : vector<8x2048xbf16>, vector<10x2048xbf16>, vector<8x10xf32> -> vector<8x10xf32>
    %19 = vector.broadcast %12 : vector<8x1xf32> to vector<8x10xf32>
    %20 = vector.broadcast %15 : vector<1x10xf32> to vector<8x10xf32>
    %21 = arith.addf %19, %20 : vector<8x10xf32>
    %cst_12 = arith.constant 2.000000e+00 : f32
    %22 = vector.broadcast %cst_12 : f32 to vector<8x10xf32>
    %23 = arith.mulf %22, %18 : vector<8x10xf32>
    %24 = arith.subf %21, %23 : vector<8x10xf32>
    %cst_13 = arith.constant 0.000000e+00 : f32
    %25 = vector.broadcast %cst_13 : f32 to vector<8x10xf32>
    %26 = arith.maximumf %24, %25 : vector<8x10xf32>
    %27 = math.sqrt %26 : vector<8x10xf32>
    %c0_14 = arith.constant 0 : index
    %c0_15 = arith.constant 0 : index
    %28 = vector.load %arg3[%c0_14, %c0_15] : memref<10x5xf32, #tpu.memory_space<vmem>>, vector<10x5xf32>
    %cst_16 = arith.constant dense<0.000000e+00> : vector<8x5xf32>
    %29 = tpu.matmul %27, %28, %cst_16 {dimension_numbers = #tpu.dot_dimension_numbers<[1], [0], [0], [1], [0, 0, 1, 1], [], []>} : vector<8x10xf32>, vector<10x5xf32>, vector<8x5xf32> -> vector<8x5xf32>
    %c0_17 = arith.constant 0 : index
    %c0_18 = arith.constant 0 : index
    %30 = vector.load %arg4[%c0_17, %c0_18] : memref<8x5xf32, #tpu.memory_space<vmem>>, vector<8x5xf32>
    tpu.vector_store %arg4[%c0_17, %c0_18], %29 {strides = array<i32>} : memref<8x5xf32, #tpu.memory_space<vmem>>, vector<8x5xf32>,
    return
  }
  func.func @transform_0(%arg0: i32) -> (i32, i32, i32) {
    %c0_i32 = arith.constant 0 : i32
    %c0_i32_0 = arith.constant 0 : i32
    %c0_i32_1 = arith.constant 0 : i32
    return %arg0, %c0_i32, %c0_i32_0 : i32, i32, i32
  }
  func.func @transform_1(%arg0: i32) -> (i32, i32, i32) {
    %c0_i32 = arith.constant 0 : i32
    %c0_i32_0 = arith.constant 0 : i32
    %c0_i32_1 = arith.constant 0 : i32
    %c0_i32_2 = arith.constant 0 : i32
    return %c0_i32, %c0_i32_0, %c0_i32_1 : i32, i32, i32
  }
  func.func @transform_2(%arg0: i32) -> (i32, i32) {
    %c0_i32 = arith.constant 0 : i32
    %c0_i32_0 = arith.constant 0 : i32
    %c0_i32_1 = arith.constant 0 : i32
    return %c0_i32, %c0_i32_0 : i32, i32
  }
  func.func @transform_3(%arg0: i32) -> (i32, i32) {
    %c0_i32 = arith.constant 0 : i32
    %c0_i32_0 = arith.constant 0 : i32
    return %arg0, %c0_i32 : i32, i32
  }
}

</mosaic_0001>

<llo_original>
// kernel: e_dist_forward.1
$region0: #{e_dist_forward.1}
  #allocation0 [shape = 'u32[]', space=smem, size = 0x4, offset = 0x4, fixed_abs, tag = 'smem constant byte address 0x4 - core index']
  #allocation1 [shape = 'u32[144,128]{1,0:T(1,128)}', space=vmem, size = 0x12000, scoped, tag = 'internal scratch']
  %s0 = inlined_call_operand.vmem [shape: bf16[24,8,2048], index: 0, kind: input, shape index: {}]
  %s1 = inlined_call_operand.vmem [shape: bf16[10,8,2048], index: 1, kind: input, shape index: {}]
  %s2 = inlined_call_operand.vmem [shape: f32[10,5], index: 2, kind: input, shape index: {}]
  %s3 = inlined_call_operand.vmem [shape: f32[24,5], index: 3, kind: output, shape index: {}]
  %s4 = sld [smem:[#allocation0]]
  $region45: #{e_dist_forward.1} parent=0
    _
  %s6 = ssub.s32 1, %s4
  %s7 = scalar_select 0, %s6, %s4
  loop: start=0, step=1, limit=5
  $region2: #{e_dist_forward.1} parent=0 // loop_pre_header
    _
  $region3: #{e_dist_forward.1} parent=0 // loop_header
    %s9 = sphi 0, %s13
    %p10 = scmp.ge.s32.totalorder %s9, 5
    %s19 = sphi 0, %s21
    %s22 = sphi 0, %s19
    %s23 = sphi 0, %s22
    %s39 = sphi 0, %s23
    %s43 = sphi 0, %s43
    %s45 = sphi 0, %s43
    %s46 = sphi 0, %s45
    %s60 = sphi 0, %s46
    %s64 = sphi 0, %s64
    %s66 = sphi 0, %s64
    %s67 = sphi 0, %s66
    %s81 = sphi 0, %s67
    %s87 = sphi 0, %s89
    %s90 = sphi 0, %s87
    %s91 = sphi 0, %s90
    %s107 = sphi 0, %s91
  $region4: #{e_dist_forward.1} parent=0 // loop_header_branch
    %12 = sbr.rel (%p10) target = $region8
  $region5: #{e_dist_forward.1} parent=0 // loop_body
    %s14 = ssub.s32 %s9, 1
    %s15 = ssub.s32 %s9, 2
    %s16 = sadd.s32 %s9, 1
    %s17 = ssub.s32 %s9, %s16
    %p18 = scmp.eq.s32.totalorder %s17, 0
    %s20 = sadd.s32 %s19, 1
    %s21 = scalar_select %p18, %s19, %s20
    %p24 = pneg %p18
    %p25 = scmp.eq.s32.totalorder %s9, 2
    %p26 = por %p24, %p25
    %p27 = scmp.ne.s32.totalorder %s19, %s22
    %p28 = scmp.eq.s32.totalorder %s9, 0
    %p29 = por %p27, %p28
    %p30 = scmp.ne.s32.totalorder %s19, %s22
    %p31 = scmp.eq.s32.totalorder %s14, 2
    %p32 = por %p30, %p31
    %p33 = scmp.ne.s32.totalorder %s22, %s23
    %p34 = scmp.eq.s32.totalorder %s14, 0
    %p35 = por %p33, %p34
    %p36 = scmp.ne.s32.totalorder %s22, %s23
    %p37 = scmp.eq.s32.totalorder %s15, 2
    %p38 = por %p36, %p37
    %p40 = scmp.ne.s32.totalorder %s23, %s39
    %p41 = scmp.eq.s32.totalorder %s15, 0
    %p42 = por %p40, %p41
    %s44 = sadd.s32 %s43, 1
    %p47 = scmp.eq.s32.totalorder %s9, 2
    %p48 = scmp.ne.s32.totalorder %s43, %s45
    %p49 = scmp.eq.s32.totalorder %s9, 0
    %p50 = por %p48, %p49
    %p51 = scmp.ne.s32.totalorder %s43, %s45
    %p52 = scmp.eq.s32.totalorder %s14, 2
    %p53 = por %p51, %p52
    %p54 = scmp.ne.s32.totalorder %s45, %s46
    %p55 = scmp.eq.s32.totalorder %s14, 0
    %p56 = por %p54, %p55
    %p57 = scmp.ne.s32.totalorder %s45, %s46
    %p58 = scmp.eq.s32.totalorder %s15, 2
    %p59 = por %p57, %p58
    %p61 = scmp.ne.s32.totalorder %s46, %s60
    %p62 = scmp.eq.s32.totalorder %s15, 0
    %p63 = por %p61, %p62
    %s65 = sadd.s32 %s64, 1
    %p68 = scmp.eq.s32.totalorder %s9, 2
    %p69 = scmp.ne.s32.totalorder %s64, %s66
    %p70 = scmp.eq.s32.totalorder %s9, 0
    %p71 = por %p69, %p70
    %p72 = scmp.ne.s32.totalorder %s64, %s66
    %p73 = scmp.eq.s32.totalorder %s14, 2
    %p74 = por %p72, %p73
    %p75 = scmp.ne.s32.totalorder %s66, %s67
    %p76 = scmp.eq.s32.totalorder %s14, 0
    %p77 = por %p75, %p76
    %p78 = scmp.ne.s32.totalorder %s66, %s67
    %p79 = scmp.eq.s32.totalorder %s15, 2
    %p80 = por %p78, %p79
    %p82 = scmp.ne.s32.totalorder %s67, %s81
    %p83 = scmp.eq.s32.totalorder %s15, 0
    %p84 = por %p82, %p83
    %s85 = ssub.s32 %s9, %s16
    %p86 = scmp.eq.s32.totalorder %s85, 0
    %s88 = sadd.s32 %s87, 1
    %s89 = scalar_select %p86, %s87, %s88
    %p92 = pneg %p86
    %p93 = scmp.eq.s32.totalorder %s9, 2
    %p94 = por %p92, %p93
    %p95 = scmp.ne.s32.totalorder %s87, %s90
    %p96 = scmp.eq.s32.totalorder %s9, 0
    %p97 = por %p95, %p96
    %p98 = scmp.ne.s32.totalorder %s87, %s90
    %p99 = scmp.eq.s32.totalorder %s14, 2
    %p100 = por %p98, %p99
    %p101 = scmp.ne.s32.totalorder %s90, %s91
    %p102 = scmp.eq.s32.totalorder %s14, 0
    %p103 = por %p101, %p102
    %p104 = scmp.ne.s32.totalorder %s90, %s91
    %p105 = scmp.eq.s32.totalorder %s15, 2
    %p106 = por %p104, %p105
    %p108 = scmp.ne.s32.totalorder %s91, %s107
    %p109 = scmp.eq.s32.totalorder %s15, 0
    %p110 = por %p108, %p109
    %p111 = scmp.le.s32.totalorder 1, %s9
    %p112 = scmp.lt.s32.totalorder %s9, 4
    %p113 = pnand %p111, %p112
    %p114 = pneg %p113
    // Predicated region
    $region9: #{e_dist_forward.1} parent=5 // pred_check
      _
    $region10: #{e_dist_forward.1} parent=5 // pred_check_branch
      %116 = sbr.rel (%p113) target = $region12
    $region11: #{e_dist_forward.1} parent=5 // pred_region
      %s117 = ssub.s32 %s9, 1
      // Predicated region
      $region13: #{e_dist_forward.1} parent=11 // pred_check
        %p118 = pneg %p56
      $region14: #{e_dist_forward.1} parent=11 // pred_check_branch
        %120 = sbr.rel (%p118) target = $region16
      $region15: #{e_dist_forward.1} parent=11 // pred_region
        _
      $region16: #{e_dist_forward.1} parent=11 // pred_fallthru
        _
      // Predicated region
      $region17: #{e_dist_forward.1} parent=11 // pred_check
        %p121 = pneg %p77
      $region18: #{e_dist_forward.1} parent=11 // pred_check_branch
        %123 = sbr.rel (%p121) target = $region20
      $region19: #{e_dist_forward.1} parent=11 // pred_region
        _
      $region20: #{e_dist_forward.1} parent=11 // pred_fallthru
        _
    $region12: #{e_dist_forward.1} parent=5 // pred_fallthru
      _
    %p124 = scmp.lt.s32.totalorder %s9, 3
    // Predicated region
    $region21: #{e_dist_forward.1} parent=5 // pred_check
      %p125 = pneg %p124
    $region22: #{e_dist_forward.1} parent=5 // pred_check_branch
      %127 = sbr.rel (%p125) target = $region24
    $region23: #{e_dist_forward.1} parent=5 // pred_region
      // Predicated region
      $region25: #{e_dist_forward.1} parent=23 // pred_check
        %p128 = pneg %p29
      $region26: #{e_dist_forward.1} parent=23 // pred_check_branch
        %130 = sbr.rel (%p128) target = $region28
      $region27: #{e_dist_forward.1} parent=23 // pred_region
        %s131 = smul.u32 8, %s9
        %p132 = scmp.lt.s32.totalorder %s131, 23
        %s133 = scalar_select %p132, %s131, 23
        %s134 = smul.addr %s133, 16
        %s135 = smul.addr %s134, 4
        %s136 = scalar_lea.vmem %s0, %s135
        %s137 = smul.u32 8, %s9
      $region28: #{e_dist_forward.1} parent=23 // pred_fallthru
        _
    $region24: #{e_dist_forward.1} parent=5 // pred_fallthru
      _
    %p138 = scmp.le.s32.totalorder 1, %s9
    %p139 = scmp.lt.s32.totalorder %s9, 4
    %p140 = pnand %p138, %p139
    %p141 = pneg %p140
    // Predicated region
    $region29: #{e_dist_forward.1} parent=5 // pred_check
      _
    $region30: #{e_dist_forward.1} parent=5 // pred_check_branch
      %143 = sbr.rel (%p140) target = $region32
    $region31: #{e_dist_forward.1} parent=5 // pred_region
      %s144 = ssub.s32 %s9, 1
      %s145 = smul.u32 8, %s14
      %p146 = scmp.lt.s32.totalorder %s145, 23
      %s147 = scalar_select %p146, %s145, 23
      %s148 = smul.addr %s147, 16
      %s149 = smul.addr %s148, 4
      %s150 = scalar_lea.vmem %s0, %s149
      %p151 = pneg %p35
      %p152 = pneg %p32
      %p153 = pneg %p56
      %p154 = pneg %p53
      %p155 = pneg %p77
      %p156 = pneg %p74
      %p157 = pneg %p103
      %p158 = pneg %p100
      %p159 = scmp.lt.s32.totalorder %s14, 2
      %s160 = scalar_select %p159, %s14, 2
      %s161 = smul.addr %s160, 8
      %s162 = scalar_lea.vmem %s3, %s161
      %s163 = smul.u32 8, %s14
      %p164 = scmp.lt.s32.totalorder %s163, 23
      %s165 = scalar_select %p164, %s163, 23
      %s166 = smul.addr %s165, 16
      %s167 = smul.addr %s166, 4
      %s168 = scalar_lea.vmem %s0, %s167
      %s169 = smul.u32 8, %s14
      %p170 = scmp.lt.s32.totalorder %s14, 2
      %s171 = scalar_select %p170, %s14, 2
      %s172 = smul.addr %s171, 8
      %s173 = scalar_lea.vmem %s3, %s172
      %v175 = vld [vmem:[%s168] sm:$0xff]
      %v176 = vld [vmem:[%s168 + $0x8] sm:$0xff]
      %v177 = vld [vmem:[%s168 + $0x10] sm:$0xff]
      %v178 = vld [vmem:[%s168 + $0x18] sm:$0xff]
      %v179 = vld [vmem:[%s168 + $0x20] sm:$0xff]
      %v180 = vld [vmem:[%s168 + $0x28] sm:$0xff]
      %v181 = vld [vmem:[%s168 + $0x30] sm:$0xff]
      %v182 = vld [vmem:[%s168 + $0x38] sm:$0xff]
      %v183 = vld [vmem:[%s168 + $0x40] sm:$0xff]
      %v184 = vld [vmem:[%s168 + $0x48] sm:$0xff]
      %v185 = vld [vmem:[%s168 + $0x50] sm:$0xff]
      %v186 = vld [vmem:[%s168 + $0x58] sm:$0xff]
      %v187 = vld [vmem:[%s168 + $0x60] sm:$0xff]
      %v188 = vld [vmem:[%s168 + $0x68] sm:$0xff]
      %v189 = vld [vmem:[%s168 + $0x70] sm:$0xff]
      %v190 = vld [vmem:[%s168 + $0x78] sm:$0xff]
      %v191 = vld [vmem:[%s168 + $0x80] sm:$0xff]
      %v192 = vld [vmem:[%s168 + $0x88] sm:$0xff]
      %v193 = vld [vmem:[%s168 + $0x90] sm:$0xff]
      %v194 = vld [vmem:[%s168 + $0x98] sm:$0xff]
      %v195 = vld [vmem:[%s168 + $0xa0] sm:$0xff]
      %v196 = vld [vmem:[%s168 + $0xa8] sm:$0xff]
      %v197 = vld [vmem:[%s168 + $0xb0] sm:$0xff]
      %v198 = vld [vmem:[%s168 + $0xb8] sm:$0xff]
      %v199 = vld [vmem:[%s168 + $0xc0] sm:$0xff]
      %v200 = vld [vmem:[%s168 + $0xc8] sm:$0xff]
      %v201 = vld [vmem:[%s168 + $0xd0] sm:$0xff]
      %v202 = vld [vmem:[%s168 + $0xd8] sm:$0xff]
      %v203 = vld [vmem:[%s168 + $0xe0] sm:$0xff]
      %v204 = vld [vmem:[%s168 + $0xe8] sm:$0xff]
      %v205 = vld [vmem:[%s168 + $0xf0] sm:$0xff]
      %v206 = vld [vmem:[%s168 + $0xf8] sm:$0xff]
      %v207 = vld [vmem:[%s168 + $0x100] sm:$0xff]
      %v208 = vld [vmem:[%s168 + $0x108] sm:$0xff]
      %v209 = vld [vmem:[%s168 + $0x110] sm:$0xff]
      %v210 = vld [vmem:[%s168 + $0x118] sm:$0xff]
      %v211 = vld [vmem:[%s168 + $0x120] sm:$0xff]
      %v212 = vld [vmem:[%s168 + $0x128] sm:$0xff]
      %v213 = vld [vmem:[%s168 + $0x130] sm:$0xff]
      %v214 = vld [vmem:[%s168 + $0x138] sm:$0xff]
      %v215 = vld [vmem:[%s168 + $0x140] sm:$0xff]
      %v216 = vld [vmem:[%s168 + $0x148] sm:$0xff]
      %v217 = vld [vmem:[%s168 + $0x150] sm:$0xff]
      %v218 = vld [vmem:[%s168 + $0x158] sm:$0xff]
      %v219 = vld [vmem:[%s168 + $0x160] sm:$0xff]
      %v220 = vld [vmem:[%s168 + $0x168] sm:$0xff]
      %v221 = vld [vmem:[%s168 + $0x170] sm:$0xff]
      %v222 = vld [vmem:[%s168 + $0x178] sm:$0xff]
      %v223 = vld [vmem:[%s168 + $0x180] sm:$0xff]
      %v224 = vld [vmem:[%s168 + $0x188] sm:$0xff]
      %v225 = vld [vmem:[%s168 + $0x190] sm:$0xff]
      %v226 = vld [vmem:[%s168 + $0x198] sm:$0xff]
      %v227 = vld [vmem:[%s168 + $0x1a0] sm:$0xff]
      %v228 = vld [vmem:[%s168 + $0x1a8] sm:$0xff]
      %v229 = vld [vmem:[%s168 + $0x1b0] sm:$0xff]
      %v230 = vld [vmem:[%s168 + $0x1b8] sm:$0xff]
      %v231 = vld [vmem:[%s168 + $0x1c0] sm:$0xff]
      %v232 = vld [vmem:[%s168 + $0x1c8] sm:$0xff]
      %v233 = vld [vmem:[%s168 + $0x1d0] sm:$0xff]
      %v234 = vld [vmem:[%s168 + $0x1d8] sm:$0xff]
      %v235 = vld [vmem:[%s168 + $0x1e0] sm:$0xff]
      %v236 = vld [vmem:[%s168 + $0x1e8] sm:$0xff]
      %v237 = vld [vmem:[%s168 + $0x1f0] sm:$0xff]
      %v238 = vld [vmem:[%s168 + $0x1f8] sm:$0xff]
      %v239 = vunpack.c.l.bf16 %v175
      %v240 = vunpack.c.h.bf16 %v175
      %v241 = vunpack.c.l.bf16 %v176
      %v242 = vunpack.c.h.bf16 %v176
      %v243 = vunpack.c.l.bf16 %v177
      %v244 = vunpack.c.h.bf16 %v177
      %v245 = vunpack.c.l.bf16 %v178
      %v246 = vunpack.c.h.bf16 %v178
      %v247 = vunpack.c.l.bf16 %v179
      %v248 = vunpack.c.h.bf16 %v179
      %v249 = vunpack.c.l.bf16 %v180
      %v250 = vunpack.c.h.bf16 %v180
      %v251 = vunpack.c.l.bf16 %v181
      %v252 = vunpack.c.h.bf16 %v181
      %v253 = vunpack.c.l.bf16 %v182
      %v254 = vunpack.c.h.bf16 %v182
      %v255 = vunpack.c.l.bf16 %v183
      %v256 = vunpack.c.h.bf16 %v183
      %v257 = vunpack.c.l.bf16 %v184
      %v258 = vunpack.c.h.bf16 %v184
      %v259 = vunpack.c.l.bf16 %v185
      %v260 = vunpack.c.h.bf16 %v185
      %v261 = vunpack.c.l.bf16 %v186
      %v262 = vunpack.c.h.bf16 %v186
      %v263 = vunpack.c.l.bf16 %v187
      %v264 = vunpack.c.h.bf16 %v187
      %v265 = vunpack.c.l.bf16 %v188
      %v266 = vunpack.c.h.bf16 %v188
      %v267 = vunpack.c.l.bf16 %v189
      %v268 = vunpack.c.h.bf16 %v189
      %v269 = vunpack.c.l.bf16 %v190
      %v270 = vunpack.c.h.bf16 %v190
      %v271 = vunpack.c.l.bf16 %v191
      %v272 = vunpack.c.h.bf16 %v191
      %v273 = vunpack.c.l.bf16 %v192
      %v274 = vunpack.c.h.bf16 %v192
      %v275 = vunpack.c.l.bf16 %v193
      %v276 = vunpack.c.h.bf16 %v193
      %v277 = vunpack.c.l.bf16 %v194
      %v278 = vunpack.c.h.bf16 %v194
      %v279 = vunpack.c.l.bf16 %v195
      %v280 = vunpack.c.h.bf16 %v195
      %v281 = vunpack.c.l.bf16 %v196
      %v282 = vunpack.c.h.bf16 %v196
      %v283 = vunpack.c.l.bf16 %v197
      %v284 = vunpack.c.h.bf16 %v197
      %v285 = vunpack.c.l.bf16 %v198
      %v286 = vunpack.c.h.bf16 %v198
      %v287 = vunpack.c.l.bf16 %v199
      %v288 = vunpack.c.h.bf16 %v199
      %v289 = vunpack.c.l.bf16 %v200
      %v290 = vunpack.c.h.bf16 %v200
      %v291 = vunpack.c.l.bf16 %v201
      %v292 = vunpack.c.h.bf16 %v201
      %v293 = vunpack.c.l.bf16 %v202
      %v294 = vunpack.c.h.bf16 %v202
      %v295 = vunpack.c.l.bf16 %v203
      %v296 = vunpack.c.h.bf16 %v203
      %v297 = vunpack.c.l.bf16 %v204
      %v298 = vunpack.c.h.bf16 %v204
      %v299 = vunpack.c.l.bf16 %v205
      %v300 = vunpack.c.h.bf16 %v205
      %v301 = vunpack.c.l.bf16 %v206
      %v302 = vunpack.c.h.bf16 %v206
      %v303 = vunpack.c.l.bf16 %v207
      %v304 = vunpack.c.h.bf16 %v207
      %v305 = vunpack.c.l.bf16 %v208
      %v306 = vunpack.c.h.bf16 %v208
      %v307 = vunpack.c.l.bf16 %v209
      %v308 = vunpack.c.h.bf16 %v209
      %v309 = vunpack.c.l.bf16 %v210
      %v310 = vunpack.c.h.bf16 %v210
      %v311 = vunpack.c.l.bf16 %v211
      %v312 = vunpack.c.h.bf16 %v211
      %v313 = vunpack.c.l.bf16 %v212
      %v314 = vunpack.c.h.bf16 %v212
      %v315 = vunpack.c.l.bf16 %v213
      %v316 = vunpack.c.h.bf16 %v213
      %v317 = vunpack.c.l.bf16 %v214
      %v318 = vunpack.c.h.bf16 %v214
      %v319 = vunpack.c.l.bf16 %v215
      %v320 = vunpack.c.h.bf16 %v215
      %v321 = vunpack.c.l.bf16 %v216
      %v322 = vunpack.c.h.bf16 %v216
      %v323 = vunpack.c.l.bf16 %v217
      %v324 = vunpack.c.h.bf16 %v217
      %v325 = vunpack.c.l.bf16 %v218
      %v326 = vunpack.c.h.bf16 %v218
      %v327 = vunpack.c.l.bf16 %v219
      %v328 = vunpack.c.h.bf16 %v219
      %v329 = vunpack.c.l.bf16 %v220
      %v330 = vunpack.c.h.bf16 %v220
      %v331 = vunpack.c.l.bf16 %v221
      %v332 = vunpack.c.h.bf16 %v221
      %v333 = vunpack.c.l.bf16 %v222
      %v334 = vunpack.c.h.bf16 %v222
      %v335 = vunpack.c.l.bf16 %v223
      %v336 = vunpack.c.h.bf16 %v223
      %v337 = vunpack.c.l.bf16 %v224
      %v338 = vunpack.c.h.bf16 %v224
      %v339 = vunpack.c.l.bf16 %v225
      %v340 = vunpack.c.h.bf16 %v225
      %v341 = vunpack.c.l.bf16 %v226
      %v342 = vunpack.c.h.bf16 %v226
      %v343 = vunpack.c.l.bf16 %v227
      %v344 = vunpack.c.h.bf16 %v227
      %v345 = vunpack.c.l.bf16 %v228
      %v346 = vunpack.c.h.bf16 %v228
      %v347 = vunpack.c.l.bf16 %v229
      %v348 = vunpack.c.h.bf16 %v229
      %v349 = vunpack.c.l.bf16 %v230
      %v350 = vunpack.c.h.bf16 %v230
      %v351 = vunpack.c.l.bf16 %v231
      %v352 = vunpack.c.h.bf16 %v231
      %v353 = vunpack.c.l.bf16 %v232
      %v354 = vunpack.c.h.bf16 %v232
      %v355 = vunpack.c.l.bf16 %v233
      %v356 = vunpack.c.h.bf16 %v233
      %v357 = vunpack.c.l.bf16 %v234
      %v358 = vunpack.c.h.bf16 %v234
      %v359 = vunpack.c.l.bf16 %v235
      %v360 = vunpack.c.h.bf16 %v235
      %v361 = vunpack.c.l.bf16 %v236
      %v362 = vunpack.c.h.bf16 %v236
      %v363 = vunpack.c.l.bf16 %v237
      %v364 = vunpack.c.h.bf16 %v237
      %v365 = vunpack.c.l.bf16 %v238
      %v366 = vunpack.c.h.bf16 %v238
      %v367 = vrot.slane %v239, 4
      %v368 = vadd.f32 %v239, %v367
      %v369 = vrot.slane %v368, 2
      %v370 = vadd.f32 %v368, %v369
      %v371 = vrot.slane %v370, 1
      %v372 = vadd.f32 %v370, %v371
      %v373 = vrot.slane %v240, 4
      %v374 = vadd.f32 %v240, %v373
      %v375 = vrot.slane %v374, 2
      %v376 = vadd.f32 %v374, %v375
      %v377 = vrot.slane %v376, 1
      %v378 = vadd.f32 %v376, %v377
      %v379 = vrot.slane %v241, 4
      %v380 = vadd.f32 %v241, %v379
      %v381 = vrot.slane %v380, 2
      %v382 = vadd.f32 %v380, %v381
      %v383 = vrot.slane %v382, 1
      %v384 = vadd.f32 %v382, %v383
      %v385 = vrot.slane %v242, 4
      %v386 = vadd.f32 %v242, %v385
      %v387 = vrot.slane %v386, 2
      %v388 = vadd.f32 %v386, %v387
      %v389 = vrot.slane %v388, 1
      %v390 = vadd.f32 %v388, %v389
      %v391 = vrot.slane %v243, 4
      %v392 = vadd.f32 %v243, %v391
      %v393 = vrot.slane %v392, 2
      %v394 = vadd.f32 %v392, %v393
      %v395 = vrot.slane %v394, 1
      %v396 = vadd.f32 %v394, %v395
      %v397 = vrot.slane %v244, 4
      %v398 = vadd.f32 %v244, %v397
      %v399 = vrot.slane %v398, 2
      %v400 = vadd.f32 %v398, %v399
      %v401 = vrot.slane %v400, 1
      %v402 = vadd.f32 %v400, %v401
      %v403 = vrot.slane %v245, 4
      %v404 = vadd.f32 %v245, %v403
      %v405 = vrot.slane %v404, 2
      %v406 = vadd.f32 %v404, %v405
      %v407 = vrot.slane %v406, 1
      %v408 = vadd.f32 %v406, %v407
      %v409 = vrot.slane %v246, 4
      %v410 = vadd.f32 %v246, %v409
      %v411 = vrot.slane %v410, 2
      %v412 = vadd.f32 %v410, %v411
      %v413 = vrot.slane %v412, 1
      %v414 = vadd.f32 %v412, %v413
      %v415 = vrot.slane %v247, 4
      %v416 = vadd.f32 %v247, %v415
      %v417 = vrot.slane %v416, 2
      %v418 = vadd.f32 %v416, %v417
      %v419 = vrot.slane %v418, 1
      %v420 = vadd.f32 %v418, %v419
      %v421 = vrot.slane %v248, 4
      %v422 = vadd.f32 %v248, %v421
      %v423 = vrot.slane %v422, 2
      %v424 = vadd.f32 %v422, %v423
      %v425 = vrot.slane %v424, 1
      %v426 = vadd.f32 %v424, %v425
      %v427 = vrot.slane %v249, 4
      %v428 = vadd.f32 %v249, %v427
      %v429 = vrot.slane %v428, 2
      %v430 = vadd.f32 %v428, %v429
      %v431 = vrot.slane %v430, 1
      %v432 = vadd.f32 %v430, %v431
      %v433 = vrot.slane %v250, 4
      %v434 = vadd.f32 %v250, %v433
      %v435 = vrot.slane %v434, 2
      %v436 = vadd.f32 %v434, %v435
      %v437 = vrot.slane %v436, 1
      %v438 = vadd.f32 %v436, %v437
      %v439 = vrot.slane %v251, 4
      %v440 = vadd.f32 %v251, %v439
      %v441 = vrot.slane %v440, 2
      %v442 = vadd.f32 %v440, %v441
      %v443 = vrot.slane %v442, 1
      %v444 = vadd.f32 %v442, %v443
      %v445 = vrot.slane %v252, 4
      %v446 = vadd.f32 %v252, %v445
      %v447 = vrot.slane %v446, 2
      %v448 = vadd.f32 %v446, %v447
      %v449 = vrot.slane %v448, 1
      %v450 = vadd.f32 %v448, %v449
      %v451 = vrot.slane %v253, 4
      %v452 = vadd.f32 %v253, %v451
      %v453 = vrot.slane %v452, 2
      %v454 = vadd.f32 %v452, %v453
      %v455 = vrot.slane %v454, 1
      %v456 = vadd.f32 %v454, %v455
      %v457 = vrot.slane %v254, 4
      %v458 = vadd.f32 %v254, %v457
      %v459 = vrot.slane %v458, 2
      %v460 = vadd.f32 %v458, %v459
      %v461 = vrot.slane %v460, 1
      %v462 = vadd.f32 %v460, %v461
      %v463 = vrot.slane %v255, 4
      %v464 = vadd.f32 %v255, %v463
      %v465 = vrot.slane %v464, 2
      %v466 = vadd.f32 %v464, %v465
      %v467 = vrot.slane %v466, 1
      %v468 = vadd.f32 %v466, %v467
      %v469 = vrot.slane %v256, 4
      %v470 = vadd.f32 %v256, %v469
      %v471 = vrot.slane %v470, 2
      %v472 = vadd.f32 %v470, %v471
      %v473 = vrot.slane %v472, 1
      %v474 = vadd.f32 %v472, %v473
      %v475 = vrot.slane %v257, 4
      %v476 = vadd.f32 %v257, %v475
      %v477 = vrot.slane %v476, 2
      %v478 = vadd.f32 %v476, %v477
      %v479 = vrot.slane %v478, 1
      %v480 = vadd.f32 %v478, %v479
      %v481 = vrot.slane %v258, 4
      %v482 = vadd.f32 %v258, %v481
      %v483 = vrot.slane %v482, 2
      %v484 = vadd.f32 %v482, %v483
      %v485 = vrot.slane %v484, 1
      %v486 = vadd.f32 %v484, %v485
      %v487 = vrot.slane %v259, 4
      %v488 = vadd.f32 %v259, %v487
      %v489 = vrot.slane %v488, 2
      %v490 = vadd.f32 %v488, %v489
      %v491 = vrot.slane %v490, 1
      %v492 = vadd.f32 %v490, %v491
      %v493 = vrot.slane %v260, 4
      %v494 = vadd.f32 %v260, %v493
      %v495 = vrot.slane %v494, 2
      %v496 = vadd.f32 %v494, %v495
      %v497 = vrot.slane %v496, 1
      %v498 = vadd.f32 %v496, %v497
      %v499 = vrot.slane %v261, 4
      %v500 = vadd.f32 %v261, %v499
      %v501 = vrot.slane %v500, 2
      %v502 = vadd.f32 %v500, %v501
      %v503 = vrot.slane %v502, 1
      %v504 = vadd.f32 %v502, %v503
      %v505 = vrot.slane %v262, 4
      %v506 = vadd.f32 %v262, %v505
      %v507 = vrot.slane %v506, 2
      %v508 = vadd.f32 %v506, %v507
      %v509 = vrot.slane %v508, 1
      %v510 = vadd.f32 %v508, %v509
      %v511 = vrot.slane %v263, 4
      %v512 = vadd.f32 %v263, %v511
      %v513 = vrot.slane %v512, 2
      %v514 = vadd.f32 %v512, %v513
      %v515 = vrot.slane %v514, 1
      %v516 = vadd.f32 %v514, %v515
      %v517 = vrot.slane %v264, 4
      %v518 = vadd.f32 %v264, %v517
      %v519 = vrot.slane %v518, 2
      %v520 = vadd.f32 %v518, %v519
      %v521 = vrot.slane %v520, 1
      %v522 = vadd.f32 %v520, %v521
      %v523 = vrot.slane %v265, 4
      %v524 = vadd.f32 %v265, %v523
      %v525 = vrot.slane %v524, 2
      %v526 = vadd.f32 %v524, %v525
      %v527 = vrot.slane %v526, 1
      %v528 = vadd.f32 %v526, %v527
      %v529 = vrot.slane %v266, 4
      %v530 = vadd.f32 %v266, %v529
      %v531 = vrot.slane %v530, 2
      %v532 = vadd.f32 %v530, %v531
      %v533 = vrot.slane %v532, 1
      %v534 = vadd.f32 %v532, %v533
      %v535 = vrot.slane %v267, 4
      %v536 = vadd.f32 %v267, %v535
      %v537 = vrot.slane %v536, 2
      %v538 = vadd.f32 %v536, %v537
      %v539 = vrot.slane %v538, 1
      %v540 = vadd.f32 %v538, %v539
      %v541 = vrot.slane %v268, 4
      %v542 = vadd.f32 %v268, %v541
      %v543 = vrot.slane %v542, 2
      %v544 = vadd.f32 %v542, %v543
      %v545 = vrot.slane %v544, 1
      %v546 = vadd.f32 %v544, %v545
      %v547 = vrot.slane %v269, 4
      %v548 = vadd.f32 %v269, %v547
      %v549 = vrot.slane %v548, 2
      %v550 = vadd.f32 %v548, %v549
      %v551 = vrot.slane %v550, 1
      %v552 = vadd.f32 %v550, %v551
      %v553 = vrot.slane %v270, 4
      %v554 = vadd.f32 %v270, %v553
      %v555 = vrot.slane %v554, 2
      %v556 = vadd.f32 %v554, %v555
      %v557 = vrot.slane %v556, 1
      %v558 = vadd.f32 %v556, %v557
      %v559 = vrot.slane %v271, 4
      %v560 = vadd.f32 %v271, %v559
      %v561 = vrot.slane %v560, 2
      %v562 = vadd.f32 %v560, %v561
      %v563 = vrot.slane %v562, 1
      %v564 = vadd.f32 %v562, %v563
      %v565 = vrot.slane %v272, 4
      %v566 = vadd.f32 %v272, %v565
      %v567 = vrot.slane %v566, 2
      %v568 = vadd.f32 %v566, %v567
      %v569 = vrot.slane %v568, 1
      %v570 = vadd.f32 %v568, %v569
      %v571 = vrot.slane %v273, 4
      %v572 = vadd.f32 %v273, %v571
      %v573 = vrot.slane %v572, 2
      %v574 = vadd.f32 %v572, %v573
      %v575 = vrot.slane %v574, 1
      %v576 = vadd.f32 %v574, %v575
      %v577 = vrot.slane %v274, 4
      %v578 = vadd.f32 %v274, %v577
      %v579 = vrot.slane %v578, 2
      %v580 = vadd.f32 %v578, %v579
      %v581 = vrot.slane %v580, 1
      %v582 = vadd.f32 %v580, %v581
      %v583 = vrot.slane %v275, 4
      %v584 = vadd.f32 %v275, %v583
      %v585 = vrot.slane %v584, 2
      %v586 = vadd.f32 %v584, %v585
      %v587 = vrot.slane %v586, 1
      %v588 = vadd.f32 %v586, %v587
      %v589 = vrot.slane %v276, 4
      %v590 = vadd.f32 %v276, %v589
      %v591 = vrot.slane %v590, 2
      %v592 = vadd.f32 %v590, %v591
      %v593 = vrot.slane %v592, 1
      %v594 = vadd.f32 %v592, %v593
      %v595 = vrot.slane %v277, 4
      %v596 = vadd.f32 %v277, %v595
      %v597 = vrot.slane %v596, 2
      %v598 = vadd.f32 %v596, %v597
      %v599 = vrot.slane %v598, 1
      %v600 = vadd.f32 %v598, %v599
      %v601 = vrot.slane %v278, 4
      %v602 = vadd.f32 %v278, %v601
      %v603 = vrot.slane %v602, 2
      %v604 = vadd.f32 %v602, %v603
      %v605 = vrot.slane %v604, 1
      %v606 = vadd.f32 %v604, %v605
      %v607 = vrot.slane %v279, 4
      %v608 = vadd.f32 %v279, %v607
      %v609 = vrot.slane %v608, 2
      %v610 = vadd.f32 %v608, %v609
      %v611 = vrot.slane %v610, 1
      %v612 = vadd.f32 %v610, %v611
      %v613 = vrot.slane %v280, 4
      %v614 = vadd.f32 %v280, %v613
      %v615 = vrot.slane %v614, 2
      %v616 = vadd.f32 %v614, %v615
      %v617 = vrot.slane %v616, 1
      %v618 = vadd.f32 %v616, %v617
      %v619 = vrot.slane %v281, 4
      %v620 = vadd.f32 %v281, %v619
      %v621 = vrot.slane %v620, 2
      %v622 = vadd.f32 %v620, %v621
      %v623 = vrot.slane %v622, 1
      %v624 = vadd.f32 %v622, %v623
      %v625 = vrot.slane %v282, 4
      %v626 = vadd.f32 %v282, %v625
      %v627 = vrot.slane %v626, 2
      %v628 = vadd.f32 %v626, %v627
      %v629 = vrot.slane %v628, 1
      %v630 = vadd.f32 %v628, %v629
      %v631 = vrot.slane %v283, 4
      %v632 = vadd.f32 %v283, %v631
      %v633 = vrot.slane %v632, 2
      %v634 = vadd.f32 %v632, %v633
      %v635 = vrot.slane %v634, 1
      %v636 = vadd.f32 %v634, %v635
      %v637 = vrot.slane %v284, 4
      %v638 = vadd.f32 %v284, %v637
      %v639 = vrot.slane %v638, 2
      %v640 = vadd.f32 %v638, %v639
      %v641 = vrot.slane %v640, 1
      %v642 = vadd.f32 %v640, %v641
      %v643 = vrot.slane %v285, 4
      %v644 = vadd.f32 %v285, %v643
      %v645 = vrot.slane %v644, 2
      %v646 = vadd.f32 %v644, %v645
      %v647 = vrot.slane %v646, 1
      %v648 = vadd.f32 %v646, %v647
      %v649 = vrot.slane %v286, 4
      %v650 = vadd.f32 %v286, %v649
      %v651 = vrot.slane %v650, 2
      %v652 = vadd.f32 %v650, %v651
      %v653 = vrot.slane %v652, 1
      %v654 = vadd.f32 %v652, %v653
      %v655 = vrot.slane %v287, 4
      %v656 = vadd.f32 %v287, %v655
      %v657 = vrot.slane %v656, 2
      %v658 = vadd.f32 %v656, %v657
      %v659 = vrot.slane %v658, 1
      %v660 = vadd.f32 %v658, %v659
      %v661 = vrot.slane %v288, 4
      %v662 = vadd.f32 %v288, %v661
      %v663 = vrot.slane %v662, 2
      %v664 = vadd.f32 %v662, %v663
      %v665 = vrot.slane %v664, 1
      %v666 = vadd.f32 %v664, %v665
      %v667 = vrot.slane %v289, 4
      %v668 = vadd.f32 %v289, %v667
      %v669 = vrot.slane %v668, 2
      %v670 = vadd.f32 %v668, %v669
      %v671 = vrot.slane %v670, 1
      %v672 = vadd.f32 %v670, %v671
      %v673 = vrot.slane %v290, 4
      %v674 = vadd.f32 %v290, %v673
      %v675 = vrot.slane %v674, 2
      %v676 = vadd.f32 %v674, %v675
      %v677 = vrot.slane %v676, 1
      %v678 = vadd.f32 %v676, %v677
      %v679 = vrot.slane %v291, 4
      %v680 = vadd.f32 %v291, %v679
      %v681 = vrot.slane %v680, 2
      %v682 = vadd.f32 %v680, %v681
      %v683 = vrot.slane %v682, 1
      %v684 = vadd.f32 %v682, %v683
      %v685 = vrot.slane %v292, 4
      %v686 = vadd.f32 %v292, %v685
      %v687 = vrot.slane %v686, 2
      %v688 = vadd.f32 %v686, %v687
      %v689 = vrot.slane %v688, 1
      %v690 = vadd.f32 %v688, %v689
      %v691 = vrot.slane %v293, 4
      %v692 = vadd.f32 %v293, %v691
      %v693 = vrot.slane %v692, 2
      %v694 = vadd.f32 %v692, %v693
      %v695 = vrot.slane %v694, 1
      %v696 = vadd.f32 %v694, %v695
      %v697 = vrot.slane %v294, 4
      %v698 = vadd.f32 %v294, %v697
      %v699 = vrot.slane %v698, 2
      %v700 = vadd.f32 %v698, %v699
      %v701 = vrot.slane %v700, 1
      %v702 = vadd.f32 %v700, %v701
      %v703 = vrot.slane %v295, 4
      %v704 = vadd.f32 %v295, %v703
      %v705 = vrot.slane %v704, 2
      %v706 = vadd.f32 %v704, %v705
      %v707 = vrot.slane %v706, 1
      %v708 = vadd.f32 %v706, %v707
      %v709 = vrot.slane %v296, 4
      %v710 = vadd.f32 %v296, %v709
      %v711 = vrot.slane %v710, 2
      %v712 = vadd.f32 %v710, %v711
      %v713 = vrot.slane %v712, 1
      %v714 = vadd.f32 %v712, %v713
      %v715 = vrot.slane %v297, 4
      %v716 = vadd.f32 %v297, %v715
      %v717 = vrot.slane %v716, 2
      %v718 = vadd.f32 %v716, %v717
      %v719 = vrot.slane %v718, 1
      %v720 = vadd.f32 %v718, %v719
      %v721 = vrot.slane %v298, 4
      %v722 = vadd.f32 %v298, %v721
      %v723 = vrot.slane %v722, 2
      %v724 = vadd.f32 %v722, %v723
      %v725 = vrot.slane %v724, 1
      %v726 = vadd.f32 %v724, %v725
      %v727 = vrot.slane %v299, 4
      %v728 = vadd.f32 %v299, %v727
      %v729 = vrot.slane %v728, 2
      %v730 = vadd.f32 %v728, %v729
      %v731 = vrot.slane %v730, 1
      %v732 = vadd.f32 %v730, %v731
      %v733 = vrot.slane %v300, 4
      %v734 = vadd.f32 %v300, %v733
      %v735 = vrot.slane %v734, 2
      %v736 = vadd.f32 %v734, %v735
      %v737 = vrot.slane %v736, 1
      %v738 = vadd.f32 %v736, %v737
      %v739 = vrot.slane %v301, 4
      %v740 = vadd.f32 %v301, %v739
      %v741 = vrot.slane %v740, 2
      %v742 = vadd.f32 %v740, %v741
      %v743 = vrot.slane %v742, 1
      %v744 = vadd.f32 %v742, %v743
      %v745 = vrot.slane %v302, 4
      %v746 = vadd.f32 %v302, %v745
      %v747 = vrot.slane %v746, 2
      %v748 = vadd.f32 %v746, %v747
      %v749 = vrot.slane %v748, 1
      %v750 = vadd.f32 %v748, %v749
      %v751 = vrot.slane %v303, 4
      %v752 = vadd.f32 %v303, %v751
      %v753 = vrot.slane %v752, 2
      %v754 = vadd.f32 %v752, %v753
      %v755 = vrot.slane %v754, 1
      %v756 = vadd.f32 %v754, %v755
      %v757 = vrot.slane %v304, 4
      %v758 = vadd.f32 %v304, %v757
      %v759 = vrot.slane %v758, 2
      %v760 = vadd.f32 %v758, %v759
      %v761 = vrot.slane %v760, 1
      %v762 = vadd.f32 %v760, %v761
      %v763 = vrot.slane %v305, 4
      %v764 = vadd.f32 %v305, %v763
      %v765 = vrot.slane %v764, 2
      %v766 = vadd.f32 %v764, %v765
      %v767 = vrot.slane %v766, 1
      %v768 = vadd.f32 %v766, %v767
      %v769 = vrot.slane %v306, 4
      %v770 = vadd.f32 %v306, %v769
      %v771 = vrot.slane %v770, 2
      %v772 = vadd.f32 %v770, %v771
      %v773 = vrot.slane %v772, 1
      %v774 = vadd.f32 %v772, %v773
      %v775 = vrot.slane %v307, 4
      %v776 = vadd.f32 %v307, %v775
      %v777 = vrot.slane %v776, 2
      %v778 = vadd.f32 %v776, %v777
      %v779 = vrot.slane %v778, 1
      %v780 = vadd.f32 %v778, %v779
      %v781 = vrot.slane %v308, 4
      %v782 = vadd.f32 %v308, %v781
      %v783 = vrot.slane %v782, 2
      %v784 = vadd.f32 %v782, %v783
      %v785 = vrot.slane %v784, 1
      %v786 = vadd.f32 %v784, %v785
      %v787 = vrot.slane %v309, 4
      %v788 = vadd.f32 %v309, %v787
      %v789 = vrot.slane %v788, 2
      %v790 = vadd.f32 %v788, %v789
      %v791 = vrot.slane %v790, 1
      %v792 = vadd.f32 %v790, %v791
      %v793 = vrot.slane %v310, 4
      %v794 = vadd.f32 %v310, %v793
      %v795 = vrot.slane %v794, 2
      %v796 = vadd.f32 %v794, %v795
      %v797 = vrot.slane %v796, 1
      %v798 = vadd.f32 %v796, %v797
      %v799 = vrot.slane %v311, 4
      %v800 = vadd.f32 %v311, %v799
      %v801 = vrot.slane %v800, 2
      %v802 = vadd.f32 %v800, %v801
      %v803 = vrot.slane %v802, 1
      %v804 = vadd.f32 %v802, %v803
      %v805 = vrot.slane %v312, 4
      %v806 = vadd.f32 %v312, %v805
      %v807 = vrot.slane %v806, 2
      %v808 = vadd.f32 %v806, %v807
      %v809 = vrot.slane %v808, 1
      %v810 = vadd.f32 %v808, %v809
      %v811 = vrot.slane %v313, 4
      %v812 = vadd.f32 %v313, %v811
      %v813 = vrot.slane %v812, 2
      %v814 = vadd.f32 %v812, %v813
      %v815 = vrot.slane %v814, 1
      %v816 = vadd.f32 %v814, %v815
      %v817 = vrot.slane %v314, 4
      %v818 = vadd.f32 %v314, %v817
      %v819 = vrot.slane %v818, 2
      %v820 = vadd.f32 %v818, %v819
      %v821 = vrot.slane %v820, 1
      %v822 = vadd.f32 %v820, %v821
      %v823 = vrot.slane %v315, 4
      %v824 = vadd.f32 %v315, %v823
      %v825 = vrot.slane %v824, 2
      %v826 = vadd.f32 %v824, %v825
      %v827 = vrot.slane %v826, 1
      %v828 = vadd.f32 %v826, %v827
      %v829 = vrot.slane %v316, 4
      %v830 = vadd.f32 %v316, %v829
      %v831 = vrot.slane %v830, 2
      %v832 = vadd.f32 %v830, %v831
      %v833 = vrot.slane %v832, 1
      %v834 = vadd.f32 %v832, %v833
      %v835 = vrot.slane %v317, 4
      %v836 = vadd.f32 %v317, %v835
      %v837 = vrot.slane %v836, 2
      %v838 = vadd.f32 %v836, %v837
      %v839 = vrot.slane %v838, 1
      %v840 = vadd.f32 %v838, %v839
      %v841 = vrot.slane %v318, 4
      %v842 = vadd.f32 %v318, %v841
      %v843 = vrot.slane %v842, 2
      %v844 = vadd.f32 %v842, %v843
      %v845 = vrot.slane %v844, 1
      %v846 = vadd.f32 %v844, %v845
      %v847 = vrot.slane %v319, 4
      %v848 = vadd.f32 %v319, %v847
      %v849 = vrot.slane %v848, 2
      %v850 = vadd.f32 %v848, %v849
      %v851 = vrot.slane %v850, 1
      %v852 = vadd.f32 %v850, %v851
      %v853 = vrot.slane %v320, 4
      %v854 = vadd.f32 %v320, %v853
      %v855 = vrot.slane %v854, 2
      %v856 = vadd.f32 %v854, %v855
      %v857 = vrot.slane %v856, 1
      %v858 = vadd.f32 %v856, %v857
      %v859 = vrot.slane %v321, 4
      %v860 = vadd.f32 %v321, %v859
      %v861 = vrot.slane %v860, 2
      %v862 = vadd.f32 %v860, %v861
      %v863 = vrot.slane %v862, 1
      %v864 = vadd.f32 %v862, %v863
      %v865 = vrot.slane %v322, 4
      %v866 = vadd.f32 %v322, %v865
      %v867 = vrot.slane %v866, 2
      %v868 = vadd.f32 %v866, %v867
      %v869 = vrot.slane %v868, 1
      %v870 = vadd.f32 %v868, %v869
      %v871 = vrot.slane %v323, 4
      %v872 = vadd.f32 %v323, %v871
      %v873 = vrot.slane %v872, 2
      %v874 = vadd.f32 %v872, %v873
      %v875 = vrot.slane %v874, 1
      %v876 = vadd.f32 %v874, %v875
      %v877 = vrot.slane %v324, 4
      %v878 = vadd.f32 %v324, %v877
      %v879 = vrot.slane %v878, 2
      %v880 = vadd.f32 %v878, %v879
      %v881 = vrot.slane %v880, 1
      %v882 = vadd.f32 %v880, %v881
      %v883 = vrot.slane %v325, 4
      %v884 = vadd.f32 %v325, %v883
      %v885 = vrot.slane %v884, 2
      %v886 = vadd.f32 %v884, %v885
      %v887 = vrot.slane %v886, 1
      %v888 = vadd.f32 %v886, %v887
      %v889 = vrot.slane %v326, 4
      %v890 = vadd.f32 %v326, %v889
      %v891 = vrot.slane %v890, 2
      %v892 = vadd.f32 %v890, %v891
      %v893 = vrot.slane %v892, 1
      %v894 = vadd.f32 %v892, %v893
      %v895 = vrot.slane %v327, 4
      %v896 = vadd.f32 %v327, %v895
      %v897 = vrot.slane %v896, 2
      %v898 = vadd.f32 %v896, %v897
      %v899 = vrot.slane %v898, 1
      %v900 = vadd.f32 %v898, %v899
      %v901 = vrot.slane %v328, 4
      %v902 = vadd.f32 %v328, %v901
      %v903 = vrot.slane %v902, 2
      %v904 = vadd.f32 %v902, %v903
      %v905 = vrot.slane %v904, 1
      %v906 = vadd.f32 %v904, %v905
      %v907 = vrot.slane %v329, 4
      %v908 = vadd.f32 %v329, %v907
      %v909 = vrot.slane %v908, 2
      %v910 = vadd.f32 %v908, %v909
      %v911 = vrot.slane %v910, 1
      %v912 = vadd.f32 %v910, %v911
      %v913 = vrot.slane %v330, 4
      %v914 = vadd.f32 %v330, %v913
      %v915 = vrot.slane %v914, 2
      %v916 = vadd.f32 %v914, %v915
      %v917 = vrot.slane %v916, 1
      %v918 = vadd.f32 %v916, %v917
      %v919 = vrot.slane %v331, 4
      %v920 = vadd.f32 %v331, %v919
      %v921 = vrot.slane %v920, 2
      %v922 = vadd.f32 %v920, %v921
      %v923 = vrot.slane %v922, 1
      %v924 = vadd.f32 %v922, %v923
      %v925 = vrot.slane %v332, 4
      %v926 = vadd.f32 %v332, %v925
      %v927 = vrot.slane %v926, 2
      %v928 = vadd.f32 %v926, %v927
      %v929 = vrot.slane %v928, 1
      %v930 = vadd.f32 %v928, %v929
      %v931 = vrot.slane %v333, 4
      %v932 = vadd.f32 %v333, %v931
      %v933 = vrot.slane %v932, 2
      %v934 = vadd.f32 %v932, %v933
      %v935 = vrot.slane %v934, 1
      %v936 = vadd.f32 %v934, %v935
      %v937 = vrot.slane %v334, 4
      %v938 = vadd.f32 %v334, %v937
      %v939 = vrot.slane %v938, 2
      %v940 = vadd.f32 %v938, %v939
      %v941 = vrot.slane %v940, 1
      %v942 = vadd.f32 %v940, %v941
      %v943 = vrot.slane %v335, 4
      %v944 = vadd.f32 %v335, %v943
      %v945 = vrot.slane %v944, 2
      %v946 = vadd.f32 %v944, %v945
      %v947 = vrot.slane %v946, 1
      %v948 = vadd.f32 %v946, %v947
      %v949 = vrot.slane %v336, 4
      %v950 = vadd.f32 %v336, %v949
      %v951 = vrot.slane %v950, 2
      %v952 = vadd.f32 %v950, %v951
      %v953 = vrot.slane %v952, 1
      %v954 = vadd.f32 %v952, %v953
      %v955 = vrot.slane %v337, 4
      %v956 = vadd.f32 %v337, %v955
      %v957 = vrot.slane %v956, 2
      %v958 = vadd.f32 %v956, %v957
      %v959 = vrot.slane %v958, 1
      %v960 = vadd.f32 %v958, %v959
      %v961 = vrot.slane %v338, 4
      %v962 = vadd.f32 %v338, %v961
      %v963 = vrot.slane %v962, 2
      %v964 = vadd.f32 %v962, %v963
      %v965 = vrot.slane %v964, 1
      %v966 = vadd.f32 %v964, %v965
      %v967 = vrot.slane %v339, 4
      %v968 = vadd.f32 %v339, %v967
      %v969 = vrot.slane %v968, 2
      %v970 = vadd.f32 %v968, %v969
      %v971 = vrot.slane %v970, 1
      %v972 = vadd.f32 %v970, %v971
      %v973 = vrot.slane %v340, 4
      %v974 = vadd.f32 %v340, %v973
      %v975 = vrot.slane %v974, 2
      %v976 = vadd.f32 %v974, %v975
      %v977 = vrot.slane %v976, 1
      %v978 = vadd.f32 %v976, %v977
      %v979 = vrot.slane %v341, 4
      %v980 = vadd.f32 %v341, %v979
      %v981 = vrot.slane %v980, 2
      %v982 = vadd.f32 %v980, %v981
      %v983 = vrot.slane %v982, 1
      %v984 = vadd.f32 %v982, %v983
      %v985 = vrot.slane %v342, 4
      %v986 = vadd.f32 %v342, %v985
      %v987 = vrot.slane %v986, 2
      %v988 = vadd.f32 %v986, %v987
      %v989 = vrot.slane %v988, 1
      %v990 = vadd.f32 %v988, %v989
      %v991 = vrot.slane %v343, 4
      %v992 = vadd.f32 %v343, %v991
      %v993 = vrot.slane %v992, 2
      %v994 = vadd.f32 %v992, %v993
      %v995 = vrot.slane %v994, 1
      %v996 = vadd.f32 %v994, %v995
      %v997 = vrot.slane %v344, 4
      %v998 = vadd.f32 %v344, %v997
      %v999 = vrot.slane %v998, 2
      %v1000 = vadd.f32 %v998, %v999
      %v1001 = vrot.slane %v1000, 1
      %v1002 = vadd.f32 %v1000, %v1001
      %v1003 = vrot.slane %v345, 4
      %v1004 = vadd.f32 %v345, %v1003
      %v1005 = vrot.slane %v1004, 2
      %v1006 = vadd.f32 %v1004, %v1005
      %v1007 = vrot.slane %v1006, 1
      %v1008 = vadd.f32 %v1006, %v1007
      %v1009 = vrot.slane %v346, 4
      %v1010 = vadd.f32 %v346, %v1009
      %v1011 = vrot.slane %v1010, 2
      %v1012 = vadd.f32 %v1010, %v1011
      %v1013 = vrot.slane %v1012, 1
      %v1014 = vadd.f32 %v1012, %v1013
      %v1015 = vrot.slane %v347, 4
      %v1016 = vadd.f32 %v347, %v1015
      %v1017 = vrot.slane %v1016, 2
      %v1018 = vadd.f32 %v1016, %v1017
      %v1019 = vrot.slane %v1018, 1
      %v1020 = vadd.f32 %v1018, %v1019
      %v1021 = vrot.slane %v348, 4
      %v1022 = vadd.f32 %v348, %v1021
      %v1023 = vrot.slane %v1022, 2
      %v1024 = vadd.f32 %v1022, %v1023
      %v1025 = vrot.slane %v1024, 1
      %v1026 = vadd.f32 %v1024, %v1025
      %v1027 = vrot.slane %v349, 4
      %v1028 = vadd.f32 %v349, %v1027
      %v1029 = vrot.slane %v1028, 2
      %v1030 = vadd.f32 %v1028, %v1029
      %v1031 = vrot.slane %v1030, 1
      %v1032 = vadd.f32 %v1030, %v1031
      %v1033 = vrot.slane %v350, 4
      %v1034 = vadd.f32 %v350, %v1033
      %v1035 = vrot.slane %v1034, 2
      %v1036 = vadd.f32 %v1034, %v1035
      %v1037 = vrot.slane %v1036, 1
      %v1038 = vadd.f32 %v1036, %v1037
      %v1039 = vrot.slane %v351, 4
      %v1040 = vadd.f32 %v351, %v1039
      %v1041 = vrot.slane %v1040, 2
      %v1042 = vadd.f32 %v1040, %v1041
      %v1043 = vrot.slane %v1042, 1
      %v1044 = vadd.f32 %v1042, %v1043
      %v1045 = vrot.slane %v352, 4
      %v1046 = vadd.f32 %v352, %v1045
      %v1047 = vrot.slane %v1046, 2
      %v1048 = vadd.f32 %v1046, %v1047
      %v1049 = vrot.slane %v1048, 1
      %v1050 = vadd.f32 %v1048, %v1049
      %v1051 = vrot.slane %v353, 4
      %v1052 = vadd.f32 %v353, %v1051
      %v1053 = vrot.slane %v1052, 2
      %v1054 = vadd.f32 %v1052, %v1053
      %v1055 = vrot.slane %v1054, 1
      %v1056 = vadd.f32 %v1054, %v1055
      %v1057 = vrot.slane %v354, 4
      %v1058 = vadd.f32 %v354, %v1057
      %v1059 = vrot.slane %v1058, 2
      %v1060 = vadd.f32 %v1058, %v1059
      %v1061 = vrot.slane %v1060, 1
      %v1062 = vadd.f32 %v1060, %v1061
      %v1063 = vrot.slane %v355, 4
      %v1064 = vadd.f32 %v355, %v1063
      %v1065 = vrot.slane %v1064, 2
      %v1066 = vadd.f32 %v1064, %v1065
      %v1067 = vrot.slane %v1066, 1
      %v1068 = vadd.f32 %v1066, %v1067
      %v1069 = vrot.slane %v356, 4
      %v1070 = vadd.f32 %v356, %v1069
      %v1071 = vrot.slane %v1070, 2
      %v1072 = vadd.f32 %v1070, %v1071
      %v1073 = vrot.slane %v1072, 1
      %v1074 = vadd.f32 %v1072, %v1073
      %v1075 = vrot.slane %v357, 4
      %v1076 = vadd.f32 %v357, %v1075
      %v1077 = vrot.slane %v1076, 2
      %v1078 = vadd.f32 %v1076, %v1077
      %v1079 = vrot.slane %v1078, 1
      %v1080 = vadd.f32 %v1078, %v1079
      %v1081 = vrot.slane %v358, 4
      %v1082 = vadd.f32 %v358, %v1081
      %v1083 = vrot.slane %v1082, 2
      %v1084 = vadd.f32 %v1082, %v1083
      %v1085 = vrot.slane %v1084, 1
      %v1086 = vadd.f32 %v1084, %v1085
      %v1087 = vrot.slane %v359, 4
      %v1088 = vadd.f32 %v359, %v1087
      %v1089 = vrot.slane %v1088, 2
      %v1090 = vadd.f32 %v1088, %v1089
      %v1091 = vrot.slane %v1090, 1
      %v1092 = vadd.f32 %v1090, %v1091
      %v1093 = vrot.slane %v360, 4
      %v1094 = vadd.f32 %v360, %v1093
      %v1095 = vrot.slane %v1094, 2
      %v1096 = vadd.f32 %v1094, %v1095
      %v1097 = vrot.slane %v1096, 1
      %v1098 = vadd.f32 %v1096, %v1097
      %v1099 = vrot.slane %v361, 4
      %v1100 = vadd.f32 %v361, %v1099
      %v1101 = vrot.slane %v1100, 2
      %v1102 = vadd.f32 %v1100, %v1101
      %v1103 = vrot.slane %v1102, 1
      %v1104 = vadd.f32 %v1102, %v1103
      %v1105 = vrot.slane %v362, 4
      %v1106 = vadd.f32 %v362, %v1105
      %v1107 = vrot.slane %v1106, 2
      %v1108 = vadd.f32 %v1106, %v1107
      %v1109 = vrot.slane %v1108, 1
      %v1110 = vadd.f32 %v1108, %v1109
      %v1111 = vrot.slane %v363, 4
      %v1112 = vadd.f32 %v363, %v1111
      %v1113 = vrot.slane %v1112, 2
      %v1114 = vadd.f32 %v1112, %v1113
      %v1115 = vrot.slane %v1114, 1
      %v1116 = vadd.f32 %v1114, %v1115
      %v1117 = vrot.slane %v364, 4
      %v1118 = vadd.f32 %v364, %v1117
      %v1119 = vrot.slane %v1118, 2
      %v1120 = vadd.f32 %v1118, %v1119
      %v1121 = vrot.slane %v1120, 1
      %v1122 = vadd.f32 %v1120, %v1121
      %v1123 = vrot.slane %v365, 4
      %v1124 = vadd.f32 %v365, %v1123
      %v1125 = vrot.slane %v1124, 2
      %v1126 = vadd.f32 %v1124, %v1125
      %v1127 = vrot.slane %v1126, 1
      %v1128 = vadd.f32 %v1126, %v1127
      %v1129 = vrot.slane %v366, 4
      %v1130 = vadd.f32 %v366, %v1129
      %v1131 = vrot.slane %v1130, 2
      %v1132 = vadd.f32 %v1130, %v1131
      %v1133 = vrot.slane %v1132, 1
      %v1134 = vadd.f32 %v1132, %v1133
      %v1135 = vrcp.pop 8.0
      %v1136 = vmul.f32 %v372, %v1135
      %v1137 = vmul.f32 %v378, %v1135
      %v1138 = vmul.f32 %v384, %v1135
      %v1139 = vmul.f32 %v390, %v1135
      %v1140 = vmul.f32 %v396, %v1135
      %v1141 = vmul.f32 %v402, %v1135
      %v1142 = vmul.f32 %v408, %v1135
      %v1143 = vmul.f32 %v414, %v1135
      %v1144 = vmul.f32 %v420, %v1135
      %v1145 = vmul.f32 %v426, %v1135
      %v1146 = vmul.f32 %v432, %v1135
      %v1147 = vmul.f32 %v438, %v1135
      %v1148 = vmul.f32 %v444, %v1135
      %v1149 = vmul.f32 %v450, %v1135
      %v1150 = vmul.f32 %v456, %v1135
      %v1151 = vmul.f32 %v462, %v1135
      %v1152 = vmul.f32 %v468, %v1135
      %v1153 = vmul.f32 %v474, %v1135
      %v1154 = vmul.f32 %v480, %v1135
      %v1155 = vmul.f32 %v486, %v1135
      %v1156 = vmul.f32 %v492, %v1135
      %v1157 = vmul.f32 %v498, %v1135
      %v1158 = vmul.f32 %v504, %v1135
      %v1159 = vmul.f32 %v510, %v1135
      %v1160 = vmul.f32 %v516, %v1135
      %v1161 = vmul.f32 %v522, %v1135
      %v1162 = vmul.f32 %v528, %v1135
      %v1163 = vmul.f32 %v534, %v1135
      %v1164 = vmul.f32 %v540, %v1135
      %v1165 = vmul.f32 %v546, %v1135
      %v1166 = vmul.f32 %v552, %v1135
      %v1167 = vmul.f32 %v558, %v1135
      %v1168 = vmul.f32 %v564, %v1135
      %v1169 = vmul.f32 %v570, %v1135
      %v1170 = vmul.f32 %v576, %v1135
      %v1171 = vmul.f32 %v582, %v1135
      %v1172 = vmul.f32 %v588, %v1135
      %v1173 = vmul.f32 %v594, %v1135
      %v1174 = vmul.f32 %v600, %v1135
      %v1175 = vmul.f32 %v606, %v1135
      %v1176 = vmul.f32 %v612, %v1135
      %v1177 = vmul.f32 %v618, %v1135
      %v1178 = vmul.f32 %v624, %v1135
      %v1179 = vmul.f32 %v630, %v1135
      %v1180 = vmul.f32 %v636, %v1135
      %v1181 = vmul.f32 %v642, %v1135
      %v1182 = vmul.f32 %v648, %v1135
      %v1183 = vmul.f32 %v654, %v1135
      %v1184 = vmul.f32 %v660, %v1135
      %v1185 = vmul.f32 %v666, %v1135
      %v1186 = vmul.f32 %v672, %v1135
      %v1187 = vmul.f32 %v678, %v1135
      %v1188 = vmul.f32 %v684, %v1135
      %v1189 = vmul.f32 %v690, %v1135
      %v1190 = vmul.f32 %v696, %v1135
      %v1191 = vmul.f32 %v702, %v1135
      %v1192 = vmul.f32 %v708, %v1135
      %v1193 = vmul.f32 %v714, %v1135
      %v1194 = vmul.f32 %v720, %v1135
      %v1195 = vmul.f32 %v726, %v1135
      %v1196 = vmul.f32 %v732, %v1135
      %v1197 = vmul.f32 %v738, %v1135
      %v1198 = vmul.f32 %v744, %v1135
      %v1199 = vmul.f32 %v750, %v1135
      %v1200 = vmul.f32 %v756, %v1135
      %v1201 = vmul.f32 %v762, %v1135
      %v1202 = vmul.f32 %v768, %v1135
      %v1203 = vmul.f32 %v774, %v1135
      %v1204 = vmul.f32 %v780, %v1135
      %v1205 = vmul.f32 %v786, %v1135
      %v1206 = vmul.f32 %v792, %v1135
      %v1207 = vmul.f32 %v798, %v1135
      %v1208 = vmul.f32 %v804, %v1135
      %v1209 = vmul.f32 %v810, %v1135
      %v1210 = vmul.f32 %v816, %v1135
      %v1211 = vmul.f32 %v822, %v1135
      %v1212 = vmul.f32 %v828, %v1135
      %v1213 = vmul.f32 %v834, %v1135
      %v1214 = vmul.f32 %v840, %v1135
      %v1215 = vmul.f32 %v846, %v1135
      %v1216 = vmul.f32 %v852, %v1135
      %v1217 = vmul.f32 %v858, %v1135
      %v1218 = vmul.f32 %v864, %v1135
      %v1219 = vmul.f32 %v870, %v1135
      %v1220 = vmul.f32 %v876, %v1135
      %v1221 = vmul.f32 %v882, %v1135
      %v1222 = vmul.f32 %v888, %v1135
      %v1223 = vmul.f32 %v894, %v1135
      %v1224 = vmul.f32 %v900, %v1135
      %v1225 = vmul.f32 %v906, %v1135
      %v1226 = vmul.f32 %v912, %v1135
      %v1227 = vmul.f32 %v918, %v1135
      %v1228 = vmul.f32 %v924, %v1135
      %v1229 = vmul.f32 %v930, %v1135
      %v1230 = vmul.f32 %v936, %v1135
      %v1231 = vmul.f32 %v942, %v1135
      %v1232 = vmul.f32 %v948, %v1135
      %v1233 = vmul.f32 %v954, %v1135
      %v1234 = vmul.f32 %v960, %v1135
      %v1235 = vmul.f32 %v966, %v1135
      %v1236 = vmul.f32 %v972, %v1135
      %v1237 = vmul.f32 %v978, %v1135
      %v1238 = vmul.f32 %v984, %v1135
      %v1239 = vmul.f32 %v990, %v1135
      %v1240 = vmul.f32 %v996, %v1135
      %v1241 = vmul.f32 %v1002, %v1135
      %v1242 = vmul.f32 %v1008, %v1135
      %v1243 = vmul.f32 %v1014, %v1135
      %v1244 = vmul.f32 %v1020, %v1135
      %v1245 = vmul.f32 %v1026, %v1135
      %v1246 = vmul.f32 %v1032, %v1135
      %v1247 = vmul.f32 %v1038, %v1135
      %v1248 = vmul.f32 %v1044, %v1135
      %v1249 = vmul.f32 %v1050, %v1135
      %v1250 = vmul.f32 %v1056, %v1135
      %v1251 = vmul.f32 %v1062, %v1135
      %v1252 = vmul.f32 %v1068, %v1135
      %v1253 = vmul.f32 %v1074, %v1135
      %v1254 = vmul.f32 %v1080, %v1135
      %v1255 = vmul.f32 %v1086, %v1135
      %v1256 = vmul.f32 %v1092, %v1135
      %v1257 = vmul.f32 %v1098, %v1135
      %v1258 = vmul.f32 %v1104, %v1135
      %v1259 = vmul.f32 %v1110, %v1135
      %v1260 = vmul.f32 %v1116, %v1135
      %v1261 = vmul.f32 %v1122, %v1135
      %v1262 = vmul.f32 %v1128, %v1135
      %v1263 = vmul.f32 %v1134, %v1135
      %v1264 = vld [vmem:[%s1] sm:$0xff]
      %v1265 = vld [vmem:[%s1 + $0x8] sm:$0xff]
      %v1266 = vld [vmem:[%s1 + $0x10] sm:$0xff]
      %v1267 = vld [vmem:[%s1 + $0x18] sm:$0xff]
      %v1268 = vld [vmem:[%s1 + $0x20] sm:$0xff]
      %v1269 = vld [vmem:[%s1 + $0x28] sm:$0xff]
      %v1270 = vld [vmem:[%s1 + $0x30] sm:$0xff]
      %v1271 = vld [vmem:[%s1 + $0x38] sm:$0xff]
      %v1272 = vld [vmem:[%s1 + $0x40] sm:$0xff]
      %v1273 = vld [vmem:[%s1 + $0x48] sm:$0xff]
      %v1274 = vld [vmem:[%s1 + $0x50] sm:$0xff]
      %v1275 = vld [vmem:[%s1 + $0x58] sm:$0xff]
      %v1276 = vld [vmem:[%s1 + $0x60] sm:$0xff]
      %v1277 = vld [vmem:[%s1 + $0x68] sm:$0xff]
      %v1278 = vld [vmem:[%s1 + $0x70] sm:$0xff]
      %v1279 = vld [vmem:[%s1 + $0x78] sm:$0xff]
      %v1280 = vld [vmem:[%s1 + $0x80] sm:$0xff]
      %v1281 = vld [vmem:[%s1 + $0x88] sm:$0xff]
      %v1282 = vld [vmem:[%s1 + $0x90] sm:$0xff]
      %v1283 = vld [vmem:[%s1 + $0x98] sm:$0xff]
      %v1284 = vld [vmem:[%s1 + $0xa0] sm:$0xff]
      %v1285 = vld [vmem:[%s1 + $0xa8] sm:$0xff]
      %v1286 = vld [vmem:[%s1 + $0xb0] sm:$0xff]
      %v1287 = vld [vmem:[%s1 + $0xb8] sm:$0xff]
      %v1288 = vld [vmem:[%s1 + $0xc0] sm:$0xff]
      %v1289 = vld [vmem:[%s1 + $0xc8] sm:$0xff]
      %v1290 = vld [vmem:[%s1 + $0xd0] sm:$0xff]
      %v1291 = vld [vmem:[%s1 + $0xd8] sm:$0xff]
      %v1292 = vld [vmem:[%s1 + $0xe0] sm:$0xff]
      %v1293 = vld [vmem:[%s1 + $0xe8] sm:$0xff]
      %v1294 = vld [vmem:[%s1 + $0xf0] sm:$0xff]
      %v1295 = vld [vmem:[%s1 + $0xf8] sm:$0xff]
      %v1296 = vld [vmem:[%s1 + $0x100] sm:$0xff]
      %v1297 = vld [vmem:[%s1 + $0x108] sm:$0xff]
      %v1298 = vld [vmem:[%s1 + $0x110] sm:$0xff]
      %v1299 = vld [vmem:[%s1 + $0x118] sm:$0xff]
      %v1300 = vld [vmem:[%s1 + $0x120] sm:$0xff]
      %v1301 = vld [vmem:[%s1 + $0x128] sm:$0xff]
      %v1302 = vld [vmem:[%s1 + $0x130] sm:$0xff]
      %v1303 = vld [vmem:[%s1 + $0x138] sm:$0xff]
      %v1304 = vld [vmem:[%s1 + $0x140] sm:$0xff]
      %v1305 = vld [vmem:[%s1 + $0x148] sm:$0xff]
      %v1306 = vld [vmem:[%s1 + $0x150] sm:$0xff]
      %v1307 = vld [vmem:[%s1 + $0x158] sm:$0xff]
      %v1308 = vld [vmem:[%s1 + $0x160] sm:$0xff]
      %v1309 = vld [vmem:[%s1 + $0x168] sm:$0xff]
      %v1310 = vld [vmem:[%s1 + $0x170] sm:$0xff]
      %v1311 = vld [vmem:[%s1 + $0x178] sm:$0xff]
      %v1312 = vld [vmem:[%s1 + $0x180] sm:$0xff]
      %v1313 = vld [vmem:[%s1 + $0x188] sm:$0xff]
      %v1314 = vld [vmem:[%s1 + $0x190] sm:$0xff]
      %v1315 = vld [vmem:[%s1 + $0x198] sm:$0xff]
      %v1316 = vld [vmem:[%s1 + $0x1a0] sm:$0xff]
      %v1317 = vld [vmem:[%s1 + $0x1a8] sm:$0xff]
      %v1318 = vld [vmem:[%s1 + $0x1b0] sm:$0xff]
      %v1319 = vld [vmem:[%s1 + $0x1b8] sm:$0xff]
      %v1320 = vld [vmem:[%s1 + $0x1c0] sm:$0xff]
      %v1321 = vld [vmem:[%s1 + $0x1c8] sm:$0xff]
      %v1322 = vld [vmem:[%s1 + $0x1d0] sm:$0xff]
      %v1323 = vld [vmem:[%s1 + $0x1d8] sm:$0xff]
      %v1324 = vld [vmem:[%s1 + $0x1e0] sm:$0xff]
      %v1325 = vld [vmem:[%s1 + $0x1e8] sm:$0xff]
      %v1326 = vld [vmem:[%s1 + $0x1f0] sm:$0xff]
      %v1327 = vld [vmem:[%s1 + $0x1f8] sm:$0xff]
      %v1328 = vld [vmem:[%s1 + $0x200] sm:$0xff]
      %v1329 = vld [vmem:[%s1 + $0x208] sm:$0xff]
      %v1330 = vld [vmem:[%s1 + $0x210] sm:$0xff]
      %v1331 = vld [vmem:[%s1 + $0x218] sm:$0xff]
      %v1332 = vld [vmem:[%s1 + $0x220] sm:$0xff]
      %v1333 = vld [vmem:[%s1 + $0x228] sm:$0xff]
      %v1334 = vld [vmem:[%s1 + $0x230] sm:$0xff]
      %v1335 = vld [vmem:[%s1 + $0x238] sm:$0xff]
      %v1336 = vld [vmem:[%s1 + $0x240] sm:$0xff]
      %v1337 = vld [vmem:[%s1 + $0x248] sm:$0xff]
      %v1338 = vld [vmem:[%s1 + $0x250] sm:$0xff]
      %v1339 = vld [vmem:[%s1 + $0x258] sm:$0xff]
      %v1340 = vld [vmem:[%s1 + $0x260] sm:$0xff]
      %v1341 = vld [vmem:[%s1 + $0x268] sm:$0xff]
      %v1342 = vld [vmem:[%s1 + $0x270] sm:$0xff]
      %v1343 = vld [vmem:[%s1 + $0x278] sm:$0xff]
      %v1344 = vunpack.c.l.bf16 %v1264
      %v1345 = vunpack.c.h.bf16 %v1264
      %v1346 = vunpack.c.l.bf16 %v1265
      %v1347 = vunpack.c.h.bf16 %v1265
      %v1348 = vunpack.c.l.bf16 %v1266
      %v1349 = vunpack.c.h.bf16 %v1266
      %v1350 = vunpack.c.l.bf16 %v1267
      %v1351 = vunpack.c.h.bf16 %v1267
      %v1352 = vunpack.c.l.bf16 %v1268
      %v1353 = vunpack.c.h.bf16 %v1268
      %v1354 = vunpack.c.l.bf16 %v1269
      %v1355 = vunpack.c.h.bf16 %v1269
      %v1356 = vunpack.c.l.bf16 %v1270
      %v1357 = vunpack.c.h.bf16 %v1270
      %v1358 = vunpack.c.l.bf16 %v1271
      %v1359 = vunpack.c.h.bf16 %v1271
      %v1360 = vunpack.c.l.bf16 %v1272
      %v1361 = vunpack.c.h.bf16 %v1272
      %v1362 = vunpack.c.l.bf16 %v1273
      %v1363 = vunpack.c.h.bf16 %v1273
      %v1364 = vunpack.c.l.bf16 %v1274
      %v1365 = vunpack.c.h.bf16 %v1274
      %v1366 = vunpack.c.l.bf16 %v1275
      %v1367 = vunpack.c.h.bf16 %v1275
      %v1368 = vunpack.c.l.bf16 %v1276
      %v1369 = vunpack.c.h.bf16 %v1276
      %v1370 = vunpack.c.l.bf16 %v1277
      %v1371 = vunpack.c.h.bf16 %v1277
      %v1372 = vunpack.c.l.bf16 %v1278
      %v1373 = vunpack.c.h.bf16 %v1278
      %v1374 = vunpack.c.l.bf16 %v1279
      %v1375 = vunpack.c.h.bf16 %v1279
      %v1376 = vunpack.c.l.bf16 %v1280
      %v1377 = vunpack.c.h.bf16 %v1280
      %v1378 = vunpack.c.l.bf16 %v1281
      %v1379 = vunpack.c.h.bf16 %v1281
      %v1380 = vunpack.c.l.bf16 %v1282
      %v1381 = vunpack.c.h.bf16 %v1282
      %v1382 = vunpack.c.l.bf16 %v1283
      %v1383 = vunpack.c.h.bf16 %v1283
      %v1384 = vunpack.c.l.bf16 %v1284
      %v1385 = vunpack.c.h.bf16 %v1284
      %v1386 = vunpack.c.l.bf16 %v1285
      %v1387 = vunpack.c.h.bf16 %v1285
      %v1388 = vunpack.c.l.bf16 %v1286
      %v1389 = vunpack.c.h.bf16 %v1286
      %v1390 = vunpack.c.l.bf16 %v1287
      %v1391 = vunpack.c.h.bf16 %v1287
      %v1392 = vunpack.c.l.bf16 %v1288
      %v1393 = vunpack.c.h.bf16 %v1288
      %v1394 = vunpack.c.l.bf16 %v1289
      %v1395 = vunpack.c.h.bf16 %v1289
      %v1396 = vunpack.c.l.bf16 %v1290
      %v1397 = vunpack.c.h.bf16 %v1290
      %v1398 = vunpack.c.l.bf16 %v1291
      %v1399 = vunpack.c.h.bf16 %v1291
      %v1400 = vunpack.c.l.bf16 %v1292
      %v1401 = vunpack.c.h.bf16 %v1292
      %v1402 = vunpack.c.l.bf16 %v1293
      %v1403 = vunpack.c.h.bf16 %v1293
      %v1404 = vunpack.c.l.bf16 %v1294
      %v1405 = vunpack.c.h.bf16 %v1294
      %v1406 = vunpack.c.l.bf16 %v1295
      %v1407 = vunpack.c.h.bf16 %v1295
      %v1408 = vunpack.c.l.bf16 %v1296
      %v1409 = vunpack.c.h.bf16 %v1296
      %v1410 = vunpack.c.l.bf16 %v1297
      %v1411 = vunpack.c.h.bf16 %v1297
      %v1412 = vunpack.c.l.bf16 %v1298
      %v1413 = vunpack.c.h.bf16 %v1298
      %v1414 = vunpack.c.l.bf16 %v1299
      %v1415 = vunpack.c.h.bf16 %v1299
      %v1416 = vunpack.c.l.bf16 %v1300
      %v1417 = vunpack.c.h.bf16 %v1300
      %v1418 = vunpack.c.l.bf16 %v1301
      %v1419 = vunpack.c.h.bf16 %v1301
      %v1420 = vunpack.c.l.bf16 %v1302
      %v1421 = vunpack.c.h.bf16 %v1302
      %v1422 = vunpack.c.l.bf16 %v1303
      %v1423 = vunpack.c.h.bf16 %v1303
      %v1424 = vunpack.c.l.bf16 %v1304
      %v1425 = vunpack.c.h.bf16 %v1304
      %v1426 = vunpack.c.l.bf16 %v1305
      %v1427 = vunpack.c.h.bf16 %v1305
      %v1428 = vunpack.c.l.bf16 %v1306
      %v1429 = vunpack.c.h.bf16 %v1306
      %v1430 = vunpack.c.l.bf16 %v1307
      %v1431 = vunpack.c.h.bf16 %v1307
      %v1432 = vunpack.c.l.bf16 %v1308
      %v1433 = vunpack.c.h.bf16 %v1308
      %v1434 = vunpack.c.l.bf16 %v1309
      %v1435 = vunpack.c.h.bf16 %v1309
      %v1436 = vunpack.c.l.bf16 %v1310
      %v1437 = vunpack.c.h.bf16 %v1310
      %v1438 = vunpack.c.l.bf16 %v1311
      %v1439 = vunpack.c.h.bf16 %v1311
      %v1440 = vunpack.c.l.bf16 %v1312
      %v1441 = vunpack.c.h.bf16 %v1312
      %v1442 = vunpack.c.l.bf16 %v1313
      %v1443 = vunpack.c.h.bf16 %v1313
      %v1444 = vunpack.c.l.bf16 %v1314
      %v1445 = vunpack.c.h.bf16 %v1314
      %v1446 = vunpack.c.l.bf16 %v1315
      %v1447 = vunpack.c.h.bf16 %v1315
      %v1448 = vunpack.c.l.bf16 %v1316
      %v1449 = vunpack.c.h.bf16 %v1316
      %v1450 = vunpack.c.l.bf16 %v1317
      %v1451 = vunpack.c.h.bf16 %v1317
      %v1452 = vunpack.c.l.bf16 %v1318
      %v1453 = vunpack.c.h.bf16 %v1318
      %v1454 = vunpack.c.l.bf16 %v1319
      %v1455 = vunpack.c.h.bf16 %v1319
      %v1456 = vunpack.c.l.bf16 %v1320
      %v1457 = vunpack.c.h.bf16 %v1320
      %v1458 = vunpack.c.l.bf16 %v1321
      %v1459 = vunpack.c.h.bf16 %v1321
      %v1460 = vunpack.c.l.bf16 %v1322
      %v1461 = vunpack.c.h.bf16 %v1322
      %v1462 = vunpack.c.l.bf16 %v1323
      %v1463 = vunpack.c.h.bf16 %v1323
      %v1464 = vunpack.c.l.bf16 %v1324
      %v1465 = vunpack.c.h.bf16 %v1324
      %v1466 = vunpack.c.l.bf16 %v1325
      %v1467 = vunpack.c.h.bf16 %v1325
      %v1468 = vunpack.c.l.bf16 %v1326
      %v1469 = vunpack.c.h.bf16 %v1326
      %v1470 = vunpack.c.l.bf16 %v1327
      %v1471 = vunpack.c.h.bf16 %v1327
      %v1472 = vunpack.c.l.bf16 %v1328
      %v1473 = vunpack.c.h.bf16 %v1328
      %v1474 = vunpack.c.l.bf16 %v1329
      %v1475 = vunpack.c.h.bf16 %v1329
      %v1476 = vunpack.c.l.bf16 %v1330
      %v1477 = vunpack.c.h.bf16 %v1330
      %v1478 = vunpack.c.l.bf16 %v1331
      %v1479 = vunpack.c.h.bf16 %v1331
      %v1480 = vunpack.c.l.bf16 %v1332
      %v1481 = vunpack.c.h.bf16 %v1332
      %v1482 = vunpack.c.l.bf16 %v1333
      %v1483 = vunpack.c.h.bf16 %v1333
      %v1484 = vunpack.c.l.bf16 %v1334
      %v1485 = vunpack.c.h.bf16 %v1334
      %v1486 = vunpack.c.l.bf16 %v1335
      %v1487 = vunpack.c.h.bf16 %v1335
      %v1488 = vunpack.c.l.bf16 %v1336
      %v1489 = vunpack.c.h.bf16 %v1336
      %v1490 = vunpack.c.l.bf16 %v1337
      %v1491 = vunpack.c.h.bf16 %v1337
      %v1492 = vunpack.c.l.bf16 %v1338
      %v1493 = vunpack.c.h.bf16 %v1338
      %v1494 = vunpack.c.l.bf16 %v1339
      %v1495 = vunpack.c.h.bf16 %v1339
      %v1496 = vunpack.c.l.bf16 %v1340
      %v1497 = vunpack.c.h.bf16 %v1340
      %v1498 = vunpack.c.l.bf16 %v1341
      %v1499 = vunpack.c.h.bf16 %v1341
      %v1500 = vunpack.c.l.bf16 %v1342
      %v1501 = vunpack.c.h.bf16 %v1342
      %v1502 = vunpack.c.l.bf16 %v1343
      %v1503 = vunpack.c.h.bf16 %v1343
      %v1504 = vrot.slane %v1344, 4
      %v1505 = vadd.f32 %v1344, %v1504
      %v1506 = vrot.slane %v1505, 2
      %v1507 = vadd.f32 %v1505, %v1506
      %v1508 = vrot.slane %v1507, 1
      %v1509 = vadd.f32 %v1507, %v1508
      %v1510 = vrot.slane %v1345, 4
      %v1511 = vadd.f32 %v1345, %v1510
      %v1512 = vrot.slane %v1511, 2
      %v1513 = vadd.f32 %v1511, %v1512
      %v1514 = vrot.slane %v1513, 1
      %v1515 = vadd.f32 %v1513, %v1514
      %v1516 = vrot.slane %v1346, 4
      %v1517 = vadd.f32 %v1346, %v1516
      %v1518 = vrot.slane %v1517, 2
      %v1519 = vadd.f32 %v1517, %v1518
      %v1520 = vrot.slane %v1519, 1
      %v1521 = vadd.f32 %v1519, %v1520
      %v1522 = vrot.slane %v1347, 4
      %v1523 = vadd.f32 %v1347, %v1522
      %v1524 = vrot.slane %v1523, 2
      %v1525 = vadd.f32 %v1523, %v1524
      %v1526 = vrot.slane %v1525, 1
      %v1527 = vadd.f32 %v1525, %v1526
      %v1528 = vrot.slane %v1348, 4
      %v1529 = vadd.f32 %v1348, %v1528
      %v1530 = vrot.slane %v1529, 2
      %v1531 = vadd.f32 %v1529, %v1530
      %v1532 = vrot.slane %v1531, 1
      %v1533 = vadd.f32 %v1531, %v1532
      %v1534 = vrot.slane %v1349, 4
      %v1535 = vadd.f32 %v1349, %v1534
      %v1536 = vrot.slane %v1535, 2
      %v1537 = vadd.f32 %v1535, %v1536
      %v1538 = vrot.slane %v1537, 1
      %v1539 = vadd.f32 %v1537, %v1538
      %v1540 = vrot.slane %v1350, 4
      %v1541 = vadd.f32 %v1350, %v1540
      %v1542 = vrot.slane %v1541, 2
      %v1543 = vadd.f32 %v1541, %v1542
      %v1544 = vrot.slane %v1543, 1
      %v1545 = vadd.f32 %v1543, %v1544
      %v1546 = vrot.slane %v1351, 4
      %v1547 = vadd.f32 %v1351, %v1546
      %v1548 = vrot.slane %v1547, 2
      %v1549 = vadd.f32 %v1547, %v1548
      %v1550 = vrot.slane %v1549, 1
      %v1551 = vadd.f32 %v1549, %v1550
      %v1552 = vrot.slane %v1352, 4
      %v1553 = vadd.f32 %v1352, %v1552
      %v1554 = vrot.slane %v1553, 2
      %v1555 = vadd.f32 %v1553, %v1554
      %v1556 = vrot.slane %v1555, 1
      %v1557 = vadd.f32 %v1555, %v1556
      %v1558 = vrot.slane %v1353, 4
      %v1559 = vadd.f32 %v1353, %v1558
      %v1560 = vrot.slane %v1559, 2
      %v1561 = vadd.f32 %v1559, %v1560
      %v1562 = vrot.slane %v1561, 1
      %v1563 = vadd.f32 %v1561, %v1562
      %v1564 = vrot.slane %v1354, 4
      %v1565 = vadd.f32 %v1354, %v1564
      %v1566 = vrot.slane %v1565, 2
      %v1567 = vadd.f32 %v1565, %v1566
      %v1568 = vrot.slane %v1567, 1
      %v1569 = vadd.f32 %v1567, %v1568
      %v1570 = vrot.slane %v1355, 4
      %v1571 = vadd.f32 %v1355, %v1570
      %v1572 = vrot.slane %v1571, 2
      %v1573 = vadd.f32 %v1571, %v1572
      %v1574 = vrot.slane %v1573, 1
      %v1575 = vadd.f32 %v1573, %v1574
      %v1576 = vrot.slane %v1356, 4
      %v1577 = vadd.f32 %v1356, %v1576
      %v1578 = vrot.slane %v1577, 2
      %v1579 = vadd.f32 %v1577, %v1578
      %v1580 = vrot.slane %v1579, 1
      %v1581 = vadd.f32 %v1579, %v1580
      %v1582 = vrot.slane %v1357, 4
      %v1583 = vadd.f32 %v1357, %v1582
      %v1584 = vrot.slane %v1583, 2
      %v1585 = vadd.f32 %v1583, %v1584
      %v1586 = vrot.slane %v1585, 1
      %v1587 = vadd.f32 %v1585, %v1586
      %v1588 = vrot.slane %v1358, 4
      %v1589 = vadd.f32 %v1358, %v1588
      %v1590 = vrot.slane %v1589, 2
      %v1591 = vadd.f32 %v1589, %v1590
      %v1592 = vrot.slane %v1591, 1
      %v1593 = vadd.f32 %v1591, %v1592
      %v1594 = vrot.slane %v1359, 4
      %v1595 = vadd.f32 %v1359, %v1594
      %v1596 = vrot.slane %v1595, 2
      %v1597 = vadd.f32 %v1595, %v1596
      %v1598 = vrot.slane %v1597, 1
      %v1599 = vadd.f32 %v1597, %v1598
      %v1600 = vrot.slane %v1360, 4
      %v1601 = vadd.f32 %v1360, %v1600
      %v1602 = vrot.slane %v1601, 2
      %v1603 = vadd.f32 %v1601, %v1602
      %v1604 = vrot.slane %v1603, 1
      %v1605 = vadd.f32 %v1603, %v1604
      %v1606 = vrot.slane %v1361, 4
      %v1607 = vadd.f32 %v1361, %v1606
      %v1608 = vrot.slane %v1607, 2
      %v1609 = vadd.f32 %v1607, %v1608
      %v1610 = vrot.slane %v1609, 1
      %v1611 = vadd.f32 %v1609, %v1610
      %v1612 = vrot.slane %v1362, 4
      %v1613 = vadd.f32 %v1362, %v1612
      %v1614 = vrot.slane %v1613, 2
      %v1615 = vadd.f32 %v1613, %v1614
      %v1616 = vrot.slane %v1615, 1
      %v1617 = vadd.f32 %v1615, %v1616
      %v1618 = vrot.slane %v1363, 4
      %v1619 = vadd.f32 %v1363, %v1618
      %v1620 = vrot.slane %v1619, 2
      %v1621 = vadd.f32 %v1619, %v1620
      %v1622 = vrot.slane %v1621, 1
      %v1623 = vadd.f32 %v1621, %v1622
      %v1624 = vrot.slane %v1364, 4
      %v1625 = vadd.f32 %v1364, %v1624
      %v1626 = vrot.slane %v1625, 2
      %v1627 = vadd.f32 %v1625, %v1626
      %v1628 = vrot.slane %v1627, 1
      %v1629 = vadd.f32 %v1627, %v1628
      %v1630 = vrot.slane %v1365, 4
      %v1631 = vadd.f32 %v1365, %v1630
      %v1632 = vrot.slane %v1631, 2
      %v1633 = vadd.f32 %v1631, %v1632
      %v1634 = vrot.slane %v1633, 1
      %v1635 = vadd.f32 %v1633, %v1634
      %v1636 = vrot.slane %v1366, 4
      %v1637 = vadd.f32 %v1366, %v1636
      %v1638 = vrot.slane %v1637, 2
      %v1639 = vadd.f32 %v1637, %v1638
      %v1640 = vrot.slane %v1639, 1
      %v1641 = vadd.f32 %v1639, %v1640
      %v1642 = vrot.slane %v1367, 4
      %v1643 = vadd.f32 %v1367, %v1642
      %v1644 = vrot.slane %v1643, 2
      %v1645 = vadd.f32 %v1643, %v1644
      %v1646 = vrot.slane %v1645, 1
      %v1647 = vadd.f32 %v1645, %v1646
      %v1648 = vrot.slane %v1368, 4
      %v1649 = vadd.f32 %v1368, %v1648
      %v1650 = vrot.slane %v1649, 2
      %v1651 = vadd.f32 %v1649, %v1650
      %v1652 = vrot.slane %v1651, 1
      %v1653 = vadd.f32 %v1651, %v1652
      %v1654 = vrot.slane %v1369, 4
      %v1655 = vadd.f32 %v1369, %v1654
      %v1656 = vrot.slane %v1655, 2
      %v1657 = vadd.f32 %v1655, %v1656
      %v1658 = vrot.slane %v1657, 1
      %v1659 = vadd.f32 %v1657, %v1658
      %v1660 = vrot.slane %v1370, 4
      %v1661 = vadd.f32 %v1370, %v1660
      %v1662 = vrot.slane %v1661, 2
      %v1663 = vadd.f32 %v1661, %v1662
      %v1664 = vrot.slane %v1663, 1
      %v1665 = vadd.f32 %v1663, %v1664
      %v1666 = vrot.slane %v1371, 4
      %v1667 = vadd.f32 %v1371, %v1666
      %v1668 = vrot.slane %v1667, 2
      %v1669 = vadd.f32 %v1667, %v1668
      %v1670 = vrot.slane %v1669, 1
      %v1671 = vadd.f32 %v1669, %v1670
      %v1672 = vrot.slane %v1372, 4
      %v1673 = vadd.f32 %v1372, %v1672
      %v1674 = vrot.slane %v1673, 2
      %v1675 = vadd.f32 %v1673, %v1674
      %v1676 = vrot.slane %v1675, 1
      %v1677 = vadd.f32 %v1675, %v1676
      %v1678 = vrot.slane %v1373, 4
      %v1679 = vadd.f32 %v1373, %v1678
      %v1680 = vrot.slane %v1679, 2
      %v1681 = vadd.f32 %v1679, %v1680
      %v1682 = vrot.slane %v1681, 1
      %v1683 = vadd.f32 %v1681, %v1682
      %v1684 = vrot.slane %v1374, 4
      %v1685 = vadd.f32 %v1374, %v1684
      %v1686 = vrot.slane %v1685, 2
      %v1687 = vadd.f32 %v1685, %v1686
      %v1688 = vrot.slane %v1687, 1
      %v1689 = vadd.f32 %v1687, %v1688
      %v1690 = vrot.slane %v1375, 4
      %v1691 = vadd.f32 %v1375, %v1690
      %v1692 = vrot.slane %v1691, 2
      %v1693 = vadd.f32 %v1691, %v1692
      %v1694 = vrot.slane %v1693, 1
      %v1695 = vadd.f32 %v1693, %v1694
      %v1696 = vrot.slane %v1376, 4
      %v1697 = vadd.f32 %v1376, %v1696
      %v1698 = vrot.slane %v1697, 2
      %v1699 = vadd.f32 %v1697, %v1698
      %v1700 = vrot.slane %v1699, 1
      %v1701 = vadd.f32 %v1699, %v1700
      %v1702 = vrot.slane %v1377, 4
      %v1703 = vadd.f32 %v1377, %v1702
      %v1704 = vrot.slane %v1703, 2
      %v1705 = vadd.f32 %v1703, %v1704
      %v1706 = vrot.slane %v1705, 1
      %v1707 = vadd.f32 %v1705, %v1706
      %v1708 = vrot.slane %v1378, 4
      %v1709 = vadd.f32 %v1378, %v1708
      %v1710 = vrot.slane %v1709, 2
      %v1711 = vadd.f32 %v1709, %v1710
      %v1712 = vrot.slane %v1711, 1
      %v1713 = vadd.f32 %v1711, %v1712
      %v1714 = vrot.slane %v1379, 4
      %v1715 = vadd.f32 %v1379, %v1714
      %v1716 = vrot.slane %v1715, 2
      %v1717 = vadd.f32 %v1715, %v1716
      %v1718 = vrot.slane %v1717, 1
      %v1719 = vadd.f32 %v1717, %v1718
      %v1720 = vrot.slane %v1380, 4
      %v1721 = vadd.f32 %v1380, %v1720
      %v1722 = vrot.slane %v1721, 2
      %v1723 = vadd.f32 %v1721, %v1722
      %v1724 = vrot.slane %v1723, 1
      %v1725 = vadd.f32 %v1723, %v1724
      %v1726 = vrot.slane %v1381, 4
      %v1727 = vadd.f32 %v1381, %v1726
      %v1728 = vrot.slane %v1727, 2
      %v1729 = vadd.f32 %v1727, %v1728
      %v1730 = vrot.slane %v1729, 1
      %v1731 = vadd.f32 %v1729, %v1730
      %v1732 = vrot.slane %v1382, 4
      %v1733 = vadd.f32 %v1382, %v1732
      %v1734 = vrot.slane %v1733, 2
      %v1735 = vadd.f32 %v1733, %v1734
      %v1736 = vrot.slane %v1735, 1
      %v1737 = vadd.f32 %v1735, %v1736
      %v1738 = vrot.slane %v1383, 4
      %v1739 = vadd.f32 %v1383, %v1738
      %v1740 = vrot.slane %v1739, 2
      %v1741 = vadd.f32 %v1739, %v1740
      %v1742 = vrot.slane %v1741, 1
      %v1743 = vadd.f32 %v1741, %v1742
      %v1744 = vrot.slane %v1384, 4
      %v1745 = vadd.f32 %v1384, %v1744
      %v1746 = vrot.slane %v1745, 2
      %v1747 = vadd.f32 %v1745, %v1746
      %v1748 = vrot.slane %v1747, 1
      %v1749 = vadd.f32 %v1747, %v1748
      %v1750 = vrot.slane %v1385, 4
      %v1751 = vadd.f32 %v1385, %v1750
      %v1752 = vrot.slane %v1751, 2
      %v1753 = vadd.f32 %v1751, %v1752
      %v1754 = vrot.slane %v1753, 1
      %v1755 = vadd.f32 %v1753, %v1754
      %v1756 = vrot.slane %v1386, 4
      %v1757 = vadd.f32 %v1386, %v1756
      %v1758 = vrot.slane %v1757, 2
      %v1759 = vadd.f32 %v1757, %v1758
      %v1760 = vrot.slane %v1759, 1
      %v1761 = vadd.f32 %v1759, %v1760
      %v1762 = vrot.slane %v1387, 4
      %v1763 = vadd.f32 %v1387, %v1762
      %v1764 = vrot.slane %v1763, 2
      %v1765 = vadd.f32 %v1763, %v1764
      %v1766 = vrot.slane %v1765, 1
      %v1767 = vadd.f32 %v1765, %v1766
      %v1768 = vrot.slane %v1388, 4
      %v1769 = vadd.f32 %v1388, %v1768
      %v1770 = vrot.slane %v1769, 2
      %v1771 = vadd.f32 %v1769, %v1770
      %v1772 = vrot.slane %v1771, 1
      %v1773 = vadd.f32 %v1771, %v1772
      %v1774 = vrot.slane %v1389, 4
      %v1775 = vadd.f32 %v1389, %v1774
      %v1776 = vrot.slane %v1775, 2
      %v1777 = vadd.f32 %v1775, %v1776
      %v1778 = vrot.slane %v1777, 1
      %v1779 = vadd.f32 %v1777, %v1778
      %v1780 = vrot.slane %v1390, 4
      %v1781 = vadd.f32 %v1390, %v1780
      %v1782 = vrot.slane %v1781, 2
      %v1783 = vadd.f32 %v1781, %v1782
      %v1784 = vrot.slane %v1783, 1
      %v1785 = vadd.f32 %v1783, %v1784
      %v1786 = vrot.slane %v1391, 4
      %v1787 = vadd.f32 %v1391, %v1786
      %v1788 = vrot.slane %v1787, 2
      %v1789 = vadd.f32 %v1787, %v1788
      %v1790 = vrot.slane %v1789, 1
      %v1791 = vadd.f32 %v1789, %v1790
      %v1792 = vrot.slane %v1392, 4
      %v1793 = vadd.f32 %v1392, %v1792
      %v1794 = vrot.slane %v1793, 2
      %v1795 = vadd.f32 %v1793, %v1794
      %v1796 = vrot.slane %v1795, 1
      %v1797 = vadd.f32 %v1795, %v1796
      %v1798 = vrot.slane %v1393, 4
      %v1799 = vadd.f32 %v1393, %v1798
      %v1800 = vrot.slane %v1799, 2
      %v1801 = vadd.f32 %v1799, %v1800
      %v1802 = vrot.slane %v1801, 1
      %v1803 = vadd.f32 %v1801, %v1802
      %v1804 = vrot.slane %v1394, 4
      %v1805 = vadd.f32 %v1394, %v1804
      %v1806 = vrot.slane %v1805, 2
      %v1807 = vadd.f32 %v1805, %v1806
      %v1808 = vrot.slane %v1807, 1
      %v1809 = vadd.f32 %v1807, %v1808
      %v1810 = vrot.slane %v1395, 4
      %v1811 = vadd.f32 %v1395, %v1810
      %v1812 = vrot.slane %v1811, 2
      %v1813 = vadd.f32 %v1811, %v1812
      %v1814 = vrot.slane %v1813, 1
      %v1815 = vadd.f32 %v1813, %v1814
      %v1816 = vrot.slane %v1396, 4
      %v1817 = vadd.f32 %v1396, %v1816
      %v1818 = vrot.slane %v1817, 2
      %v1819 = vadd.f32 %v1817, %v1818
      %v1820 = vrot.slane %v1819, 1
      %v1821 = vadd.f32 %v1819, %v1820
      %v1822 = vrot.slane %v1397, 4
      %v1823 = vadd.f32 %v1397, %v1822
      %v1824 = vrot.slane %v1823, 2
      %v1825 = vadd.f32 %v1823, %v1824
      %v1826 = vrot.slane %v1825, 1
      %v1827 = vadd.f32 %v1825, %v1826
      %v1828 = vrot.slane %v1398, 4
      %v1829 = vadd.f32 %v1398, %v1828
      %v1830 = vrot.slane %v1829, 2
      %v1831 = vadd.f32 %v1829, %v1830
      %v1832 = vrot.slane %v1831, 1
      %v1833 = vadd.f32 %v1831, %v1832
      %v1834 = vrot.slane %v1399, 4
      %v1835 = vadd.f32 %v1399, %v1834
      %v1836 = vrot.slane %v1835, 2
      %v1837 = vadd.f32 %v1835, %v1836
      %v1838 = vrot.slane %v1837, 1
      %v1839 = vadd.f32 %v1837, %v1838
      %v1840 = vrot.slane %v1400, 4
      %v1841 = vadd.f32 %v1400, %v1840
      %v1842 = vrot.slane %v1841, 2
      %v1843 = vadd.f32 %v1841, %v1842
      %v1844 = vrot.slane %v1843, 1
      %v1845 = vadd.f32 %v1843, %v1844
      %v1846 = vrot.slane %v1401, 4
      %v1847 = vadd.f32 %v1401, %v1846
      %v1848 = vrot.slane %v1847, 2
      %v1849 = vadd.f32 %v1847, %v1848
      %v1850 = vrot.slane %v1849, 1
      %v1851 = vadd.f32 %v1849, %v1850
      %v1852 = vrot.slane %v1402, 4
      %v1853 = vadd.f32 %v1402, %v1852
      %v1854 = vrot.slane %v1853, 2
      %v1855 = vadd.f32 %v1853, %v1854
      %v1856 = vrot.slane %v1855, 1
      %v1857 = vadd.f32 %v1855, %v1856
      %v1858 = vrot.slane %v1403, 4
      %v1859 = vadd.f32 %v1403, %v1858
      %v1860 = vrot.slane %v1859, 2
      %v1861 = vadd.f32 %v1859, %v1860
      %v1862 = vrot.slane %v1861, 1
      %v1863 = vadd.f32 %v1861, %v1862
      %v1864 = vrot.slane %v1404, 4
      %v1865 = vadd.f32 %v1404, %v1864
      %v1866 = vrot.slane %v1865, 2
      %v1867 = vadd.f32 %v1865, %v1866
      %v1868 = vrot.slane %v1867, 1
      %v1869 = vadd.f32 %v1867, %v1868
      %v1870 = vrot.slane %v1405, 4
      %v1871 = vadd.f32 %v1405, %v1870
      %v1872 = vrot.slane %v1871, 2
      %v1873 = vadd.f32 %v1871, %v1872
      %v1874 = vrot.slane %v1873, 1
      %v1875 = vadd.f32 %v1873, %v1874
      %v1876 = vrot.slane %v1406, 4
      %v1877 = vadd.f32 %v1406, %v1876
      %v1878 = vrot.slane %v1877, 2
      %v1879 = vadd.f32 %v1877, %v1878
      %v1880 = vrot.slane %v1879, 1
      %v1881 = vadd.f32 %v1879, %v1880
      %v1882 = vrot.slane %v1407, 4
      %v1883 = vadd.f32 %v1407, %v1882
      %v1884 = vrot.slane %v1883, 2
      %v1885 = vadd.f32 %v1883, %v1884
      %v1886 = vrot.slane %v1885, 1
      %v1887 = vadd.f32 %v1885, %v1886
      %v1888 = vrot.slane %v1408, 4
      %v1889 = vadd.f32 %v1408, %v1888
      %v1890 = vrot.slane %v1889, 2
      %v1891 = vadd.f32 %v1889, %v1890
      %v1892 = vrot.slane %v1891, 1
      %v1893 = vadd.f32 %v1891, %v1892
      %v1894 = vrot.slane %v1409, 4
      %v1895 = vadd.f32 %v1409, %v1894
      %v1896 = vrot.slane %v1895, 2
      %v1897 = vadd.f32 %v1895, %v1896
      %v1898 = vrot.slane %v1897, 1
      %v1899 = vadd.f32 %v1897, %v1898
      %v1900 = vrot.slane %v1410, 4
      %v1901 = vadd.f32 %v1410, %v1900
      %v1902 = vrot.slane %v1901, 2
      %v1903 = vadd.f32 %v1901, %v1902
      %v1904 = vrot.slane %v1903, 1
      %v1905 = vadd.f32 %v1903, %v1904
      %v1906 = vrot.slane %v1411, 4
      %v1907 = vadd.f32 %v1411, %v1906
      %v1908 = vrot.slane %v1907, 2
      %v1909 = vadd.f32 %v1907, %v1908
      %v1910 = vrot.slane %v1909, 1
      %v1911 = vadd.f32 %v1909, %v1910
      %v1912 = vrot.slane %v1412, 4
      %v1913 = vadd.f32 %v1412, %v1912
      %v1914 = vrot.slane %v1913, 2
      %v1915 = vadd.f32 %v1913, %v1914
      %v1916 = vrot.slane %v1915, 1
      %v1917 = vadd.f32 %v1915, %v1916
      %v1918 = vrot.slane %v1413, 4
      %v1919 = vadd.f32 %v1413, %v1918
      %v1920 = vrot.slane %v1919, 2
      %v1921 = vadd.f32 %v1919, %v1920
      %v1922 = vrot.slane %v1921, 1
      %v1923 = vadd.f32 %v1921, %v1922
      %v1924 = vrot.slane %v1414, 4
      %v1925 = vadd.f32 %v1414, %v1924
      %v1926 = vrot.slane %v1925, 2
      %v1927 = vadd.f32 %v1925, %v1926
      %v1928 = vrot.slane %v1927, 1
      %v1929 = vadd.f32 %v1927, %v1928
      %v1930 = vrot.slane %v1415, 4
      %v1931 = vadd.f32 %v1415, %v1930
      %v1932 = vrot.slane %v1931, 2
      %v1933 = vadd.f32 %v1931, %v1932
      %v1934 = vrot.slane %v1933, 1
      %v1935 = vadd.f32 %v1933, %v1934
      %v1936 = vrot.slane %v1416, 4
      %v1937 = vadd.f32 %v1416, %v1936
      %v1938 = vrot.slane %v1937, 2
      %v1939 = vadd.f32 %v1937, %v1938
      %v1940 = vrot.slane %v1939, 1
      %v1941 = vadd.f32 %v1939, %v1940
      %v1942 = vrot.slane %v1417, 4
      %v1943 = vadd.f32 %v1417, %v1942
      %v1944 = vrot.slane %v1943, 2
      %v1945 = vadd.f32 %v1943, %v1944
      %v1946 = vrot.slane %v1945, 1
      %v1947 = vadd.f32 %v1945, %v1946
      %v1948 = vrot.slane %v1418, 4
      %v1949 = vadd.f32 %v1418, %v1948
      %v1950 = vrot.slane %v1949, 2
      %v1951 = vadd.f32 %v1949, %v1950
      %v1952 = vrot.slane %v1951, 1
      %v1953 = vadd.f32 %v1951, %v1952
      %v1954 = vrot.slane %v1419, 4
      %v1955 = vadd.f32 %v1419, %v1954
      %v1956 = vrot.slane %v1955, 2
      %v1957 = vadd.f32 %v1955, %v1956
      %v1958 = vrot.slane %v1957, 1
      %v1959 = vadd.f32 %v1957, %v1958
      %v1960 = vrot.slane %v1420, 4
      %v1961 = vadd.f32 %v1420, %v1960
      %v1962 = vrot.slane %v1961, 2
      %v1963 = vadd.f32 %v1961, %v1962
      %v1964 = vrot.slane %v1963, 1
      %v1965 = vadd.f32 %v1963, %v1964
      %v1966 = vrot.slane %v1421, 4
      %v1967 = vadd.f32 %v1421, %v1966
      %v1968 = vrot.slane %v1967, 2
      %v1969 = vadd.f32 %v1967, %v1968
      %v1970 = vrot.slane %v1969, 1
      %v1971 = vadd.f32 %v1969, %v1970
      %v1972 = vrot.slane %v1422, 4
      %v1973 = vadd.f32 %v1422, %v1972
      %v1974 = vrot.slane %v1973, 2
      %v1975 = vadd.f32 %v1973, %v1974
      %v1976 = vrot.slane %v1975, 1
      %v1977 = vadd.f32 %v1975, %v1976
      %v1978 = vrot.slane %v1423, 4
      %v1979 = vadd.f32 %v1423, %v1978
      %v1980 = vrot.slane %v1979, 2
      %v1981 = vadd.f32 %v1979, %v1980
      %v1982 = vrot.slane %v1981, 1
      %v1983 = vadd.f32 %v1981, %v1982
      %v1984 = vrot.slane %v1424, 4
      %v1985 = vadd.f32 %v1424, %v1984
      %v1986 = vrot.slane %v1985, 2
      %v1987 = vadd.f32 %v1985, %v1986
      %v1988 = vrot.slane %v1987, 1
      %v1989 = vadd.f32 %v1987, %v1988
      %v1990 = vrot.slane %v1425, 4
      %v1991 = vadd.f32 %v1425, %v1990
      %v1992 = vrot.slane %v1991, 2
      %v1993 = vadd.f32 %v1991, %v1992
      %v1994 = vrot.slane %v1993, 1
      %v1995 = vadd.f32 %v1993, %v1994
      %v1996 = vrot.slane %v1426, 4
      %v1997 = vadd.f32 %v1426, %v1996
      %v1998 = vrot.slane %v1997, 2
      %v1999 = vadd.f32 %v1997, %v1998
      %v2000 = vrot.slane %v1999, 1
      %v2001 = vadd.f32 %v1999, %v2000
      %v2002 = vrot.slane %v1427, 4
      %v2003 = vadd.f32 %v1427, %v2002
      %v2004 = vrot.slane %v2003, 2
      %v2005 = vadd.f32 %v2003, %v2004
      %v2006 = vrot.slane %v2005, 1
      %v2007 = vadd.f32 %v2005, %v2006
      %v2008 = vrot.slane %v1428, 4
      %v2009 = vadd.f32 %v1428, %v2008
      %v2010 = vrot.slane %v2009, 2
      %v2011 = vadd.f32 %v2009, %v2010
      %v2012 = vrot.slane %v2011, 1
      %v2013 = vadd.f32 %v2011, %v2012
      %v2014 = vrot.slane %v1429, 4
      %v2015 = vadd.f32 %v1429, %v2014
      %v2016 = vrot.slane %v2015, 2
      %v2017 = vadd.f32 %v2015, %v2016
      %v2018 = vrot.slane %v2017, 1
      %v2019 = vadd.f32 %v2017, %v2018
      %v2020 = vrot.slane %v1430, 4
      %v2021 = vadd.f32 %v1430, %v2020
      %v2022 = vrot.slane %v2021, 2
      %v2023 = vadd.f32 %v2021, %v2022
      %v2024 = vrot.slane %v2023, 1
      %v2025 = vadd.f32 %v2023, %v2024
      %v2026 = vrot.slane %v1431, 4
      %v2027 = vadd.f32 %v1431, %v2026
      %v2028 = vrot.slane %v2027, 2
      %v2029 = vadd.f32 %v2027, %v2028
      %v2030 = vrot.slane %v2029, 1
      %v2031 = vadd.f32 %v2029, %v2030
      %v2032 = vrot.slane %v1432, 4
      %v2033 = vadd.f32 %v1432, %v2032
      %v2034 = vrot.slane %v2033, 2
      %v2035 = vadd.f32 %v2033, %v2034
      %v2036 = vrot.slane %v2035, 1
      %v2037 = vadd.f32 %v2035, %v2036
      %v2038 = vrot.slane %v1433, 4
      %v2039 = vadd.f32 %v1433, %v2038
      %v2040 = vrot.slane %v2039, 2
      %v2041 = vadd.f32 %v2039, %v2040
      %v2042 = vrot.slane %v2041, 1
      %v2043 = vadd.f32 %v2041, %v2042
      %v2044 = vrot.slane %v1434, 4
      %v2045 = vadd.f32 %v1434, %v2044
      %v2046 = vrot.slane %v2045, 2
      %v2047 = vadd.f32 %v2045, %v2046
      %v2048 = vrot.slane %v2047, 1
      %v2049 = vadd.f32 %v2047, %v2048
      %v2050 = vrot.slane %v1435, 4
      %v2051 = vadd.f32 %v1435, %v2050
      %v2052 = vrot.slane %v2051, 2
      %v2053 = vadd.f32 %v2051, %v2052
      %v2054 = vrot.slane %v2053, 1
      %v2055 = vadd.f32 %v2053, %v2054
      %v2056 = vrot.slane %v1436, 4
      %v2057 = vadd.f32 %v1436, %v2056
      %v2058 = vrot.slane %v2057, 2
      %v2059 = vadd.f32 %v2057, %v2058
      %v2060 = vrot.slane %v2059, 1
      %v2061 = vadd.f32 %v2059, %v2060
      %v2062 = vrot.slane %v1437, 4
      %v2063 = vadd.f32 %v1437, %v2062
      %v2064 = vrot.slane %v2063, 2
      %v2065 = vadd.f32 %v2063, %v2064
      %v2066 = vrot.slane %v2065, 1
      %v2067 = vadd.f32 %v2065, %v2066
      %v2068 = vrot.slane %v1438, 4
      %v2069 = vadd.f32 %v1438, %v2068
      %v2070 = vrot.slane %v2069, 2
      %v2071 = vadd.f32 %v2069, %v2070
      %v2072 = vrot.slane %v2071, 1
      %v2073 = vadd.f32 %v2071, %v2072
      %v2074 = vrot.slane %v1439, 4
      %v2075 = vadd.f32 %v1439, %v2074
      %v2076 = vrot.slane %v2075, 2
      %v2077 = vadd.f32 %v2075, %v2076
      %v2078 = vrot.slane %v2077, 1
      %v2079 = vadd.f32 %v2077, %v2078
      %v2080 = vrot.slane %v1440, 4
      %v2081 = vadd.f32 %v1440, %v2080
      %v2082 = vrot.slane %v2081, 2
      %v2083 = vadd.f32 %v2081, %v2082
      %v2084 = vrot.slane %v2083, 1
      %v2085 = vadd.f32 %v2083, %v2084
      %v2086 = vrot.slane %v1441, 4
      %v2087 = vadd.f32 %v1441, %v2086
      %v2088 = vrot.slane %v2087, 2
      %v2089 = vadd.f32 %v2087, %v2088
      %v2090 = vrot.slane %v2089, 1
      %v2091 = vadd.f32 %v2089, %v2090
      %v2092 = vrot.slane %v1442, 4
      %v2093 = vadd.f32 %v1442, %v2092
      %v2094 = vrot.slane %v2093, 2
      %v2095 = vadd.f32 %v2093, %v2094
      %v2096 = vrot.slane %v2095, 1
      %v2097 = vadd.f32 %v2095, %v2096
      %v2098 = vrot.slane %v1443, 4
      %v2099 = vadd.f32 %v1443, %v2098
      %v2100 = vrot.slane %v2099, 2
      %v2101 = vadd.f32 %v2099, %v2100
      %v2102 = vrot.slane %v2101, 1
      %v2103 = vadd.f32 %v2101, %v2102
      %v2104 = vrot.slane %v1444, 4
      %v2105 = vadd.f32 %v1444, %v2104
      %v2106 = vrot.slane %v2105, 2
      %v2107 = vadd.f32 %v2105, %v2106
      %v2108 = vrot.slane %v2107, 1
      %v2109 = vadd.f32 %v2107, %v2108
      %v2110 = vrot.slane %v1445, 4
      %v2111 = vadd.f32 %v1445, %v2110
      %v2112 = vrot.slane %v2111, 2
      %v2113 = vadd.f32 %v2111, %v2112
      %v2114 = vrot.slane %v2113, 1
      %v2115 = vadd.f32 %v2113, %v2114
      %v2116 = vrot.slane %v1446, 4
      %v2117 = vadd.f32 %v1446, %v2116
      %v2118 = vrot.slane %v2117, 2
      %v2119 = vadd.f32 %v2117, %v2118
      %v2120 = vrot.slane %v2119, 1
      %v2121 = vadd.f32 %v2119, %v2120
      %v2122 = vrot.slane %v1447, 4
      %v2123 = vadd.f32 %v1447, %v2122
      %v2124 = vrot.slane %v2123, 2
      %v2125 = vadd.f32 %v2123, %v2124
      %v2126 = vrot.slane %v2125, 1
      %v2127 = vadd.f32 %v2125, %v2126
      %v2128 = vrot.slane %v1448, 4
      %v2129 = vadd.f32 %v1448, %v2128
      %v2130 = vrot.slane %v2129, 2
      %v2131 = vadd.f32 %v2129, %v2130
      %v2132 = vrot.slane %v2131, 1
      %v2133 = vadd.f32 %v2131, %v2132
      %v2134 = vrot.slane %v1449, 4
      %v2135 = vadd.f32 %v1449, %v2134
      %v2136 = vrot.slane %v2135, 2
      %v2137 = vadd.f32 %v2135, %v2136
      %v2138 = vrot.slane %v2137, 1
      %v2139 = vadd.f32 %v2137, %v2138
      %v2140 = vrot.slane %v1450, 4
      %v2141 = vadd.f32 %v1450, %v2140
      %v2142 = vrot.slane %v2141, 2
      %v2143 = vadd.f32 %v2141, %v2142
      %v2144 = vrot.slane %v2143, 1
      %v2145 = vadd.f32 %v2143, %v2144
      %v2146 = vrot.slane %v1451, 4
      %v2147 = vadd.f32 %v1451, %v2146
      %v2148 = vrot.slane %v2147, 2
      %v2149 = vadd.f32 %v2147, %v2148
      %v2150 = vrot.slane %v2149, 1
      %v2151 = vadd.f32 %v2149, %v2150
      %v2152 = vrot.slane %v1452, 4
      %v2153 = vadd.f32 %v1452, %v2152
      %v2154 = vrot.slane %v2153, 2
      %v2155 = vadd.f32 %v2153, %v2154
      %v2156 = vrot.slane %v2155, 1
      %v2157 = vadd.f32 %v2155, %v2156
      %v2158 = vrot.slane %v1453, 4
      %v2159 = vadd.f32 %v1453, %v2158
      %v2160 = vrot.slane %v2159, 2
      %v2161 = vadd.f32 %v2159, %v2160
      %v2162 = vrot.slane %v2161, 1
      %v2163 = vadd.f32 %v2161, %v2162
      %v2164 = vrot.slane %v1454, 4
      %v2165 = vadd.f32 %v1454, %v2164
      %v2166 = vrot.slane %v2165, 2
      %v2167 = vadd.f32 %v2165, %v2166
      %v2168 = vrot.slane %v2167, 1
      %v2169 = vadd.f32 %v2167, %v2168
      %v2170 = vrot.slane %v1455, 4
      %v2171 = vadd.f32 %v1455, %v2170
      %v2172 = vrot.slane %v2171, 2
      %v2173 = vadd.f32 %v2171, %v2172
      %v2174 = vrot.slane %v2173, 1
      %v2175 = vadd.f32 %v2173, %v2174
      %v2176 = vrot.slane %v1456, 4
      %v2177 = vadd.f32 %v1456, %v2176
      %v2178 = vrot.slane %v2177, 2
      %v2179 = vadd.f32 %v2177, %v2178
      %v2180 = vrot.slane %v2179, 1
      %v2181 = vadd.f32 %v2179, %v2180
      %v2182 = vrot.slane %v1457, 4
      %v2183 = vadd.f32 %v1457, %v2182
      %v2184 = vrot.slane %v2183, 2
      %v2185 = vadd.f32 %v2183, %v2184
      %v2186 = vrot.slane %v2185, 1
      %v2187 = vadd.f32 %v2185, %v2186
      %v2188 = vrot.slane %v1458, 4
      %v2189 = vadd.f32 %v1458, %v2188
      %v2190 = vrot.slane %v2189, 2
      %v2191 = vadd.f32 %v2189, %v2190
      %v2192 = vrot.slane %v2191, 1
      %v2193 = vadd.f32 %v2191, %v2192
      %v2194 = vrot.slane %v1459, 4
      %v2195 = vadd.f32 %v1459, %v2194
      %v2196 = vrot.slane %v2195, 2
      %v2197 = vadd.f32 %v2195, %v2196
      %v2198 = vrot.slane %v2197, 1
      %v2199 = vadd.f32 %v2197, %v2198
      %v2200 = vrot.slane %v1460, 4
      %v2201 = vadd.f32 %v1460, %v2200
      %v2202 = vrot.slane %v2201, 2
      %v2203 = vadd.f32 %v2201, %v2202
      %v2204 = vrot.slane %v2203, 1
      %v2205 = vadd.f32 %v2203, %v2204
      %v2206 = vrot.slane %v1461, 4
      %v2207 = vadd.f32 %v1461, %v2206
      %v2208 = vrot.slane %v2207, 2
      %v2209 = vadd.f32 %v2207, %v2208
      %v2210 = vrot.slane %v2209, 1
      %v2211 = vadd.f32 %v2209, %v2210
      %v2212 = vrot.slane %v1462, 4
      %v2213 = vadd.f32 %v1462, %v2212
      %v2214 = vrot.slane %v2213, 2
      %v2215 = vadd.f32 %v2213, %v2214
      %v2216 = vrot.slane %v2215, 1
      %v2217 = vadd.f32 %v2215, %v2216
      %v2218 = vrot.slane %v1463, 4
      %v2219 = vadd.f32 %v1463, %v2218
      %v2220 = vrot.slane %v2219, 2
      %v2221 = vadd.f32 %v2219, %v2220
      %v2222 = vrot.slane %v2221, 1
      %v2223 = vadd.f32 %v2221, %v2222
      %v2224 = vrot.slane %v1464, 4
      %v2225 = vadd.f32 %v1464, %v2224
      %v2226 = vrot.slane %v2225, 2
      %v2227 = vadd.f32 %v2225, %v2226
      %v2228 = vrot.slane %v2227, 1
      %v2229 = vadd.f32 %v2227, %v2228
      %v2230 = vrot.slane %v1465, 4
      %v2231 = vadd.f32 %v1465, %v2230
      %v2232 = vrot.slane %v2231, 2
      %v2233 = vadd.f32 %v2231, %v2232
      %v2234 = vrot.slane %v2233, 1
      %v2235 = vadd.f32 %v2233, %v2234
      %v2236 = vrot.slane %v1466, 4
      %v2237 = vadd.f32 %v1466, %v2236
      %v2238 = vrot.slane %v2237, 2
      %v2239 = vadd.f32 %v2237, %v2238
      %v2240 = vrot.slane %v2239, 1
      %v2241 = vadd.f32 %v2239, %v2240
      %v2242 = vrot.slane %v1467, 4
      %v2243 = vadd.f32 %v1467, %v2242
      %v2244 = vrot.slane %v2243, 2
      %v2245 = vadd.f32 %v2243, %v2244
      %v2246 = vrot.slane %v2245, 1
      %v2247 = vadd.f32 %v2245, %v2246
      %v2248 = vrot.slane %v1468, 4
      %v2249 = vadd.f32 %v1468, %v2248
      %v2250 = vrot.slane %v2249, 2
      %v2251 = vadd.f32 %v2249, %v2250
      %v2252 = vrot.slane %v2251, 1
      %v2253 = vadd.f32 %v2251, %v2252
      %v2254 = vrot.slane %v1469, 4
      %v2255 = vadd.f32 %v1469, %v2254
      %v2256 = vrot.slane %v2255, 2
      %v2257 = vadd.f32 %v2255, %v2256
      %v2258 = vrot.slane %v2257, 1
      %v2259 = vadd.f32 %v2257, %v2258
      %v2260 = vrot.slane %v1470, 4
      %v2261 = vadd.f32 %v1470, %v2260
      %v2262 = vrot.slane %v2261, 2
      %v2263 = vadd.f32 %v2261, %v2262
      %v2264 = vrot.slane %v2263, 1
      %v2265 = vadd.f32 %v2263, %v2264
      %v2266 = vrot.slane %v1471, 4
      %v2267 = vadd.f32 %v1471, %v2266
      %v2268 = vrot.slane %v2267, 2
      %v2269 = vadd.f32 %v2267, %v2268
      %v2270 = vrot.slane %v2269, 1
      %v2271 = vadd.f32 %v2269, %v2270
      %v2272 = vrot.slane %v1472, 4
      %v2273 = vadd.f32 %v1472, %v2272
      %v2274 = vrot.slane %v2273, 2
      %v2275 = vadd.f32 %v2273, %v2274
      %v2276 = vrot.slane %v2275, 1
      %v2277 = vadd.f32 %v2275, %v2276
      %v2278 = vrot.slane %v1473, 4
      %v2279 = vadd.f32 %v1473, %v2278
      %v2280 = vrot.slane %v2279, 2
      %v2281 = vadd.f32 %v2279, %v2280
      %v2282 = vrot.slane %v2281, 1
      %v2283 = vadd.f32 %v2281, %v2282
      %v2284 = vrot.slane %v1474, 4
      %v2285 = vadd.f32 %v1474, %v2284
      %v2286 = vrot.slane %v2285, 2
      %v2287 = vadd.f32 %v2285, %v2286
      %v2288 = vrot.slane %v2287, 1
      %v2289 = vadd.f32 %v2287, %v2288
      %v2290 = vrot.slane %v1475, 4
      %v2291 = vadd.f32 %v1475, %v2290
      %v2292 = vrot.slane %v2291, 2
      %v2293 = vadd.f32 %v2291, %v2292
      %v2294 = vrot.slane %v2293, 1
      %v2295 = vadd.f32 %v2293, %v2294
      %v2296 = vrot.slane %v1476, 4
      %v2297 = vadd.f32 %v1476, %v2296
      %v2298 = vrot.slane %v2297, 2
      %v2299 = vadd.f32 %v2297, %v2298
      %v2300 = vrot.slane %v2299, 1
      %v2301 = vadd.f32 %v2299, %v2300
      %v2302 = vrot.slane %v1477, 4
      %v2303 = vadd.f32 %v1477, %v2302
      %v2304 = vrot.slane %v2303, 2
      %v2305 = vadd.f32 %v2303, %v2304
      %v2306 = vrot.slane %v2305, 1
      %v2307 = vadd.f32 %v2305, %v2306
      %v2308 = vrot.slane %v1478, 4
      %v2309 = vadd.f32 %v1478, %v2308
      %v2310 = vrot.slane %v2309, 2
      %v2311 = vadd.f32 %v2309, %v2310
      %v2312 = vrot.slane %v2311, 1
      %v2313 = vadd.f32 %v2311, %v2312
      %v2314 = vrot.slane %v1479, 4
      %v2315 = vadd.f32 %v1479, %v2314
      %v2316 = vrot.slane %v2315, 2
      %v2317 = vadd.f32 %v2315, %v2316
      %v2318 = vrot.slane %v2317, 1
      %v2319 = vadd.f32 %v2317, %v2318
      %v2320 = vrot.slane %v1480, 4
      %v2321 = vadd.f32 %v1480, %v2320
      %v2322 = vrot.slane %v2321, 2
      %v2323 = vadd.f32 %v2321, %v2322
      %v2324 = vrot.slane %v2323, 1
      %v2325 = vadd.f32 %v2323, %v2324
      %v2326 = vrot.slane %v1481, 4
      %v2327 = vadd.f32 %v1481, %v2326
      %v2328 = vrot.slane %v2327, 2
      %v2329 = vadd.f32 %v2327, %v2328
      %v2330 = vrot.slane %v2329, 1
      %v2331 = vadd.f32 %v2329, %v2330
      %v2332 = vrot.slane %v1482, 4
      %v2333 = vadd.f32 %v1482, %v2332
      %v2334 = vrot.slane %v2333, 2
      %v2335 = vadd.f32 %v2333, %v2334
      %v2336 = vrot.slane %v2335, 1
      %v2337 = vadd.f32 %v2335, %v2336
      %v2338 = vrot.slane %v1483, 4
      %v2339 = vadd.f32 %v1483, %v2338
      %v2340 = vrot.slane %v2339, 2
      %v2341 = vadd.f32 %v2339, %v2340
      %v2342 = vrot.slane %v2341, 1
      %v2343 = vadd.f32 %v2341, %v2342
      %v2344 = vrot.slane %v1484, 4
      %v2345 = vadd.f32 %v1484, %v2344
      %v2346 = vrot.slane %v2345, 2
      %v2347 = vadd.f32 %v2345, %v2346
      %v2348 = vrot.slane %v2347, 1
      %v2349 = vadd.f32 %v2347, %v2348
      %v2350 = vrot.slane %v1485, 4
      %v2351 = vadd.f32 %v1485, %v2350
      %v2352 = vrot.slane %v2351, 2
      %v2353 = vadd.f32 %v2351, %v2352
      %v2354 = vrot.slane %v2353, 1
      %v2355 = vadd.f32 %v2353, %v2354
      %v2356 = vrot.slane %v1486, 4
      %v2357 = vadd.f32 %v1486, %v2356
      %v2358 = vrot.slane %v2357, 2
      %v2359 = vadd.f32 %v2357, %v2358
      %v2360 = vrot.slane %v2359, 1
      %v2361 = vadd.f32 %v2359, %v2360
      %v2362 = vrot.slane %v1487, 4
      %v2363 = vadd.f32 %v1487, %v2362
      %v2364 = vrot.slane %v2363, 2
      %v2365 = vadd.f32 %v2363, %v2364
      %v2366 = vrot.slane %v2365, 1
      %v2367 = vadd.f32 %v2365, %v2366
      %v2368 = vrot.slane %v1488, 4
      %v2369 = vadd.f32 %v1488, %v2368
      %v2370 = vrot.slane %v2369, 2
      %v2371 = vadd.f32 %v2369, %v2370
      %v2372 = vrot.slane %v2371, 1
      %v2373 = vadd.f32 %v2371, %v2372
      %v2374 = vrot.slane %v1489, 4
      %v2375 = vadd.f32 %v1489, %v2374
      %v2376 = vrot.slane %v2375, 2
      %v2377 = vadd.f32 %v2375, %v2376
      %v2378 = vrot.slane %v2377, 1
      %v2379 = vadd.f32 %v2377, %v2378
      %v2380 = vrot.slane %v1490, 4
      %v2381 = vadd.f32 %v1490, %v2380
      %v2382 = vrot.slane %v2381, 2
      %v2383 = vadd.f32 %v2381, %v2382
      %v2384 = vrot.slane %v2383, 1
      %v2385 = vadd.f32 %v2383, %v2384
      %v2386 = vrot.slane %v1491, 4
      %v2387 = vadd.f32 %v1491, %v2386
      %v2388 = vrot.slane %v2387, 2
      %v2389 = vadd.f32 %v2387, %v2388
      %v2390 = vrot.slane %v2389, 1
      %v2391 = vadd.f32 %v2389, %v2390
      %v2392 = vrot.slane %v1492, 4
      %v2393 = vadd.f32 %v1492, %v2392
      %v2394 = vrot.slane %v2393, 2
      %v2395 = vadd.f32 %v2393, %v2394
      %v2396 = vrot.slane %v2395, 1
      %v2397 = vadd.f32 %v2395, %v2396
      %v2398 = vrot.slane %v1493, 4
      %v2399 = vadd.f32 %v1493, %v2398
      %v2400 = vrot.slane %v2399, 2
      %v2401 = vadd.f32 %v2399, %v2400
      %v2402 = vrot.slane %v2401, 1
      %v2403 = vadd.f32 %v2401, %v2402
      %v2404 = vrot.slane %v1494, 4
      %v2405 = vadd.f32 %v1494, %v2404
      %v2406 = vrot.slane %v2405, 2
      %v2407 = vadd.f32 %v2405, %v2406
      %v2408 = vrot.slane %v2407, 1
      %v2409 = vadd.f32 %v2407, %v2408
      %v2410 = vrot.slane %v1495, 4
      %v2411 = vadd.f32 %v1495, %v2410
      %v2412 = vrot.slane %v2411, 2
      %v2413 = vadd.f32 %v2411, %v2412
      %v2414 = vrot.slane %v2413, 1
      %v2415 = vadd.f32 %v2413, %v2414
      %v2416 = vrot.slane %v1496, 4
      %v2417 = vadd.f32 %v1496, %v2416
      %v2418 = vrot.slane %v2417, 2
      %v2419 = vadd.f32 %v2417, %v2418
      %v2420 = vrot.slane %v2419, 1
      %v2421 = vadd.f32 %v2419, %v2420
      %v2422 = vrot.slane %v1497, 4
      %v2423 = vadd.f32 %v1497, %v2422
      %v2424 = vrot.slane %v2423, 2
      %v2425 = vadd.f32 %v2423, %v2424
      %v2426 = vrot.slane %v2425, 1
      %v2427 = vadd.f32 %v2425, %v2426
      %v2428 = vrot.slane %v1498, 4
      %v2429 = vadd.f32 %v1498, %v2428
      %v2430 = vrot.slane %v2429, 2
      %v2431 = vadd.f32 %v2429, %v2430
      %v2432 = vrot.slane %v2431, 1
      %v2433 = vadd.f32 %v2431, %v2432
      %v2434 = vrot.slane %v1499, 4
      %v2435 = vadd.f32 %v1499, %v2434
      %v2436 = vrot.slane %v2435, 2
      %v2437 = vadd.f32 %v2435, %v2436
      %v2438 = vrot.slane %v2437, 1
      %v2439 = vadd.f32 %v2437, %v2438
      %v2440 = vrot.slane %v1500, 4
      %v2441 = vadd.f32 %v1500, %v2440
      %v2442 = vrot.slane %v2441, 2
      %v2443 = vadd.f32 %v2441, %v2442
      %v2444 = vrot.slane %v2443, 1
      %v2445 = vadd.f32 %v2443, %v2444
      %v2446 = vrot.slane %v1501, 4
      %v2447 = vadd.f32 %v1501, %v2446
      %v2448 = vrot.slane %v2447, 2
      %v2449 = vadd.f32 %v2447, %v2448
      %v2450 = vrot.slane %v2449, 1
      %v2451 = vadd.f32 %v2449, %v2450
      %v2452 = vrot.slane %v1502, 4
      %v2453 = vadd.f32 %v1502, %v2452
      %v2454 = vrot.slane %v2453, 2
      %v2455 = vadd.f32 %v2453, %v2454
      %v2456 = vrot.slane %v2455, 1
      %v2457 = vadd.f32 %v2455, %v2456
      %v2458 = vrot.slane %v1503, 4
      %v2459 = vadd.f32 %v1503, %v2458
      %v2460 = vrot.slane %v2459, 2
      %v2461 = vadd.f32 %v2459, %v2460
      %v2462 = vrot.slane %v2461, 1
      %v2463 = vadd.f32 %v2461, %v2462
      %v2464 = vmul.f32 %v1509, %v1135
      %v2465 = vmul.f32 %v1515, %v1135
      %v2466 = vmul.f32 %v1521, %v1135
      %v2467 = vmul.f32 %v1527, %v1135
      %v2468 = vmul.f32 %v1533, %v1135
      %v2469 = vmul.f32 %v1539, %v1135
      %v2470 = vmul.f32 %v1545, %v1135
      %v2471 = vmul.f32 %v1551, %v1135
      %v2472 = vmul.f32 %v1557, %v1135
      %v2473 = vmul.f32 %v1563, %v1135
      %v2474 = vmul.f32 %v1569, %v1135
      %v2475 = vmul.f32 %v1575, %v1135
      %v2476 = vmul.f32 %v1581, %v1135
      %v2477 = vmul.f32 %v1587, %v1135
      %v2478 = vmul.f32 %v1593, %v1135
      %v2479 = vmul.f32 %v1599, %v1135
      %v2480 = vmul.f32 %v1605, %v1135
      %v2481 = vmul.f32 %v1611, %v1135
      %v2482 = vmul.f32 %v1617, %v1135
      %v2483 = vmul.f32 %v1623, %v1135
      %v2484 = vmul.f32 %v1629, %v1135
      %v2485 = vmul.f32 %v1635, %v1135
      %v2486 = vmul.f32 %v1641, %v1135
      %v2487 = vmul.f32 %v1647, %v1135
      %v2488 = vmul.f32 %v1653, %v1135
      %v2489 = vmul.f32 %v1659, %v1135
      %v2490 = vmul.f32 %v1665, %v1135
      %v2491 = vmul.f32 %v1671, %v1135
      %v2492 = vmul.f32 %v1677, %v1135
      %v2493 = vmul.f32 %v1683, %v1135
      %v2494 = vmul.f32 %v1689, %v1135
      %v2495 = vmul.f32 %v1695, %v1135
      %v2496 = vmul.f32 %v1701, %v1135
      %v2497 = vmul.f32 %v1707, %v1135
      %v2498 = vmul.f32 %v1713, %v1135
      %v2499 = vmul.f32 %v1719, %v1135
      %v2500 = vmul.f32 %v1725, %v1135
      %v2501 = vmul.f32 %v1731, %v1135
      %v2502 = vmul.f32 %v1737, %v1135
      %v2503 = vmul.f32 %v1743, %v1135
      %v2504 = vmul.f32 %v1749, %v1135
      %v2505 = vmul.f32 %v1755, %v1135
      %v2506 = vmul.f32 %v1761, %v1135
      %v2507 = vmul.f32 %v1767, %v1135
      %v2508 = vmul.f32 %v1773, %v1135
      %v2509 = vmul.f32 %v1779, %v1135
      %v2510 = vmul.f32 %v1785, %v1135
      %v2511 = vmul.f32 %v1791, %v1135
      %v2512 = vmul.f32 %v1797, %v1135
      %v2513 = vmul.f32 %v1803, %v1135
      %v2514 = vmul.f32 %v1809, %v1135
      %v2515 = vmul.f32 %v1815, %v1135
      %v2516 = vmul.f32 %v1821, %v1135
      %v2517 = vmul.f32 %v1827, %v1135
      %v2518 = vmul.f32 %v1833, %v1135
      %v2519 = vmul.f32 %v1839, %v1135
      %v2520 = vmul.f32 %v1845, %v1135
      %v2521 = vmul.f32 %v1851, %v1135
      %v2522 = vmul.f32 %v1857, %v1135
      %v2523 = vmul.f32 %v1863, %v1135
      %v2524 = vmul.f32 %v1869, %v1135
      %v2525 = vmul.f32 %v1875, %v1135
      %v2526 = vmul.f32 %v1881, %v1135
      %v2527 = vmul.f32 %v1887, %v1135
      %v2528 = vmul.f32 %v1893, %v1135
      %v2529 = vmul.f32 %v1899, %v1135
      %v2530 = vmul.f32 %v1905, %v1135
      %v2531 = vmul.f32 %v1911, %v1135
      %v2532 = vmul.f32 %v1917, %v1135
      %v2533 = vmul.f32 %v1923, %v1135
      %v2534 = vmul.f32 %v1929, %v1135
      %v2535 = vmul.f32 %v1935, %v1135
      %v2536 = vmul.f32 %v1941, %v1135
      %v2537 = vmul.f32 %v1947, %v1135
      %v2538 = vmul.f32 %v1953, %v1135
      %v2539 = vmul.f32 %v1959, %v1135
      %v2540 = vmul.f32 %v1965, %v1135
      %v2541 = vmul.f32 %v1971, %v1135
      %v2542 = vmul.f32 %v1977, %v1135
      %v2543 = vmul.f32 %v1983, %v1135
      %v2544 = vmul.f32 %v1989, %v1135
      %v2545 = vmul.f32 %v1995, %v1135
      %v2546 = vmul.f32 %v2001, %v1135
      %v2547 = vmul.f32 %v2007, %v1135
      %v2548 = vmul.f32 %v2013, %v1135
      %v2549 = vmul.f32 %v2019, %v1135
      %v2550 = vmul.f32 %v2025, %v1135
      %v2551 = vmul.f32 %v2031, %v1135
      %v2552 = vmul.f32 %v2037, %v1135
      %v2553 = vmul.f32 %v2043, %v1135
      %v2554 = vmul.f32 %v2049, %v1135
      %v2555 = vmul.f32 %v2055, %v1135
      %v2556 = vmul.f32 %v2061, %v1135
      %v2557 = vmul.f32 %v2067, %v1135
      %v2558 = vmul.f32 %v2073, %v1135
      %v2559 = vmul.f32 %v2079, %v1135
      %v2560 = vmul.f32 %v2085, %v1135
      %v2561 = vmul.f32 %v2091, %v1135
      %v2562 = vmul.f32 %v2097, %v1135
      %v2563 = vmul.f32 %v2103, %v1135
      %v2564 = vmul.f32 %v2109, %v1135
      %v2565 = vmul.f32 %v2115, %v1135
      %v2566 = vmul.f32 %v2121, %v1135
      %v2567 = vmul.f32 %v2127, %v1135
      %v2568 = vmul.f32 %v2133, %v1135
      %v2569 = vmul.f32 %v2139, %v1135
      %v2570 = vmul.f32 %v2145, %v1135
      %v2571 = vmul.f32 %v2151, %v1135
      %v2572 = vmul.f32 %v2157, %v1135
      %v2573 = vmul.f32 %v2163, %v1135
      %v2574 = vmul.f32 %v2169, %v1135
      %v2575 = vmul.f32 %v2175, %v1135
      %v2576 = vmul.f32 %v2181, %v1135
      %v2577 = vmul.f32 %v2187, %v1135
      %v2578 = vmul.f32 %v2193, %v1135
      %v2579 = vmul.f32 %v2199, %v1135
      %v2580 = vmul.f32 %v2205, %v1135
      %v2581 = vmul.f32 %v2211, %v1135
      %v2582 = vmul.f32 %v2217, %v1135
      %v2583 = vmul.f32 %v2223, %v1135
      %v2584 = vmul.f32 %v2229, %v1135
      %v2585 = vmul.f32 %v2235, %v1135
      %v2586 = vmul.f32 %v2241, %v1135
      %v2587 = vmul.f32 %v2247, %v1135
      %v2588 = vmul.f32 %v2253, %v1135
      %v2589 = vmul.f32 %v2259, %v1135
      %v2590 = vmul.f32 %v2265, %v1135
      %v2591 = vmul.f32 %v2271, %v1135
      %v2592 = vmul.f32 %v2277, %v1135
      %v2593 = vmul.f32 %v2283, %v1135
      %v2594 = vmul.f32 %v2289, %v1135
      %v2595 = vmul.f32 %v2295, %v1135
      %v2596 = vmul.f32 %v2301, %v1135
      %v2597 = vmul.f32 %v2307, %v1135
      %v2598 = vmul.f32 %v2313, %v1135
      %v2599 = vmul.f32 %v2319, %v1135
      %v2600 = vmul.f32 %v2325, %v1135
      %v2601 = vmul.f32 %v2331, %v1135
      %v2602 = vmul.f32 %v2337, %v1135
      %v2603 = vmul.f32 %v2343, %v1135
      %v2604 = vmul.f32 %v2349, %v1135
      %v2605 = vmul.f32 %v2355, %v1135
      %v2606 = vmul.f32 %v2361, %v1135
      %v2607 = vmul.f32 %v2367, %v1135
      %v2608 = vmul.f32 %v2373, %v1135
      %v2609 = vmul.f32 %v2379, %v1135
      %v2610 = vmul.f32 %v2385, %v1135
      %v2611 = vmul.f32 %v2391, %v1135
      %v2612 = vmul.f32 %v2397, %v1135
      %v2613 = vmul.f32 %v2403, %v1135
      %v2614 = vmul.f32 %v2409, %v1135
      %v2615 = vmul.f32 %v2415, %v1135
      %v2616 = vmul.f32 %v2421, %v1135
      %v2617 = vmul.f32 %v2427, %v1135
      %v2618 = vmul.f32 %v2433, %v1135
      %v2619 = vmul.f32 %v2439, %v1135
      %v2620 = vmul.f32 %v2445, %v1135
      %v2621 = vmul.f32 %v2451, %v1135
      %v2622 = vmul.f32 %v2457, %v1135
      %v2623 = vmul.f32 %v2463, %v1135
      %v2624 = vmul.f32 %v1136, %v1136
      %v2625 = vmul.f32 %v1137, %v1137
      %v2626 = vmul.f32 %v1138, %v1138
      %v2627 = vmul.f32 %v1139, %v1139
      %v2628 = vmul.f32 %v1140, %v1140
      %v2629 = vmul.f32 %v1141, %v1141
      %v2630 = vmul.f32 %v1142, %v1142
      %v2631 = vmul.f32 %v1143, %v1143
      %v2632 = vmul.f32 %v1144, %v1144
      %v2633 = vmul.f32 %v1145, %v1145
      %v2634 = vmul.f32 %v1146, %v1146
      %v2635 = vmul.f32 %v1147, %v1147
      %v2636 = vmul.f32 %v1148, %v1148
      %v2637 = vmul.f32 %v1149, %v1149
      %v2638 = vmul.f32 %v1150, %v1150
      %v2639 = vmul.f32 %v1151, %v1151
      %v2640 = vmul.f32 %v1152, %v1152
      %v2641 = vmul.f32 %v1153, %v1153
      %v2642 = vmul.f32 %v1154, %v1154
      %v2643 = vmul.f32 %v1155, %v1155
      %v2644 = vmul.f32 %v1156, %v1156
      %v2645 = vmul.f32 %v1157, %v1157
      %v2646 = vmul.f32 %v1158, %v1158
      %v2647 = vmul.f32 %v1159, %v1159
      %v2648 = vmul.f32 %v1160, %v1160
      %v2649 = vmul.f32 %v1161, %v1161
      %v2650 = vmul.f32 %v1162, %v1162
      %v2651 = vmul.f32 %v1163, %v1163
      %v2652 = vmul.f32 %v1164, %v1164
      %v2653 = vmul.f32 %v1165, %v1165
      %v2654 = vmul.f32 %v1166, %v1166
      %v2655 = vmul.f32 %v1167, %v1167
      %v2656 = vmul.f32 %v1168, %v1168
      %v2657 = vmul.f32 %v1169, %v1169
      %v2658 = vmul.f32 %v1170, %v1170
      %v2659 = vmul.f32 %v1171, %v1171
      %v2660 = vmul.f32 %v1172, %v1172
      %v2661 = vmul.f32 %v1173, %v1173
      %v2662 = vmul.f32 %v1174, %v1174
      %v2663 = vmul.f32 %v1175, %v1175
      %v2664 = vmul.f32 %v1176, %v1176
      %v2665 = vmul.f32 %v1177, %v1177
      %v2666 = vmul.f32 %v1178, %v1178
      %v2667 = vmul.f32 %v1179, %v1179
      %v2668 = vmul.f32 %v1180, %v1180
      %v2669 = vmul.f32 %v1181, %v1181
      %v2670 = vmul.f32 %v1182, %v1182
      %v2671 = vmul.f32 %v1183, %v1183
      %v2672 = vmul.f32 %v1184, %v1184
      %v2673 = vmul.f32 %v1185, %v1185
      %v2674 = vmul.f32 %v1186, %v1186
      %v2675 = vmul.f32 %v1187, %v1187
      %v2676 = vmul.f32 %v1188, %v1188
      %v2677 = vmul.f32 %v1189, %v1189
      %v2678 = vmul.f32 %v1190, %v1190
      %v2679 = vmul.f32 %v1191, %v1191
      %v2680 = vmul.f32 %v1192, %v1192
      %v2681 = vmul.f32 %v1193, %v1193
      %v2682 = vmul.f32 %v1194, %v1194
      %v2683 = vmul.f32 %v1195, %v1195
      %v2684 = vmul.f32 %v1196, %v1196
      %v2685 = vmul.f32 %v1197, %v1197
      %v2686 = vmul.f32 %v1198, %v1198
      %v2687 = vmul.f32 %v1199, %v1199
      %v2688 = vmul.f32 %v1200, %v1200
      %v2689 = vmul.f32 %v1201, %v1201
      %v2690 = vmul.f32 %v1202, %v1202
      %v2691 = vmul.f32 %v1203, %v1203
      %v2692 = vmul.f32 %v1204, %v1204
      %v2693 = vmul.f32 %v1205, %v1205
      %v2694 = vmul.f32 %v1206, %v1206
      %v2695 = vmul.f32 %v1207, %v1207
      %v2696 = vmul.f32 %v1208, %v1208
      %v2697 = vmul.f32 %v1209, %v1209
      %v2698 = vmul.f32 %v1210, %v1210
      %v2699 = vmul.f32 %v1211, %v1211
      %v2700 = vmul.f32 %v1212, %v1212
      %v2701 = vmul.f32 %v1213, %v1213
      %v2702 = vmul.f32 %v1214, %v1214
      %v2703 = vmul.f32 %v1215, %v1215
      %v2704 = vmul.f32 %v1216, %v1216
      %v2705 = vmul.f32 %v1217, %v1217
      %v2706 = vmul.f32 %v1218, %v1218
      %v2707 = vmul.f32 %v1219, %v1219
      %v2708 = vmul.f32 %v1220, %v1220
      %v2709 = vmul.f32 %v1221, %v1221
      %v2710 = vmul.f32 %v1222, %v1222
      %v2711 = vmul.f32 %v1223, %v1223
      %v2712 = vmul.f32 %v1224, %v1224
      %v2713 = vmul.f32 %v1225, %v1225
      %v2714 = vmul.f32 %v1226, %v1226
      %v2715 = vmul.f32 %v1227, %v1227
      %v2716 = vmul.f32 %v1228, %v1228
      %v2717 = vmul.f32 %v1229, %v1229
      %v2718 = vmul.f32 %v1230, %v1230
      %v2719 = vmul.f32 %v1231, %v1231
      %v2720 = vmul.f32 %v1232, %v1232
      %v2721 = vmul.f32 %v1233, %v1233
      %v2722 = vmul.f32 %v1234, %v1234
      %v2723 = vmul.f32 %v1235, %v1235
      %v2724 = vmul.f32 %v1236, %v1236
      %v2725 = vmul.f32 %v1237, %v1237
      %v2726 = vmul.f32 %v1238, %v1238
      %v2727 = vmul.f32 %v1239, %v1239
      %v2728 = vmul.f32 %v1240, %v1240
      %v2729 = vmul.f32 %v1241, %v1241
      %v2730 = vmul.f32 %v1242, %v1242
      %v2731 = vmul.f32 %v1243, %v1243
      %v2732 = vmul.f32 %v1244, %v1244
      %v2733 = vmul.f32 %v1245, %v1245
      %v2734 = vmul.f32 %v1246, %v1246
      %v2735 = vmul.f32 %v1247, %v1247
      %v2736 = vmul.f32 %v1248, %v1248
      %v2737 = vmul.f32 %v1249, %v1249
      %v2738 = vmul.f32 %v1250, %v1250
      %v2739 = vmul.f32 %v1251, %v1251
      %v2740 = vmul.f32 %v1252, %v1252
      %v2741 = vmul.f32 %v1253, %v1253
      %v2742 = vmul.f32 %v1254, %v1254
      %v2743 = vmul.f32 %v1255, %v1255
      %v2744 = vmul.f32 %v1256, %v1256
      %v2745 = vmul.f32 %v1257, %v1257
      %v2746 = vmul.f32 %v1258, %v1258
      %v2747 = vmul.f32 %v1259, %v1259
      %v2748 = vmul.f32 %v1260, %v1260
      %v2749 = vmul.f32 %v1261, %v1261
      %v2750 = vmul.f32 %v1262, %v1262
      %v2751 = vmul.f32 %v1263, %v1263
      %vm2880 = vcmask 1041409
      %v2881 = vsel %vm2880, %v2640, %v2624
      %vm2882 = vcmask 1042434
      %v2883 = vsel %vm2882, %v2656, %v2881
      %vm2884 = vcmask 1043459
      %v2885 = vsel %vm2884, %v2672, %v2883
      %vm2886 = vcmask 1044484
      %v2887 = vsel %vm2886, %v2688, %v2885
      %vm2888 = vcmask 1045509
      %v2889 = vsel %vm2888, %v2704, %v2887
      %vm2890 = vcmask 1046534
      %v2891 = vsel %vm2890, %v2720, %v2889
      %vm2892 = vcmask 1047559
      %v2893 = vsel %vm2892, %v2736, %v2891
      %v2894 = vsel %vm2880, %v2641, %v2625
      %v2895 = vsel %vm2882, %v2657, %v2894
      %v2896 = vsel %vm2884, %v2673, %v2895
      %v2897 = vsel %vm2886, %v2689, %v2896
      %v2898 = vsel %vm2888, %v2705, %v2897
      %v2899 = vsel %vm2890, %v2721, %v2898
      %v2900 = vsel %vm2892, %v2737, %v2899
      %v2901 = vsel %vm2880, %v2642, %v2626
      %v2902 = vsel %vm2882, %v2658, %v2901
      %v2903 = vsel %vm2884, %v2674, %v2902
      %v2904 = vsel %vm2886, %v2690, %v2903
      %v2905 = vsel %vm2888, %v2706, %v2904
      %v2906 = vsel %vm2890, %v2722, %v2905
      %v2907 = vsel %vm2892, %v2738, %v2906
      %v2908 = vsel %vm2880, %v2643, %v2627
      %v2909 = vsel %vm2882, %v2659, %v2908
      %v2910 = vsel %vm2884, %v2675, %v2909
      %v2911 = vsel %vm2886, %v2691, %v2910
      %v2912 = vsel %vm2888, %v2707, %v2911
      %v2913 = vsel %vm2890, %v2723, %v2912
      %v2914 = vsel %vm2892, %v2739, %v2913
      %v2915 = vsel %vm2880, %v2644, %v2628
      %v2916 = vsel %vm2882, %v2660, %v2915
      %v2917 = vsel %vm2884, %v2676, %v2916
      %v2918 = vsel %vm2886, %v2692, %v2917
      %v2919 = vsel %vm2888, %v2708, %v2918
      %v2920 = vsel %vm2890, %v2724, %v2919
      %v2921 = vsel %vm2892, %v2740, %v2920
      %v2922 = vsel %vm2880, %v2645, %v2629
      %v2923 = vsel %vm2882, %v2661, %v2922
      %v2924 = vsel %vm2884, %v2677, %v2923
      %v2925 = vsel %vm2886, %v2693, %v2924
      %v2926 = vsel %vm2888, %v2709, %v2925
      %v2927 = vsel %vm2890, %v2725, %v2926
      %v2928 = vsel %vm2892, %v2741, %v2927
      %v2929 = vsel %vm2880, %v2646, %v2630
      %v2930 = vsel %vm2882, %v2662, %v2929
      %v2931 = vsel %vm2884, %v2678, %v2930
      %v2932 = vsel %vm2886, %v2694, %v2931
      %v2933 = vsel %vm2888, %v2710, %v2932
      %v2934 = vsel %vm2890, %v2726, %v2933
      %v2935 = vsel %vm2892, %v2742, %v2934
      %v2936 = vsel %vm2880, %v2647, %v2631
      %v2937 = vsel %vm2882, %v2663, %v2936
      %v2938 = vsel %vm2884, %v2679, %v2937
      %v2939 = vsel %vm2886, %v2695, %v2938
      %v2940 = vsel %vm2888, %v2711, %v2939
      %v2941 = vsel %vm2890, %v2727, %v2940
      %v2942 = vsel %vm2892, %v2743, %v2941
      %v2943 = vsel %vm2880, %v2648, %v2632
      %v2944 = vsel %vm2882, %v2664, %v2943
      %v2945 = vsel %vm2884, %v2680, %v2944
      %v2946 = vsel %vm2886, %v2696, %v2945
      %v2947 = vsel %vm2888, %v2712, %v2946
      %v2948 = vsel %vm2890, %v2728, %v2947
      %v2949 = vsel %vm2892, %v2744, %v2948
      %v2950 = vsel %vm2880, %v2649, %v2633
      %v2951 = vsel %vm2882, %v2665, %v2950
      %v2952 = vsel %vm2884, %v2681, %v2951
      %v2953 = vsel %vm2886, %v2697, %v2952
      %v2954 = vsel %vm2888, %v2713, %v2953
      %v2955 = vsel %vm2890, %v2729, %v2954
      %v2956 = vsel %vm2892, %v2745, %v2955
      %v2957 = vsel %vm2880, %v2650, %v2634
      %v2958 = vsel %vm2882, %v2666, %v2957
      %v2959 = vsel %vm2884, %v2682, %v2958
      %v2960 = vsel %vm2886, %v2698, %v2959
      %v2961 = vsel %vm2888, %v2714, %v2960
      %v2962 = vsel %vm2890, %v2730, %v2961
      %v2963 = vsel %vm2892, %v2746, %v2962
      %v2964 = vsel %vm2880, %v2651, %v2635
      %v2965 = vsel %vm2882, %v2667, %v2964
      %v2966 = vsel %vm2884, %v2683, %v2965
      %v2967 = vsel %vm2886, %v2699, %v2966
      %v2968 = vsel %vm2888, %v2715, %v2967
      %v2969 = vsel %vm2890, %v2731, %v2968
      %v2970 = vsel %vm2892, %v2747, %v2969
      %v2971 = vsel %vm2880, %v2652, %v2636
      %v2972 = vsel %vm2882, %v2668, %v2971
      %v2973 = vsel %vm2884, %v2684, %v2972
      %v2974 = vsel %vm2886, %v2700, %v2973
      %v2975 = vsel %vm2888, %v2716, %v2974
      %v2976 = vsel %vm2890, %v2732, %v2975
      %v2977 = vsel %vm2892, %v2748, %v2976
      %v2978 = vsel %vm2880, %v2653, %v2637
      %v2979 = vsel %vm2882, %v2669, %v2978
      %v2980 = vsel %vm2884, %v2685, %v2979
      %v2981 = vsel %vm2886, %v2701, %v2980
      %v2982 = vsel %vm2888, %v2717, %v2981
      %v2983 = vsel %vm2890, %v2733, %v2982
      %v2984 = vsel %vm2892, %v2749, %v2983
      %v2985 = vsel %vm2880, %v2654, %v2638
      %v2986 = vsel %vm2882, %v2670, %v2985
      %v2987 = vsel %vm2884, %v2686, %v2986
      %v2988 = vsel %vm2886, %v2702, %v2987
      %v2989 = vsel %vm2888, %v2718, %v2988
      %v2990 = vsel %vm2890, %v2734, %v2989
      %v2991 = vsel %vm2892, %v2750, %v2990
      %v2992 = vsel %vm2880, %v2655, %v2639
      %v2993 = vsel %vm2882, %v2671, %v2992
      %v2994 = vsel %vm2884, %v2687, %v2993
      %v2995 = vsel %vm2886, %v2703, %v2994
      %v2996 = vsel %vm2888, %v2719, %v2995
      %v2997 = vsel %vm2890, %v2735, %v2996
      %v2998 = vsel %vm2892, %v2751, %v2997
      %v3015 = vadd.f32 %v2893, %v2900
      %v3016 = vadd.f32 %v3015, %v2907
      %v3017 = vadd.f32 %v3016, %v2914
      %v3018 = vadd.f32 %v3017, %v2921
      %v3019 = vadd.f32 %v3018, %v2928
      %v3020 = vadd.f32 %v3019, %v2935
      %v3021 = vadd.f32 %v3020, %v2942
      %v3022 = vadd.f32 %v3021, %v2949
      %v3023 = vadd.f32 %v3022, %v2956
      %v3024 = vadd.f32 %v3023, %v2963
      %v3025 = vadd.f32 %v3024, %v2970
      %v3026 = vadd.f32 %v3025, %v2977
      %v3027 = vadd.f32 %v3026, %v2984
      %v3028 = vadd.f32 %v3027, %v2991
      %v3029 = vadd.f32 %v3028, %v2998
      %3030 = vadd.xlane.f32.xlu0 %v3029
      %v3031 = vpop.xlane.xlu0 %3030
      %v3032 = vmul.f32 %v2464, %v2464
      %v3033 = vmul.f32 %v2465, %v2465
      %v3034 = vmul.f32 %v2466, %v2466
      %v3035 = vmul.f32 %v2467, %v2467
      %v3036 = vmul.f32 %v2468, %v2468
      %v3037 = vmul.f32 %v2469, %v2469
      %v3038 = vmul.f32 %v2470, %v2470
      %v3039 = vmul.f32 %v2471, %v2471
      %v3040 = vmul.f32 %v2472, %v2472
      %v3041 = vmul.f32 %v2473, %v2473
      %v3042 = vmul.f32 %v2474, %v2474
      %v3043 = vmul.f32 %v2475, %v2475
      %v3044 = vmul.f32 %v2476, %v2476
      %v3045 = vmul.f32 %v2477, %v2477
      %v3046 = vmul.f32 %v2478, %v2478
      %v3047 = vmul.f32 %v2479, %v2479
      %v3048 = vmul.f32 %v2480, %v2480
      %v3049 = vmul.f32 %v2481, %v2481
      %v3050 = vmul.f32 %v2482, %v2482
      %v3051 = vmul.f32 %v2483, %v2483
      %v3052 = vmul.f32 %v2484, %v2484
      %v3053 = vmul.f32 %v2485, %v2485
      %v3054 = vmul.f32 %v2486, %v2486
      %v3055 = vmul.f32 %v2487, %v2487
      %v3056 = vmul.f32 %v2488, %v2488
      %v3057 = vmul.f32 %v2489, %v2489
      %v3058 = vmul.f32 %v2490, %v2490
      %v3059 = vmul.f32 %v2491, %v2491
      %v3060 = vmul.f32 %v2492, %v2492
      %v3061 = vmul.f32 %v2493, %v2493
      %v3062 = vmul.f32 %v2494, %v2494
      %v3063 = vmul.f32 %v2495, %v2495
      %v3064 = vmul.f32 %v2496, %v2496
      %v3065 = vmul.f32 %v2497, %v2497
      %v3066 = vmul.f32 %v2498, %v2498
      %v3067 = vmul.f32 %v2499, %v2499
      %v3068 = vmul.f32 %v2500, %v2500
      %v3069 = vmul.f32 %v2501, %v2501
      %v3070 = vmul.f32 %v2502, %v2502
      %v3071 = vmul.f32 %v2503, %v2503
      %v3072 = vmul.f32 %v2504, %v2504
      %v3073 = vmul.f32 %v2505, %v2505
      %v3074 = vmul.f32 %v2506, %v2506
      %v3075 = vmul.f32 %v2507, %v2507
      %v3076 = vmul.f32 %v2508, %v2508
      %v3077 = vmul.f32 %v2509, %v2509
      %v3078 = vmul.f32 %v2510, %v2510
      %v3079 = vmul.f32 %v2511, %v2511
      %v3080 = vmul.f32 %v2512, %v2512
      %v3081 = vmul.f32 %v2513, %v2513
      %v3082 = vmul.f32 %v2514, %v2514
      %v3083 = vmul.f32 %v2515, %v2515
      %v3084 = vmul.f32 %v2516, %v2516
      %v3085 = vmul.f32 %v2517, %v2517
      %v3086 = vmul.f32 %v2518, %v2518
      %v3087 = vmul.f32 %v2519, %v2519
      %v3088 = vmul.f32 %v2520, %v2520
      %v3089 = vmul.f32 %v2521, %v2521
      %v3090 = vmul.f32 %v2522, %v2522
      %v3091 = vmul.f32 %v2523, %v2523
      %v3092 = vmul.f32 %v2524, %v2524
      %v3093 = vmul.f32 %v2525, %v2525
      %v3094 = vmul.f32 %v2526, %v2526
      %v3095 = vmul.f32 %v2527, %v2527
      %v3096 = vmul.f32 %v2528, %v2528
      %v3097 = vmul.f32 %v2529, %v2529
      %v3098 = vmul.f32 %v2530, %v2530
      %v3099 = vmul.f32 %v2531, %v2531
      %v3100 = vmul.f32 %v2532, %v2532
      %v3101 = vmul.f32 %v2533, %v2533
      %v3102 = vmul.f32 %v2534, %v2534
      %v3103 = vmul.f32 %v2535, %v2535
      %v3104 = vmul.f32 %v2536, %v2536
      %v3105 = vmul.f32 %v2537, %v2537
      %v3106 = vmul.f32 %v2538, %v2538
      %v3107 = vmul.f32 %v2539, %v2539
      %v3108 = vmul.f32 %v2540, %v2540
      %v3109 = vmul.f32 %v2541, %v2541
      %v3110 = vmul.f32 %v2542, %v2542
      %v3111 = vmul.f32 %v2543, %v2543
      %v3112 = vmul.f32 %v2544, %v2544
      %v3113 = vmul.f32 %v2545, %v2545
      %v3114 = vmul.f32 %v2546, %v2546
      %v3115 = vmul.f32 %v2547, %v2547
      %v3116 = vmul.f32 %v2548, %v2548
      %v3117 = vmul.f32 %v2549, %v2549
      %v3118 = vmul.f32 %v2550, %v2550
      %v3119 = vmul.f32 %v2551, %v2551
      %v3120 = vmul.f32 %v2552, %v2552
      %v3121 = vmul.f32 %v2553, %v2553
      %v3122 = vmul.f32 %v2554, %v2554
      %v3123 = vmul.f32 %v2555, %v2555
      %v3124 = vmul.f32 %v2556, %v2556
      %v3125 = vmul.f32 %v2557, %v2557
      %v3126 = vmul.f32 %v2558, %v2558
      %v3127 = vmul.f32 %v2559, %v2559
      %v3128 = vmul.f32 %v2560, %v2560
      %v3129 = vmul.f32 %v2561, %v2561
      %v3130 = vmul.f32 %v2562, %v2562
      %v3131 = vmul.f32 %v2563, %v2563
      %v3132 = vmul.f32 %v2564, %v2564
      %v3133 = vmul.f32 %v2565, %v2565
      %v3134 = vmul.f32 %v2566, %v2566
      %v3135 = vmul.f32 %v2567, %v2567
      %v3136 = vmul.f32 %v2568, %v2568
      %v3137 = vmul.f32 %v2569, %v2569
      %v3138 = vmul.f32 %v2570, %v2570
      %v3139 = vmul.f32 %v2571, %v2571
      %v3140 = vmul.f32 %v2572, %v2572
      %v3141 = vmul.f32 %v2573, %v2573
      %v3142 = vmul.f32 %v2574, %v2574
      %v3143 = vmul.f32 %v2575, %v2575
      %v3144 = vmul.f32 %v2576, %v2576
      %v3145 = vmul.f32 %v2577, %v2577
      %v3146 = vmul.f32 %v2578, %v2578
      %v3147 = vmul.f32 %v2579, %v2579
      %v3148 = vmul.f32 %v2580, %v2580
      %v3149 = vmul.f32 %v2581, %v2581
      %v3150 = vmul.f32 %v2582, %v2582
      %v3151 = vmul.f32 %v2583, %v2583
      %v3152 = vmul.f32 %v2584, %v2584
      %v3153 = vmul.f32 %v2585, %v2585
      %v3154 = vmul.f32 %v2586, %v2586
      %v3155 = vmul.f32 %v2587, %v2587
      %v3156 = vmul.f32 %v2588, %v2588
      %v3157 = vmul.f32 %v2589, %v2589
      %v3158 = vmul.f32 %v2590, %v2590
      %v3159 = vmul.f32 %v2591, %v2591
      %v3160 = vmul.f32 %v2592, %v2592
      %v3161 = vmul.f32 %v2593, %v2593
      %v3162 = vmul.f32 %v2594, %v2594
      %v3163 = vmul.f32 %v2595, %v2595
      %v3164 = vmul.f32 %v2596, %v2596
      %v3165 = vmul.f32 %v2597, %v2597
      %v3166 = vmul.f32 %v2598, %v2598
      %v3167 = vmul.f32 %v2599, %v2599
      %v3168 = vmul.f32 %v2600, %v2600
      %v3169 = vmul.f32 %v2601, %v2601
      %v3170 = vmul.f32 %v2602, %v2602
      %v3171 = vmul.f32 %v2603, %v2603
      %v3172 = vmul.f32 %v2604, %v2604
      %v3173 = vmul.f32 %v2605, %v2605
      %v3174 = vmul.f32 %v2606, %v2606
      %v3175 = vmul.f32 %v2607, %v2607
      %v3176 = vmul.f32 %v2608, %v2608
      %v3177 = vmul.f32 %v2609, %v2609
      %v3178 = vmul.f32 %v2610, %v2610
      %v3179 = vmul.f32 %v2611, %v2611
      %v3180 = vmul.f32 %v2612, %v2612
      %v3181 = vmul.f32 %v2613, %v2613
      %v3182 = vmul.f32 %v2614, %v2614
      %v3183 = vmul.f32 %v2615, %v2615
      %v3184 = vmul.f32 %v2616, %v2616
      %v3185 = vmul.f32 %v2617, %v2617
      %v3186 = vmul.f32 %v2618, %v2618
      %v3187 = vmul.f32 %v2619, %v2619
      %v3188 = vmul.f32 %v2620, %v2620
      %v3189 = vmul.f32 %v2621, %v2621
      %v3190 = vmul.f32 %v2622, %v2622
      %v3191 = vmul.f32 %v2623, %v2623
      %v3352 = vsel %vm2880, %v3048, %v3032
      %v3353 = vsel %vm2882, %v3064, %v3352
      %v3354 = vsel %vm2884, %v3080, %v3353
      %v3355 = vsel %vm2886, %v3096, %v3354
      %v3356 = vsel %vm2888, %v3112, %v3355
      %v3357 = vsel %vm2890, %v3128, %v3356
      %v3358 = vsel %vm2892, %v3144, %v3357
      %v3359 = vsel %vm2880, %v3049, %v3033
      %v3360 = vsel %vm2882, %v3065, %v3359
      %v3361 = vsel %vm2884, %v3081, %v3360
      %v3362 = vsel %vm2886, %v3097, %v3361
      %v3363 = vsel %vm2888, %v3113, %v3362
      %v3364 = vsel %vm2890, %v3129, %v3363
      %v3365 = vsel %vm2892, %v3145, %v3364
      %v3366 = vsel %vm2880, %v3050, %v3034
      %v3367 = vsel %vm2882, %v3066, %v3366
      %v3368 = vsel %vm2884, %v3082, %v3367
      %v3369 = vsel %vm2886, %v3098, %v3368
      %v3370 = vsel %vm2888, %v3114, %v3369
      %v3371 = vsel %vm2890, %v3130, %v3370
      %v3372 = vsel %vm2892, %v3146, %v3371
      %v3373 = vsel %vm2880, %v3051, %v3035
      %v3374 = vsel %vm2882, %v3067, %v3373
      %v3375 = vsel %vm2884, %v3083, %v3374
      %v3376 = vsel %vm2886, %v3099, %v3375
      %v3377 = vsel %vm2888, %v3115, %v3376
      %v3378 = vsel %vm2890, %v3131, %v3377
      %v3379 = vsel %vm2892, %v3147, %v3378
      %v3380 = vsel %vm2880, %v3052, %v3036
      %v3381 = vsel %vm2882, %v3068, %v3380
      %v3382 = vsel %vm2884, %v3084, %v3381
      %v3383 = vsel %vm2886, %v3100, %v3382
      %v3384 = vsel %vm2888, %v3116, %v3383
      %v3385 = vsel %vm2890, %v3132, %v3384
      %v3386 = vsel %vm2892, %v3148, %v3385
      %v3387 = vsel %vm2880, %v3053, %v3037
      %v3388 = vsel %vm2882, %v3069, %v3387
      %v3389 = vsel %vm2884, %v3085, %v3388
      %v3390 = vsel %vm2886, %v3101, %v3389
      %v3391 = vsel %vm2888, %v3117, %v3390
      %v3392 = vsel %vm2890, %v3133, %v3391
      %v3393 = vsel %vm2892, %v3149, %v3392
      %v3394 = vsel %vm2880, %v3054, %v3038
      %v3395 = vsel %vm2882, %v3070, %v3394
      %v3396 = vsel %vm2884, %v3086, %v3395
      %v3397 = vsel %vm2886, %v3102, %v3396
      %v3398 = vsel %vm2888, %v3118, %v3397
      %v3399 = vsel %vm2890, %v3134, %v3398
      %v3400 = vsel %vm2892, %v3150, %v3399
      %v3401 = vsel %vm2880, %v3055, %v3039
      %v3402 = vsel %vm2882, %v3071, %v3401
      %v3403 = vsel %vm2884, %v3087, %v3402
      %v3404 = vsel %vm2886, %v3103, %v3403
      %v3405 = vsel %vm2888, %v3119, %v3404
      %v3406 = vsel %vm2890, %v3135, %v3405
      %v3407 = vsel %vm2892, %v3151, %v3406
      %v3408 = vsel %vm2880, %v3056, %v3040
      %v3409 = vsel %vm2882, %v3072, %v3408
      %v3410 = vsel %vm2884, %v3088, %v3409
      %v3411 = vsel %vm2886, %v3104, %v3410
      %v3412 = vsel %vm2888, %v3120, %v3411
      %v3413 = vsel %vm2890, %v3136, %v3412
      %v3414 = vsel %vm2892, %v3152, %v3413
      %v3415 = vsel %vm2880, %v3057, %v3041
      %v3416 = vsel %vm2882, %v3073, %v3415
      %v3417 = vsel %vm2884, %v3089, %v3416
      %v3418 = vsel %vm2886, %v3105, %v3417
      %v3419 = vsel %vm2888, %v3121, %v3418
      %v3420 = vsel %vm2890, %v3137, %v3419
      %v3421 = vsel %vm2892, %v3153, %v3420
      %v3422 = vsel %vm2880, %v3058, %v3042
      %v3423 = vsel %vm2882, %v3074, %v3422
      %v3424 = vsel %vm2884, %v3090, %v3423
      %v3425 = vsel %vm2886, %v3106, %v3424
      %v3426 = vsel %vm2888, %v3122, %v3425
      %v3427 = vsel %vm2890, %v3138, %v3426
      %v3428 = vsel %vm2892, %v3154, %v3427
      %v3429 = vsel %vm2880, %v3059, %v3043
      %v3430 = vsel %vm2882, %v3075, %v3429
      %v3431 = vsel %vm2884, %v3091, %v3430
      %v3432 = vsel %vm2886, %v3107, %v3431
      %v3433 = vsel %vm2888, %v3123, %v3432
      %v3434 = vsel %vm2890, %v3139, %v3433
      %v3435 = vsel %vm2892, %v3155, %v3434
      %v3436 = vsel %vm2880, %v3060, %v3044
      %v3437 = vsel %vm2882, %v3076, %v3436
      %v3438 = vsel %vm2884, %v3092, %v3437
      %v3439 = vsel %vm2886, %v3108, %v3438
      %v3440 = vsel %vm2888, %v3124, %v3439
      %v3441 = vsel %vm2890, %v3140, %v3440
      %v3442 = vsel %vm2892, %v3156, %v3441
      %v3443 = vsel %vm2880, %v3061, %v3045
      %v3444 = vsel %vm2882, %v3077, %v3443
      %v3445 = vsel %vm2884, %v3093, %v3444
      %v3446 = vsel %vm2886, %v3109, %v3445
      %v3447 = vsel %vm2888, %v3125, %v3446
      %v3448 = vsel %vm2890, %v3141, %v3447
      %v3449 = vsel %vm2892, %v3157, %v3448
      %v3450 = vsel %vm2880, %v3062, %v3046
      %v3451 = vsel %vm2882, %v3078, %v3450
      %v3452 = vsel %vm2884, %v3094, %v3451
      %v3453 = vsel %vm2886, %v3110, %v3452
      %v3454 = vsel %vm2888, %v3126, %v3453
      %v3455 = vsel %vm2890, %v3142, %v3454
      %v3456 = vsel %vm2892, %v3158, %v3455
      %v3457 = vsel %vm2880, %v3063, %v3047
      %v3458 = vsel %vm2882, %v3079, %v3457
      %v3459 = vsel %vm2884, %v3095, %v3458
      %v3460 = vsel %vm2886, %v3111, %v3459
      %v3461 = vsel %vm2888, %v3127, %v3460
      %v3462 = vsel %vm2890, %v3143, %v3461
      %v3463 = vsel %vm2892, %v3159, %v3462
      %v3464 = vsel %vm2880, %v3176, %v3160
      %v3465 = vsel %vm2880, %v3177, %v3161
      %v3466 = vsel %vm2880, %v3178, %v3162
      %v3467 = vsel %vm2880, %v3179, %v3163
      %v3468 = vsel %vm2880, %v3180, %v3164
      %v3469 = vsel %vm2880, %v3181, %v3165
      %v3470 = vsel %vm2880, %v3182, %v3166
      %v3471 = vsel %vm2880, %v3183, %v3167
      %v3472 = vsel %vm2880, %v3184, %v3168
      %v3473 = vsel %vm2880, %v3185, %v3169
      %v3474 = vsel %vm2880, %v3186, %v3170
      %v3475 = vsel %vm2880, %v3187, %v3171
      %v3476 = vsel %vm2880, %v3188, %v3172
      %v3477 = vsel %vm2880, %v3189, %v3173
      %v3478 = vsel %vm2880, %v3190, %v3174
      %v3479 = vsel %vm2880, %v3191, %v3175
      %3512 = vmatprep.subr.mxu0 0.0
      %3513 = vmatpush1.xpose.msra.mxu0 0.0
      %3514 = vmatprep.subr.mxu0 0.0
      %3515 = vmatpush1.xpose.msra.mxu0 0.0
      %3516 = vmatprep.subr.mxu0 0.0
      %3517 = vmatpush1.xpose.msra.mxu0 0.0
      %3518 = vmatprep.subr.mxu0 0.0
      %3519 = vmatpush1.xpose.msra.mxu0 0.0
      %3520 = vmatprep.subr.mxu0 0.0
      %3521 = vmatpush1.xpose.msra.mxu0 0.0
      %3522 = vmatprep.subr.mxu0 0.0
      %3523 = vmatpush1.xpose.msra.mxu0 0.0
      %3524 = vmatprep.subr.mxu0 0.0
      %3525 = vmatpush1.xpose.msra.mxu0 0.0
      %3526 = vmatprep.subr.mxu0 0.0
      %3527 = vmatpush1.xpose.msra.mxu0 0.0
      %3528 = vmatprep.subr.mxu0 0.0
      %3529 = vmatpush1.xpose.msra.mxu0 0.0
      %3530 = vmatprep.subr.mxu0 0.0
      %3531 = vmatpush1.xpose.msra.mxu0 0.0
      %3532 = vmatprep.subr.mxu0 0.0
      %3533 = vmatpush1.xpose.msra.mxu0 0.0
      %3534 = vmatprep.subr.mxu0 0.0
      %3535 = vmatpush1.xpose.msra.mxu0 0.0
      %3536 = vmatprep.subr.mxu0 0.0
      %3537 = vmatpush1.xpose.msra.mxu0 0.0
      %3538 = vmatprep.subr.mxu0 0.0
      %3539 = vmatpush1.xpose.msra.mxu0 0.0
      %3540 = vmatprep.subr.mxu0 %v3465
      %3541 = vmatpush1.xpose.msra.mxu0 %v3464
      %3542 = vmatprep.subr.mxu0 %v3365
      %3543 = vmatpush1.xpose.msra.mxu0 %v3358
      %3544 = vmatprep.subr.mxu0 0.0
      %3545 = vmatpush2.xpose.msra.mxu0 0.0
      %3546 = vmatprep.subr.mxu0 0.0
      %3547 = vmatpush2.xpose.msra.mxu0 0.0
      %3548 = vmatprep.subr.mxu0 0.0
      %3549 = vmatpush2.xpose.msra.mxu0 0.0
      %3550 = vmatprep.subr.mxu0 0.0
      %3551 = vmatpush2.xpose.msra.mxu0 0.0
      %3552 = vmatprep.subr.mxu0 0.0
      %3553 = vmatpush2.xpose.msra.mxu0 0.0
      %3554 = vmatprep.subr.mxu0 0.0
      %3555 = vmatpush2.xpose.msra.mxu0 0.0
      %3556 = vmatprep.subr.mxu0 0.0
      %3557 = vmatpush2.xpose.msra.mxu0 0.0
      %3558 = vmatprep.subr.mxu0 0.0
      %3559 = vmatpush2.xpose.msra.mxu0 0.0
      %3560 = vmatprep.subr.mxu0 0.0
      %3561 = vmatpush2.xpose.msra.mxu0 0.0
      %3562 = vmatprep.subr.mxu0 0.0
      %3563 = vmatpush2.xpose.msra.mxu0 0.0
      %3564 = vmatprep.subr.mxu0 0.0
      %3565 = vmatpush2.xpose.msra.mxu0 0.0
      %3566 = vmatprep.subr.mxu0 0.0
      %3567 = vmatpush2.xpose.msra.mxu0 0.0
      %3568 = vmatprep.subr.mxu0 0.0
      %3569 = vmatpush2.xpose.msra.mxu0 0.0
      %3570 = vmatprep.subr.mxu0 0.0
      %3571 = vmatpush2.xpose.msra.mxu0 0.0
      %3572 = vmatprep.subr.mxu0 0.0
      %3573 = vmatpush2.xpose.msra.mxu0 0.0
      %3574 = vmatprep.subr.mxu0 0.0
      %3575 = vmatpush2.xpose.msra.mxu0 0.0
      %3576 = vmatprep.mubr.f32.mxu0 1.0
      %3577 = vmatmul.mubr.f32.gmra.mxu0 1.0
      %v3578 = vpop.f32.mrf.mxu0
      %v3579 = vadd.f32 0.0, %v3578
      %v3580 = vpop.f32.mrf.mxu0
      %3581 = vdwg.mxu0
      %3582 = vmatprep.subr.mxu0 0.0
      %3583 = vmatpush1.xpose.msra.mxu0 0.0
      %3584 = vmatprep.subr.mxu0 0.0
      %3585 = vmatpush1.xpose.msra.mxu0 0.0
      %3586 = vmatprep.subr.mxu0 0.0
      %3587 = vmatpush1.xpose.msra.mxu0 0.0
      %3588 = vmatprep.subr.mxu0 0.0
      %3589 = vmatpush1.xpose.msra.mxu0 0.0
      %3590 = vmatprep.subr.mxu0 0.0
      %3591 = vmatpush1.xpose.msra.mxu0 0.0
      %3592 = vmatprep.subr.mxu0 0.0
      %3593 = vmatpush1.xpose.msra.mxu0 0.0
      %3594 = vmatprep.subr.mxu0 0.0
      %3595 = vmatpush1.xpose.msra.mxu0 0.0
      %3596 = vmatprep.subr.mxu0 0.0
      %3597 = vmatpush1.xpose.msra.mxu0 0.0
      %3598 = vmatprep.subr.mxu0 0.0
      %3599 = vmatpush1.xpose.msra.mxu0 0.0
      %3600 = vmatprep.subr.mxu0 0.0
      %3601 = vmatpush1.xpose.msra.mxu0 0.0
      %3602 = vmatprep.subr.mxu0 0.0
      %3603 = vmatpush1.xpose.msra.mxu0 0.0
      %3604 = vmatprep.subr.mxu0 0.0
      %3605 = vmatpush1.xpose.msra.mxu0 0.0
      %3606 = vmatprep.subr.mxu0 0.0
      %3607 = vmatpush1.xpose.msra.mxu0 0.0
      %3608 = vmatprep.subr.mxu0 0.0
      %3609 = vmatpush1.xpose.msra.mxu0 0.0
      %3610 = vmatprep.subr.mxu0 %v3467
      %3611 = vmatpush1.xpose.msra.mxu0 %v3466
      %3612 = vmatprep.subr.mxu0 %v3379
      %3613 = vmatpush1.xpose.msra.mxu0 %v3372
      %3614 = vmatprep.subr.mxu0 0.0
      %3615 = vmatpush2.xpose.msra.mxu0 0.0
      %3616 = vmatprep.subr.mxu0 0.0
      %3617 = vmatpush2.xpose.msra.mxu0 0.0
      %3618 = vmatprep.subr.mxu0 0.0
      %3619 = vmatpush2.xpose.msra.mxu0 0.0
      %3620 = vmatprep.subr.mxu0 0.0
      %3621 = vmatpush2.xpose.msra.mxu0 0.0
      %3622 = vmatprep.subr.mxu0 0.0
      %3623 = vmatpush2.xpose.msra.mxu0 0.0
      %3624 = vmatprep.subr.mxu0 0.0
      %3625 = vmatpush2.xpose.msra.mxu0 0.0
      %3626 = vmatprep.subr.mxu0 0.0
      %3627 = vmatpush2.xpose.msra.mxu0 0.0
      %3628 = vmatprep.subr.mxu0 0.0
      %3629 = vmatpush2.xpose.msra.mxu0 0.0
      %3630 = vmatprep.subr.mxu0 0.0
      %3631 = vmatpush2.xpose.msra.mxu0 0.0
      %3632 = vmatprep.subr.mxu0 0.0
      %3633 = vmatpush2.xpose.msra.mxu0 0.0
      %3634 = vmatprep.subr.mxu0 0.0
      %3635 = vmatpush2.xpose.msra.mxu0 0.0
      %3636 = vmatprep.subr.mxu0 0.0
      %3637 = vmatpush2.xpose.msra.mxu0 0.0
      %3638 = vmatprep.subr.mxu0 0.0
      %3639 = vmatpush2.xpose.msra.mxu0 0.0
      %3640 = vmatprep.subr.mxu0 0.0
      %3641 = vmatpush2.xpose.msra.mxu0 0.0
      %3642 = vmatprep.subr.mxu0 0.0
      %3643 = vmatpush2.xpose.msra.mxu0 0.0
      %3644 = vmatprep.subr.mxu0 0.0
      %3645 = vmatpush2.xpose.msra.mxu0 0.0
      %3646 = vmatprep.mubr.f32.mxu0 1.0
      %3647 = vmatmul.mubr.f32.gmra.mxu0 1.0
      %v3648 = vpop.f32.mrf.mxu0
      %v3649 = vadd.f32 %v3579, %v3648
      %v3650 = vpop.f32.mrf.mxu0
      %3651 = vdwg.mxu0
      %3652 = vmatprep.subr.mxu0 0.0
      %3653 = vmatpush1.xpose.msra.mxu0 0.0
      %3654 = vmatprep.subr.mxu0 0.0
      %3655 = vmatpush1.xpose.msra.mxu0 0.0
      %3656 = vmatprep.subr.mxu0 0.0
      %3657 = vmatpush1.xpose.msra.mxu0 0.0
      %3658 = vmatprep.subr.mxu0 0.0
      %3659 = vmatpush1.xpose.msra.mxu0 0.0
      %3660 = vmatprep.subr.mxu0 0.0
      %3661 = vmatpush1.xpose.msra.mxu0 0.0
      %3662 = vmatprep.subr.mxu0 0.0
      %3663 = vmatpush1.xpose.msra.mxu0 0.0
      %3664 = vmatprep.subr.mxu0 0.0
      %3665 = vmatpush1.xpose.msra.mxu0 0.0
      %3666 = vmatprep.subr.mxu0 0.0
      %3667 = vmatpush1.xpose.msra.mxu0 0.0
      %3668 = vmatprep.subr.mxu0 0.0
      %3669 = vmatpush1.xpose.msra.mxu0 0.0
      %3670 = vmatprep.subr.mxu0 0.0
      %3671 = vmatpush1.xpose.msra.mxu0 0.0
      %3672 = vmatprep.subr.mxu0 0.0
      %3673 = vmatpush1.xpose.msra.mxu0 0.0
      %3674 = vmatprep.subr.mxu0 0.0
      %3675 = vmatpush1.xpose.msra.mxu0 0.0
      %3676 = vmatprep.subr.mxu0 0.0
      %3677 = vmatpush1.xpose.msra.mxu0 0.0
      %3678 = vmatprep.subr.mxu0 0.0
      %3679 = vmatpush1.xpose.msra.mxu0 0.0
      %3680 = vmatprep.subr.mxu0 %v3469
      %3681 = vmatpush1.xpose.msra.mxu0 %v3468
      %3682 = vmatprep.subr.mxu0 %v3393
      %3683 = vmatpush1.xpose.msra.mxu0 %v3386
      %3684 = vmatprep.subr.mxu0 0.0
      %3685 = vmatpush2.xpose.msra.mxu0 0.0
      %3686 = vmatprep.subr.mxu0 0.0
      %3687 = vmatpush2.xpose.msra.mxu0 0.0
      %3688 = vmatprep.subr.mxu0 0.0
      %3689 = vmatpush2.xpose.msra.mxu0 0.0
      %3690 = vmatprep.subr.mxu0 0.0
      %3691 = vmatpush2.xpose.msra.mxu0 0.0
      %3692 = vmatprep.subr.mxu0 0.0
      %3693 = vmatpush2.xpose.msra.mxu0 0.0
      %3694 = vmatprep.subr.mxu0 0.0
      %3695 = vmatpush2.xpose.msra.mxu0 0.0
      %3696 = vmatprep.subr.mxu0 0.0
      %3697 = vmatpush2.xpose.msra.mxu0 0.0
      %3698 = vmatprep.subr.mxu0 0.0
      %3699 = vmatpush2.xpose.msra.mxu0 0.0
      %3700 = vmatprep.subr.mxu0 0.0
      %3701 = vmatpush2.xpose.msra.mxu0 0.0
      %3702 = vmatprep.subr.mxu0 0.0
      %3703 = vmatpush2.xpose.msra.mxu0 0.0
      %3704 = vmatprep.subr.mxu0 0.0
      %3705 = vmatpush2.xpose.msra.mxu0 0.0
      %3706 = vmatprep.subr.mxu0 0.0
      %3707 = vmatpush2.xpose.msra.mxu0 0.0
      %3708 = vmatprep.subr.mxu0 0.0
      %3709 = vmatpush2.xpose.msra.mxu0 0.0
      %3710 = vmatprep.subr.mxu0 0.0
      %3711 = vmatpush2.xpose.msra.mxu0 0.0
      %3712 = vmatprep.subr.mxu0 0.0
      %3713 = vmatpush2.xpose.msra.mxu0 0.0
      %3714 = vmatprep.subr.mxu0 0.0
      %3715 = vmatpush2.xpose.msra.mxu0 0.0
      %3716 = vmatprep.mubr.f32.mxu0 1.0
      %3717 = vmatmul.mubr.f32.gmra.mxu0 1.0
      %v3718 = vpop.f32.mrf.mxu0
      %v3719 = vadd.f32 %v3649, %v3718
      %v3720 = vpop.f32.mrf.mxu0
      %3721 = vdwg.mxu0
      %3722 = vmatprep.subr.mxu0 0.0
      %3723 = vmatpush1.xpose.msra.mxu0 0.0
      %3724 = vmatprep.subr.mxu0 0.0
      %3725 = vmatpush1.xpose.msra.mxu0 0.0
      %3726 = vmatprep.subr.mxu0 0.0
      %3727 = vmatpush1.xpose.msra.mxu0 0.0
      %3728 = vmatprep.subr.mxu0 0.0
      %3729 = vmatpush1.xpose.msra.mxu0 0.0
      %3730 = vmatprep.subr.mxu0 0.0
      %3731 = vmatpush1.xpose.msra.mxu0 0.0
      %3732 = vmatprep.subr.mxu0 0.0
      %3733 = vmatpush1.xpose.msra.mxu0 0.0
      %3734 = vmatprep.subr.mxu0 0.0
      %3735 = vmatpush1.xpose.msra.mxu0 0.0
      %3736 = vmatprep.subr.mxu0 0.0
      %3737 = vmatpush1.xpose.msra.mxu0 0.0
      %3738 = vmatprep.subr.mxu0 0.0
      %3739 = vmatpush1.xpose.msra.mxu0 0.0
      %3740 = vmatprep.subr.mxu0 0.0
      %3741 = vmatpush1.xpose.msra.mxu0 0.0
      %3742 = vmatprep.subr.mxu0 0.0
      %3743 = vmatpush1.xpose.msra.mxu0 0.0
      %3744 = vmatprep.subr.mxu0 0.0
      %3745 = vmatpush1.xpose.msra.mxu0 0.0
      %3746 = vmatprep.subr.mxu0 0.0
      %3747 = vmatpush1.xpose.msra.mxu0 0.0
      %3748 = vmatprep.subr.mxu0 0.0
      %3749 = vmatpush1.xpose.msra.mxu0 0.0
      %3750 = vmatprep.subr.mxu0 %v3471
      %3751 = vmatpush1.xpose.msra.mxu0 %v3470
      %3752 = vmatprep.subr.mxu0 %v3407
      %3753 = vmatpush1.xpose.msra.mxu0 %v3400
      %3754 = vmatprep.subr.mxu0 0.0
      %3755 = vmatpush2.xpose.msra.mxu0 0.0
      %3756 = vmatprep.subr.mxu0 0.0
      %3757 = vmatpush2.xpose.msra.mxu0 0.0
      %3758 = vmatprep.subr.mxu0 0.0
      %3759 = vmatpush2.xpose.msra.mxu0 0.0
      %3760 = vmatprep.subr.mxu0 0.0
      %3761 = vmatpush2.xpose.msra.mxu0 0.0
      %3762 = vmatprep.subr.mxu0 0.0
      %3763 = vmatpush2.xpose.msra.mxu0 0.0
      %3764 = vmatprep.subr.mxu0 0.0
      %3765 = vmatpush2.xpose.msra.mxu0 0.0
      %3766 = vmatprep.subr.mxu0 0.0
      %3767 = vmatpush2.xpose.msra.mxu0 0.0
      %3768 = vmatprep.subr.mxu0 0.0
      %3769 = vmatpush2.xpose.msra.mxu0 0.0
      %3770 = vmatprep.subr.mxu0 0.0
      %3771 = vmatpush2.xpose.msra.mxu0 0.0
      %3772 = vmatprep.subr.mxu0 0.0
      %3773 = vmatpush2.xpose.msra.mxu0 0.0
      %3774 = vmatprep.subr.mxu0 0.0
      %3775 = vmatpush2.xpose.msra.mxu0 0.0
      %3776 = vmatprep.subr.mxu0 0.0
      %3777 = vmatpush2.xpose.msra.mxu0 0.0
      %3778 = vmatprep.subr.mxu0 0.0
      %3779 = vmatpush2.xpose.msra.mxu0 0.0
      %3780 = vmatprep.subr.mxu0 0.0
      %3781 = vmatpush2.xpose.msra.mxu0 0.0
      %3782 = vmatprep.subr.mxu0 0.0
      %3783 = vmatpush2.xpose.msra.mxu0 0.0
      %3784 = vmatprep.subr.mxu0 0.0
      %3785 = vmatpush2.xpose.msra.mxu0 0.0
      %3786 = vmatprep.mubr.f32.mxu0 1.0
      %3787 = vmatmul.mubr.f32.gmra.mxu0 1.0
      %v3788 = vpop.f32.mrf.mxu0
      %v3789 = vadd.f32 %v3719, %v3788
      %v3790 = vpop.f32.mrf.mxu0
      %3791 = vdwg.mxu0
      %3792 = vmatprep.subr.mxu0 0.0
      %3793 = vmatpush1.xpose.msra.mxu0 0.0
      %3794 = vmatprep.subr.mxu0 0.0
      %3795 = vmatpush1.xpose.msra.mxu0 0.0
      %3796 = vmatprep.subr.mxu0 0.0
      %3797 = vmatpush1.xpose.msra.mxu0 0.0
      %3798 = vmatprep.subr.mxu0 0.0
      %3799 = vmatpush1.xpose.msra.mxu0 0.0
      %3800 = vmatprep.subr.mxu0 0.0
      %3801 = vmatpush1.xpose.msra.mxu0 0.0
      %3802 = vmatprep.subr.mxu0 0.0
      %3803 = vmatpush1.xpose.msra.mxu0 0.0
      %3804 = vmatprep.subr.mxu0 0.0
      %3805 = vmatpush1.xpose.msra.mxu0 0.0
      %3806 = vmatprep.subr.mxu0 0.0
      %3807 = vmatpush1.xpose.msra.mxu0 0.0
      %3808 = vmatprep.subr.mxu0 0.0
      %3809 = vmatpush1.xpose.msra.mxu0 0.0
      %3810 = vmatprep.subr.mxu0 0.0
      %3811 = vmatpush1.xpose.msra.mxu0 0.0
      %3812 = vmatprep.subr.mxu0 0.0
      %3813 = vmatpush1.xpose.msra.mxu0 0.0
      %3814 = vmatprep.subr.mxu0 0.0
      %3815 = vmatpush1.xpose.msra.mxu0 0.0
      %3816 = vmatprep.subr.mxu0 0.0
      %3817 = vmatpush1.xpose.msra.mxu0 0.0
      %3818 = vmatprep.subr.mxu0 0.0
      %3819 = vmatpush1.xpose.msra.mxu0 0.0
      %3820 = vmatprep.subr.mxu0 %v3473
      %3821 = vmatpush1.xpose.msra.mxu0 %v3472
      %3822 = vmatprep.subr.mxu0 %v3421
      %3823 = vmatpush1.xpose.msra.mxu0 %v3414
      %3824 = vmatprep.subr.mxu0 0.0
      %3825 = vmatpush2.xpose.msra.mxu0 0.0
      %3826 = vmatprep.subr.mxu0 0.0
      %3827 = vmatpush2.xpose.msra.mxu0 0.0
      %3828 = vmatprep.subr.mxu0 0.0
      %3829 = vmatpush2.xpose.msra.mxu0 0.0
      %3830 = vmatprep.subr.mxu0 0.0
      %3831 = vmatpush2.xpose.msra.mxu0 0.0
      %3832 = vmatprep.subr.mxu0 0.0
      %3833 = vmatpush2.xpose.msra.mxu0 0.0
      %3834 = vmatprep.subr.mxu0 0.0
      %3835 = vmatpush2.xpose.msra.mxu0 0.0
      %3836 = vmatprep.subr.mxu0 0.0
      %3837 = vmatpush2.xpose.msra.mxu0 0.0
      %3838 = vmatprep.subr.mxu0 0.0
      %3839 = vmatpush2.xpose.msra.mxu0 0.0
      %3840 = vmatprep.subr.mxu0 0.0
      %3841 = vmatpush2.xpose.msra.mxu0 0.0
      %3842 = vmatprep.subr.mxu0 0.0
      %3843 = vmatpush2.xpose.msra.mxu0 0.0
      %3844 = vmatprep.subr.mxu0 0.0
      %3845 = vmatpush2.xpose.msra.mxu0 0.0
      %3846 = vmatprep.subr.mxu0 0.0
      %3847 = vmatpush2.xpose.msra.mxu0 0.0
      %3848 = vmatprep.subr.mxu0 0.0
      %3849 = vmatpush2.xpose.msra.mxu0 0.0
      %3850 = vmatprep.subr.mxu0 0.0
      %3851 = vmatpush2.xpose.msra.mxu0 0.0
      %3852 = vmatprep.subr.mxu0 0.0
      %3853 = vmatpush2.xpose.msra.mxu0 0.0
      %3854 = vmatprep.subr.mxu0 0.0
      %3855 = vmatpush2.xpose.msra.mxu0 0.0
      %3856 = vmatprep.mubr.f32.mxu0 1.0
      %3857 = vmatmul.mubr.f32.gmra.mxu0 1.0
      %v3858 = vpop.f32.mrf.mxu0
      %v3859 = vadd.f32 %v3789, %v3858
      %v3860 = vpop.f32.mrf.mxu0
      %3861 = vdwg.mxu0
      %3862 = vmatprep.subr.mxu0 0.0
      %3863 = vmatpush1.xpose.msra.mxu0 0.0
      %3864 = vmatprep.subr.mxu0 0.0
      %3865 = vmatpush1.xpose.msra.mxu0 0.0
      %3866 = vmatprep.subr.mxu0 0.0
      %3867 = vmatpush1.xpose.msra.mxu0 0.0
      %3868 = vmatprep.subr.mxu0 0.0
      %3869 = vmatpush1.xpose.msra.mxu0 0.0
      %3870 = vmatprep.subr.mxu0 0.0
      %3871 = vmatpush1.xpose.msra.mxu0 0.0
      %3872 = vmatprep.subr.mxu0 0.0
      %3873 = vmatpush1.xpose.msra.mxu0 0.0
      %3874 = vmatprep.subr.mxu0 0.0
      %3875 = vmatpush1.xpose.msra.mxu0 0.0
      %3876 = vmatprep.subr.mxu0 0.0
      %3877 = vmatpush1.xpose.msra.mxu0 0.0
      %3878 = vmatprep.subr.mxu0 0.0
      %3879 = vmatpush1.xpose.msra.mxu0 0.0
      %3880 = vmatprep.subr.mxu0 0.0
      %3881 = vmatpush1.xpose.msra.mxu0 0.0
      %3882 = vmatprep.subr.mxu0 0.0
      %3883 = vmatpush1.xpose.msra.mxu0 0.0
      %3884 = vmatprep.subr.mxu0 0.0
      %3885 = vmatpush1.xpose.msra.mxu0 0.0
      %3886 = vmatprep.subr.mxu0 0.0
      %3887 = vmatpush1.xpose.msra.mxu0 0.0
      %3888 = vmatprep.subr.mxu0 0.0
      %3889 = vmatpush1.xpose.msra.mxu0 0.0
      %3890 = vmatprep.subr.mxu0 %v3475
      %3891 = vmatpush1.xpose.msra.mxu0 %v3474
      %3892 = vmatprep.subr.mxu0 %v3435
      %3893 = vmatpush1.xpose.msra.mxu0 %v3428
      %3894 = vmatprep.subr.mxu0 0.0
      %3895 = vmatpush2.xpose.msra.mxu0 0.0
      %3896 = vmatprep.subr.mxu0 0.0
      %3897 = vmatpush2.xpose.msra.mxu0 0.0
      %3898 = vmatprep.subr.mxu0 0.0
      %3899 = vmatpush2.xpose.msra.mxu0 0.0
      %3900 = vmatprep.subr.mxu0 0.0
      %3901 = vmatpush2.xpose.msra.mxu0 0.0
      %3902 = vmatprep.subr.mxu0 0.0
      %3903 = vmatpush2.xpose.msra.mxu0 0.0
      %3904 = vmatprep.subr.mxu0 0.0
      %3905 = vmatpush2.xpose.msra.mxu0 0.0
      %3906 = vmatprep.subr.mxu0 0.0
      %3907 = vmatpush2.xpose.msra.mxu0 0.0
      %3908 = vmatprep.subr.mxu0 0.0
      %3909 = vmatpush2.xpose.msra.mxu0 0.0
      %3910 = vmatprep.subr.mxu0 0.0
      %3911 = vmatpush2.xpose.msra.mxu0 0.0
      %3912 = vmatprep.subr.mxu0 0.0
      %3913 = vmatpush2.xpose.msra.mxu0 0.0
      %3914 = vmatprep.subr.mxu0 0.0
      %3915 = vmatpush2.xpose.msra.mxu0 0.0
      %3916 = vmatprep.subr.mxu0 0.0
      %3917 = vmatpush2.xpose.msra.mxu0 0.0
      %3918 = vmatprep.subr.mxu0 0.0
      %3919 = vmatpush2.xpose.msra.mxu0 0.0
      %3920 = vmatprep.subr.mxu0 0.0
      %3921 = vmatpush2.xpose.msra.mxu0 0.0
      %3922 = vmatprep.subr.mxu0 0.0
      %3923 = vmatpush2.xpose.msra.mxu0 0.0
      %3924 = vmatprep.subr.mxu0 0.0
      %3925 = vmatpush2.xpose.msra.mxu0 0.0
      %3926 = vmatprep.mubr.f32.mxu0 1.0
      %3927 = vmatmul.mubr.f32.gmra.mxu0 1.0
      %v3928 = vpop.f32.mrf.mxu0
      %v3929 = vadd.f32 %v3859, %v3928
      %v3930 = vpop.f32.mrf.mxu0
      %3931 = vdwg.mxu0
      %3932 = vmatprep.subr.mxu0 0.0
      %3933 = vmatpush1.xpose.msra.mxu0 0.0
      %3934 = vmatprep.subr.mxu0 0.0
      %3935 = vmatpush1.xpose.msra.mxu0 0.0
      %3936 = vmatprep.subr.mxu0 0.0
      %3937 = vmatpush1.xpose.msra.mxu0 0.0
      %3938 = vmatprep.subr.mxu0 0.0
      %3939 = vmatpush1.xpose.msra.mxu0 0.0
      %3940 = vmatprep.subr.mxu0 0.0
      %3941 = vmatpush1.xpose.msra.mxu0 0.0
      %3942 = vmatprep.subr.mxu0 0.0
      %3943 = vmatpush1.xpose.msra.mxu0 0.0
      %3944 = vmatprep.subr.mxu0 0.0
      %3945 = vmatpush1.xpose.msra.mxu0 0.0
      %3946 = vmatprep.subr.mxu0 0.0
      %3947 = vmatpush1.xpose.msra.mxu0 0.0
      %3948 = vmatprep.subr.mxu0 0.0
      %3949 = vmatpush1.xpose.msra.mxu0 0.0
      %3950 = vmatprep.subr.mxu0 0.0
      %3951 = vmatpush1.xpose.msra.mxu0 0.0
      %3952 = vmatprep.subr.mxu0 0.0
      %3953 = vmatpush1.xpose.msra.mxu0 0.0
      %3954 = vmatprep.subr.mxu0 0.0
      %3955 = vmatpush1.xpose.msra.mxu0 0.0
      %3956 = vmatprep.subr.mxu0 0.0
      %3957 = vmatpush1.xpose.msra.mxu0 0.0
      %3958 = vmatprep.subr.mxu0 0.0
      %3959 = vmatpush1.xpose.msra.mxu0 0.0
      %3960 = vmatprep.subr.mxu0 %v3477
      %3961 = vmatpush1.xpose.msra.mxu0 %v3476
      %3962 = vmatprep.subr.mxu0 %v3449
      %3963 = vmatpush1.xpose.msra.mxu0 %v3442
      %3964 = vmatprep.subr.mxu0 0.0
      %3965 = vmatpush2.xpose.msra.mxu0 0.0
      %3966 = vmatprep.subr.mxu0 0.0
      %3967 = vmatpush2.xpose.msra.mxu0 0.0
      %3968 = vmatprep.subr.mxu0 0.0
      %3969 = vmatpush2.xpose.msra.mxu0 0.0
      %3970 = vmatprep.subr.mxu0 0.0
      %3971 = vmatpush2.xpose.msra.mxu0 0.0
      %3972 = vmatprep.subr.mxu0 0.0
      %3973 = vmatpush2.xpose.msra.mxu0 0.0
      %3974 = vmatprep.subr.mxu0 0.0
      %3975 = vmatpush2.xpose.msra.mxu0 0.0
      %3976 = vmatprep.subr.mxu0 0.0
      %3977 = vmatpush2.xpose.msra.mxu0 0.0
      %3978 = vmatprep.subr.mxu0 0.0
      %3979 = vmatpush2.xpose.msra.mxu0 0.0
      %3980 = vmatprep.subr.mxu0 0.0
      %3981 = vmatpush2.xpose.msra.mxu0 0.0
      %3982 = vmatprep.subr.mxu0 0.0
      %3983 = vmatpush2.xpose.msra.mxu0 0.0
      %3984 = vmatprep.subr.mxu0 0.0
      %3985 = vmatpush2.xpose.msra.mxu0 0.0
      %3986 = vmatprep.subr.mxu0 0.0
      %3987 = vmatpush2.xpose.msra.mxu0 0.0
      %3988 = vmatprep.subr.mxu0 0.0
      %3989 = vmatpush2.xpose.msra.mxu0 0.0
      %3990 = vmatprep.subr.mxu0 0.0
      %3991 = vmatpush2.xpose.msra.mxu0 0.0
      %3992 = vmatprep.subr.mxu0 0.0
      %3993 = vmatpush2.xpose.msra.mxu0 0.0
      %3994 = vmatprep.subr.mxu0 0.0
      %3995 = vmatpush2.xpose.msra.mxu0 0.0
      %3996 = vmatprep.mubr.f32.mxu0 1.0
      %3997 = vmatmul.mubr.f32.gmra.mxu0 1.0
      %v3998 = vpop.f32.mrf.mxu0
      %v3999 = vadd.f32 %v3929, %v3998
      %v4000 = vpop.f32.mrf.mxu0
      %4001 = vdwg.mxu0
      %4002 = vmatprep.subr.mxu0 0.0
      %4003 = vmatpush1.xpose.msra.mxu0 0.0
      %4004 = vmatprep.subr.mxu0 0.0
      %4005 = vmatpush1.xpose.msra.mxu0 0.0
      %4006 = vmatprep.subr.mxu0 0.0
      %4007 = vmatpush1.xpose.msra.mxu0 0.0
      %4008 = vmatprep.subr.mxu0 0.0
      %4009 = vmatpush1.xpose.msra.mxu0 0.0
      %4010 = vmatprep.subr.mxu0 0.0
      %4011 = vmatpush1.xpose.msra.mxu0 0.0
      %4012 = vmatprep.subr.mxu0 0.0
      %4013 = vmatpush1.xpose.msra.mxu0 0.0
      %4014 = vmatprep.subr.mxu0 0.0
      %4015 = vmatpush1.xpose.msra.mxu0 0.0
      %4016 = vmatprep.subr.mxu0 0.0
      %4017 = vmatpush1.xpose.msra.mxu0 0.0
      %4018 = vmatprep.subr.mxu0 0.0
      %4019 = vmatpush1.xpose.msra.mxu0 0.0
      %4020 = vmatprep.subr.mxu0 0.0
      %4021 = vmatpush1.xpose.msra.mxu0 0.0
      %4022 = vmatprep.subr.mxu0 0.0
      %4023 = vmatpush1.xpose.msra.mxu0 0.0
      %4024 = vmatprep.subr.mxu0 0.0
      %4025 = vmatpush1.xpose.msra.mxu0 0.0
      %4026 = vmatprep.subr.mxu0 0.0
      %4027 = vmatpush1.xpose.msra.mxu0 0.0
      %4028 = vmatprep.subr.mxu0 0.0
      %4029 = vmatpush1.xpose.msra.mxu0 0.0
      %4030 = vmatprep.subr.mxu0 %v3479
      %4031 = vmatpush1.xpose.msra.mxu0 %v3478
      %4032 = vmatprep.subr.mxu0 %v3463
      %4033 = vmatpush1.xpose.msra.mxu0 %v3456
      %4034 = vmatprep.subr.mxu0 0.0
      %4035 = vmatpush2.xpose.msra.mxu0 0.0
      %4036 = vmatprep.subr.mxu0 0.0
      %4037 = vmatpush2.xpose.msra.mxu0 0.0
      %4038 = vmatprep.subr.mxu0 0.0
      %4039 = vmatpush2.xpose.msra.mxu0 0.0
      %4040 = vmatprep.subr.mxu0 0.0
      %4041 = vmatpush2.xpose.msra.mxu0 0.0
      %4042 = vmatprep.subr.mxu0 0.0
      %4043 = vmatpush2.xpose.msra.mxu0 0.0
      %4044 = vmatprep.subr.mxu0 0.0
      %4045 = vmatpush2.xpose.msra.mxu0 0.0
      %4046 = vmatprep.subr.mxu0 0.0
      %4047 = vmatpush2.xpose.msra.mxu0 0.0
      %4048 = vmatprep.subr.mxu0 0.0
      %4049 = vmatpush2.xpose.msra.mxu0 0.0
      %4050 = vmatprep.subr.mxu0 0.0
      %4051 = vmatpush2.xpose.msra.mxu0 0.0
      %4052 = vmatprep.subr.mxu0 0.0
      %4053 = vmatpush2.xpose.msra.mxu0 0.0
      %4054 = vmatprep.subr.mxu0 0.0
      %4055 = vmatpush2.xpose.msra.mxu0 0.0
      %4056 = vmatprep.subr.mxu0 0.0
      %4057 = vmatpush2.xpose.msra.mxu0 0.0
      %4058 = vmatprep.subr.mxu0 0.0
      %4059 = vmatpush2.xpose.msra.mxu0 0.0
      %4060 = vmatprep.subr.mxu0 0.0
      %4061 = vmatpush2.xpose.msra.mxu0 0.0
      %4062 = vmatprep.subr.mxu0 0.0
      %4063 = vmatpush2.xpose.msra.mxu0 0.0
      %4064 = vmatprep.subr.mxu0 0.0
      %4065 = vmatpush2.xpose.msra.mxu0 0.0
      %4066 = vmatprep.mubr.f32.mxu0 1.0
      %4067 = vmatmul.mubr.f32.gmra.mxu0 1.0
      %v4068 = vpop.f32.mrf.mxu0
      %v4069 = vadd.f32 %v3999, %v4068
      %v4070 = vpop.f32.mrf.mxu0
      %4071 = vdwg.mxu0
      %v4072 = vpack.c.bf16 %v1136, %v1136
      %v4073 = vpack.c.bf16 %v1137, %v1137
      %v4074 = vpack.c.bf16 %v1138, %v1138
      %v4075 = vpack.c.bf16 %v1139, %v1139
      %v4076 = vpack.c.bf16 %v1140, %v1140
      %v4077 = vpack.c.bf16 %v1141, %v1141
      %v4078 = vpack.c.bf16 %v1142, %v1142
      %v4079 = vpack.c.bf16 %v1143, %v1143
      %v4080 = vpack.c.bf16 %v1144, %v1144
      %v4081 = vpack.c.bf16 %v1145, %v1145
      %v4082 = vpack.c.bf16 %v1146, %v1146
      %v4083 = vpack.c.bf16 %v1147, %v1147
      %v4084 = vpack.c.bf16 %v1148, %v1148
      %v4085 = vpack.c.bf16 %v1149, %v1149
      %v4086 = vpack.c.bf16 %v1150, %v1150
      %v4087 = vpack.c.bf16 %v1151, %v1151
      %v4088 = vpack.c.bf16 %v1152, %v1152
      %v4089 = vpack.c.bf16 %v1153, %v1153
      %v4090 = vpack.c.bf16 %v1154, %v1154
      %v4091 = vpack.c.bf16 %v1155, %v1155
      %v4092 = vpack.c.bf16 %v1156, %v1156
      %v4093 = vpack.c.bf16 %v1157, %v1157
      %v4094 = vpack.c.bf16 %v1158, %v1158
      %v4095 = vpack.c.bf16 %v1159, %v1159
      %v4096 = vpack.c.bf16 %v1160, %v1160
      %v4097 = vpack.c.bf16 %v1161, %v1161
      %v4098 = vpack.c.bf16 %v1162, %v1162
      %v4099 = vpack.c.bf16 %v1163, %v1163
      %v4100 = vpack.c.bf16 %v1164, %v1164
      %v4101 = vpack.c.bf16 %v1165, %v1165
      %v4102 = vpack.c.bf16 %v1166, %v1166
      %v4103 = vpack.c.bf16 %v1167, %v1167
      %v4104 = vpack.c.bf16 %v1168, %v1168
      %v4105 = vpack.c.bf16 %v1169, %v1169
      %v4106 = vpack.c.bf16 %v1170, %v1170
      %v4107 = vpack.c.bf16 %v1171, %v1171
      %v4108 = vpack.c.bf16 %v1172, %v1172
      %v4109 = vpack.c.bf16 %v1173, %v1173
      %v4110 = vpack.c.bf16 %v1174, %v1174
      %v4111 = vpack.c.bf16 %v1175, %v1175
      %v4112 = vpack.c.bf16 %v1176, %v1176
      %v4113 = vpack.c.bf16 %v1177, %v1177
      %v4114 = vpack.c.bf16 %v1178, %v1178
      %v4115 = vpack.c.bf16 %v1179, %v1179
      %v4116 = vpack.c.bf16 %v1180, %v1180
      %v4117 = vpack.c.bf16 %v1181, %v1181
      %v4118 = vpack.c.bf16 %v1182, %v1182
      %v4119 = vpack.c.bf16 %v1183, %v1183
      %v4120 = vpack.c.bf16 %v1184, %v1184
      %v4121 = vpack.c.bf16 %v1185, %v1185
      %v4122 = vpack.c.bf16 %v1186, %v1186
      %v4123 = vpack.c.bf16 %v1187, %v1187
      %v4124 = vpack.c.bf16 %v1188, %v1188
      %v4125 = vpack.c.bf16 %v1189, %v1189
      %v4126 = vpack.c.bf16 %v1190, %v1190
      %v4127 = vpack.c.bf16 %v1191, %v1191
      %v4128 = vpack.c.bf16 %v1192, %v1192
      %v4129 = vpack.c.bf16 %v1193, %v1193
      %v4130 = vpack.c.bf16 %v1194, %v1194
      %v4131 = vpack.c.bf16 %v1195, %v1195
      %v4132 = vpack.c.bf16 %v1196, %v1196
      %v4133 = vpack.c.bf16 %v1197, %v1197
      %v4134 = vpack.c.bf16 %v1198, %v1198
      %v4135 = vpack.c.bf16 %v1199, %v1199
      %v4136 = vpack.c.bf16 %v1200, %v1200
      %v4137 = vpack.c.bf16 %v1201, %v1201
      %v4138 = vpack.c.bf16 %v1202, %v1202
      %v4139 = vpack.c.bf16 %v1203, %v1203
      %v4140 = vpack.c.bf16 %v1204, %v1204
      %v4141 = vpack.c.bf16 %v1205, %v1205
      %v4142 = vpack.c.bf16 %v1206, %v1206
      %v4143 = vpack.c.bf16 %v1207, %v1207
      %v4144 = vpack.c.bf16 %v1208, %v1208
      %v4145 = vpack.c.bf16 %v1209, %v1209
      %v4146 = vpack.c.bf16 %v1210, %v1210
      %v4147 = vpack.c.bf16 %v1211, %v1211
      %v4148 = vpack.c.bf16 %v1212, %v1212
      %v4149 = vpack.c.bf16 %v1213, %v1213
      %v4150 = vpack.c.bf16 %v1214, %v1214
      %v4151 = vpack.c.bf16 %v1215, %v1215
      %v4152 = vpack.c.bf16 %v1216, %v1216
      %v4153 = vpack.c.bf16 %v1217, %v1217
      %v4154 = vpack.c.bf16 %v1218, %v1218
      %v4155 = vpack.c.bf16 %v1219, %v1219
      %v4156 = vpack.c.bf16 %v1220, %v1220
      %v4157 = vpack.c.bf16 %v1221, %v1221
      %v4158 = vpack.c.bf16 %v1222, %v1222
      %v4159 = vpack.c.bf16 %v1223, %v1223
      %v4160 = vpack.c.bf16 %v1224, %v1224
      %v4161 = vpack.c.bf16 %v1225, %v1225
      %v4162 = vpack.c.bf16 %v1226, %v1226
      %v4163 = vpack.c.bf16 %v1227, %v1227
      %v4164 = vpack.c.bf16 %v1228, %v1228
      %v4165 = vpack.c.bf16 %v1229, %v1229
      %v4166 = vpack.c.bf16 %v1230, %v1230
      %v4167 = vpack.c.bf16 %v1231, %v1231
      %v4168 = vpack.c.bf16 %v1232, %v1232
      %v4169 = vpack.c.bf16 %v1233, %v1233
      %v4170 = vpack.c.bf16 %v1234, %v1234
      %v4171 = vpack.c.bf16 %v1235, %v1235
      %v4172 = vpack.c.bf16 %v1236, %v1236
      %v4173 = vpack.c.bf16 %v1237, %v1237
      %v4174 = vpack.c.bf16 %v1238, %v1238
      %v4175 = vpack.c.bf16 %v1239, %v1239
      %v4176 = vpack.c.bf16 %v1240, %v1240
      %v4177 = vpack.c.bf16 %v1241, %v1241
      %v4178 = vpack.c.bf16 %v1242, %v1242
      %v4179 = vpack.c.bf16 %v1243, %v1243
      %v4180 = vpack.c.bf16 %v1244, %v1244
      %v4181 = vpack.c.bf16 %v1245, %v1245
      %v4182 = vpack.c.bf16 %v1246, %v1246
      %v4183 = vpack.c.bf16 %v1247, %v1247
      %v4184 = vpack.c.bf16 %v1248, %v1248
      %v4185 = vpack.c.bf16 %v1249, %v1249
      %v4186 = vpack.c.bf16 %v1250, %v1250
      %v4187 = vpack.c.bf16 %v1251, %v1251
      %v4188 = vpack.c.bf16 %v1252, %v1252
      %v4189 = vpack.c.bf16 %v1253, %v1253
      %v4190 = vpack.c.bf16 %v1254, %v1254
      %v4191 = vpack.c.bf16 %v1255, %v1255
      %v4192 = vpack.c.bf16 %v1256, %v1256
      %v4193 = vpack.c.bf16 %v1257, %v1257
      %v4194 = vpack.c.bf16 %v1258, %v1258
      %v4195 = vpack.c.bf16 %v1259, %v1259
      %v4196 = vpack.c.bf16 %v1260, %v1260
      %v4197 = vpack.c.bf16 %v1261, %v1261
      %v4198 = vpack.c.bf16 %v1262, %v1262
      %v4199 = vpack.c.bf16 %v1263, %v1263
      %v4200 = vpack.c.bf16 %v2464, %v2464
      %v4201 = vpack.c.bf16 %v2465, %v2465
      %v4202 = vpack.c.bf16 %v2466, %v2466
      %v4203 = vpack.c.bf16 %v2467, %v2467
      %v4204 = vpack.c.bf16 %v2468, %v2468
      %v4205 = vpack.c.bf16 %v2469, %v2469
      %v4206 = vpack.c.bf16 %v2470, %v2470
      %v4207 = vpack.c.bf16 %v2471, %v2471
      %v4208 = vpack.c.bf16 %v2472, %v2472
      %v4209 = vpack.c.bf16 %v2473, %v2473
      %v4210 = vpack.c.bf16 %v2474, %v2474
      %v4211 = vpack.c.bf16 %v2475, %v2475
      %v4212 = vpack.c.bf16 %v2476, %v2476
      %v4213 = vpack.c.bf16 %v2477, %v2477
      %v4214 = vpack.c.bf16 %v2478, %v2478
      %v4215 = vpack.c.bf16 %v2479, %v2479
      %v4216 = vpack.c.bf16 %v2480, %v2480
      %v4217 = vpack.c.bf16 %v2481, %v2481
      %v4218 = vpack.c.bf16 %v2482, %v2482
      %v4219 = vpack.c.bf16 %v2483, %v2483
      %v4220 = vpack.c.bf16 %v2484, %v2484
      %v4221 = vpack.c.bf16 %v2485, %v2485
      %v4222 = vpack.c.bf16 %v2486, %v2486
      %v4223 = vpack.c.bf16 %v2487, %v2487
      %v4224 = vpack.c.bf16 %v2488, %v2488
      %v4225 = vpack.c.bf16 %v2489, %v2489
      %v4226 = vpack.c.bf16 %v2490, %v2490
      %v4227 = vpack.c.bf16 %v2491, %v2491
      %v4228 = vpack.c.bf16 %v2492, %v2492
      %v4229 = vpack.c.bf16 %v2493, %v2493
      %v4230 = vpack.c.bf16 %v2494, %v2494
      %v4231 = vpack.c.bf16 %v2495, %v2495
      %v4232 = vpack.c.bf16 %v2496, %v2496
      %v4233 = vpack.c.bf16 %v2497, %v2497
      %v4234 = vpack.c.bf16 %v2498, %v2498
      %v4235 = vpack.c.bf16 %v2499, %v2499
      %v4236 = vpack.c.bf16 %v2500, %v2500
      %v4237 = vpack.c.bf16 %v2501, %v2501
      %v4238 = vpack.c.bf16 %v2502, %v2502
      %v4239 = vpack.c.bf16 %v2503, %v2503
      %v4240 = vpack.c.bf16 %v2504, %v2504
      %v4241 = vpack.c.bf16 %v2505, %v2505
      %v4242 = vpack.c.bf16 %v2506, %v2506
      %v4243 = vpack.c.bf16 %v2507, %v2507
      %v4244 = vpack.c.bf16 %v2508, %v2508
      %v4245 = vpack.c.bf16 %v2509, %v2509
      %v4246 = vpack.c.bf16 %v2510, %v2510
      %v4247 = vpack.c.bf16 %v2511, %v2511
      %v4248 = vpack.c.bf16 %v2512, %v2512
      %v4249 = vpack.c.bf16 %v2513, %v2513
      %v4250 = vpack.c.bf16 %v2514, %v2514
      %v4251 = vpack.c.bf16 %v2515, %v2515
      %v4252 = vpack.c.bf16 %v2516, %v2516
      %v4253 = vpack.c.bf16 %v2517, %v2517
      %v4254 = vpack.c.bf16 %v2518, %v2518
      %v4255 = vpack.c.bf16 %v2519, %v2519
      %v4256 = vpack.c.bf16 %v2520, %v2520
      %v4257 = vpack.c.bf16 %v2521, %v2521
      %v4258 = vpack.c.bf16 %v2522, %v2522
      %v4259 = vpack.c.bf16 %v2523, %v2523
      %v4260 = vpack.c.bf16 %v2524, %v2524
      %v4261 = vpack.c.bf16 %v2525, %v2525
      %v4262 = vpack.c.bf16 %v2526, %v2526
      %v4263 = vpack.c.bf16 %v2527, %v2527
      %v4264 = vpack.c.bf16 %v2528, %v2528
      %v4265 = vpack.c.bf16 %v2529, %v2529
      %v4266 = vpack.c.bf16 %v2530, %v2530
      %v4267 = vpack.c.bf16 %v2531, %v2531
      %v4268 = vpack.c.bf16 %v2532, %v2532
      %v4269 = vpack.c.bf16 %v2533, %v2533
      %v4270 = vpack.c.bf16 %v2534, %v2534
      %v4271 = vpack.c.bf16 %v2535, %v2535
      %v4272 = vpack.c.bf16 %v2536, %v2536
      %v4273 = vpack.c.bf16 %v2537, %v2537
      %v4274 = vpack.c.bf16 %v2538, %v2538
      %v4275 = vpack.c.bf16 %v2539, %v2539
      %v4276 = vpack.c.bf16 %v2540, %v2540
      %v4277 = vpack.c.bf16 %v2541, %v2541
      %v4278 = vpack.c.bf16 %v2542, %v2542
      %v4279 = vpack.c.bf16 %v2543, %v2543
      %v4280 = vpack.c.bf16 %v2544, %v2544
      %v4281 = vpack.c.bf16 %v2545, %v2545
      %v4282 = vpack.c.bf16 %v2546, %v2546
      %v4283 = vpack.c.bf16 %v2547, %v2547
      %v4284 = vpack.c.bf16 %v2548, %v2548
      %v4285 = vpack.c.bf16 %v2549, %v2549
      %v4286 = vpack.c.bf16 %v2550, %v2550
      %v4287 = vpack.c.bf16 %v2551, %v2551
      %v4288 = vpack.c.bf16 %v2552, %v2552
      %v4289 = vpack.c.bf16 %v2553, %v2553
      %v4290 = vpack.c.bf16 %v2554, %v2554
      %v4291 = vpack.c.bf16 %v2555, %v2555
      %v4292 = vpack.c.bf16 %v2556, %v2556
      %v4293 = vpack.c.bf16 %v2557, %v2557
      %v4294 = vpack.c.bf16 %v2558, %v2558
      %v4295 = vpack.c.bf16 %v2559, %v2559
      %v4296 = vpack.c.bf16 %v2560, %v2560
      %v4297 = vpack.c.bf16 %v2561, %v2561
      %v4298 = vpack.c.bf16 %v2562, %v2562
      %v4299 = vpack.c.bf16 %v2563, %v2563
      %v4300 = vpack.c.bf16 %v2564, %v2564
      %v4301 = vpack.c.bf16 %v2565, %v2565
      %v4302 = vpack.c.bf16 %v2566, %v2566
      %v4303 = vpack.c.bf16 %v2567, %v2567
      %v4304 = vpack.c.bf16 %v2568, %v2568
      %v4305 = vpack.c.bf16 %v2569, %v2569
      %v4306 = vpack.c.bf16 %v2570, %v2570
      %v4307 = vpack.c.bf16 %v2571, %v2571
      %v4308 = vpack.c.bf16 %v2572, %v2572
      %v4309 = vpack.c.bf16 %v2573, %v2573
      %v4310 = vpack.c.bf16 %v2574, %v2574
      %v4311 = vpack.c.bf16 %v2575, %v2575
      %v4312 = vpack.c.bf16 %v2576, %v2576
      %v4313 = vpack.c.bf16 %v2577, %v2577
      %v4314 = vpack.c.bf16 %v2578, %v2578
      %v4315 = vpack.c.bf16 %v2579, %v2579
      %v4316 = vpack.c.bf16 %v2580, %v2580
      %v4317 = vpack.c.bf16 %v2581, %v2581
      %v4318 = vpack.c.bf16 %v2582, %v2582
      %v4319 = vpack.c.bf16 %v2583, %v2583
      %v4320 = vpack.c.bf16 %v2584, %v2584
      %v4321 = vpack.c.bf16 %v2585, %v2585
      %v4322 = vpack.c.bf16 %v2586, %v2586
      %v4323 = vpack.c.bf16 %v2587, %v2587
      %v4324 = vpack.c.bf16 %v2588, %v2588
      %v4325 = vpack.c.bf16 %v2589, %v2589
      %v4326 = vpack.c.bf16 %v2590, %v2590
      %v4327 = vpack.c.bf16 %v2591, %v2591
      %v4328 = vpack.c.bf16 %v2592, %v2592
      %v4329 = vpack.c.bf16 %v2593, %v2593
      %v4330 = vpack.c.bf16 %v2594, %v2594
      %v4331 = vpack.c.bf16 %v2595, %v2595
      %v4332 = vpack.c.bf16 %v2596, %v2596
      %v4333 = vpack.c.bf16 %v2597, %v2597
      %v4334 = vpack.c.bf16 %v2598, %v2598
      %v4335 = vpack.c.bf16 %v2599, %v2599
      %v4336 = vpack.c.bf16 %v2600, %v2600
      %v4337 = vpack.c.bf16 %v2601, %v2601
      %v4338 = vpack.c.bf16 %v2602, %v2602
      %v4339 = vpack.c.bf16 %v2603, %v2603
      %v4340 = vpack.c.bf16 %v2604, %v2604
      %v4341 = vpack.c.bf16 %v2605, %v2605
      %v4342 = vpack.c.bf16 %v2606, %v2606
      %v4343 = vpack.c.bf16 %v2607, %v2607
      %v4344 = vpack.c.bf16 %v2608, %v2608
      %v4345 = vpack.c.bf16 %v2609, %v2609
      %v4346 = vpack.c.bf16 %v2610, %v2610
      %v4347 = vpack.c.bf16 %v2611, %v2611
      %v4348 = vpack.c.bf16 %v2612, %v2612
      %v4349 = vpack.c.bf16 %v2613, %v2613
      %v4350 = vpack.c.bf16 %v2614, %v2614
      %v4351 = vpack.c.bf16 %v2615, %v2615
      %v4352 = vpack.c.bf16 %v2616, %v2616
      %v4353 = vpack.c.bf16 %v2617, %v2617
      %v4354 = vpack.c.bf16 %v2618, %v2618
      %v4355 = vpack.c.bf16 %v2619, %v2619
      %v4356 = vpack.c.bf16 %v2620, %v2620
      %v4357 = vpack.c.bf16 %v2621, %v2621
      %v4358 = vpack.c.bf16 %v2622, %v2622
      %v4359 = vpack.c.bf16 %v2623, %v2623
      %v4488 = vunpack.c.l.b16 %v4072
      %v4489 = vunpack.c.l.b16 %v4073
      %v4490 = vunpack.c.l.b16 %v4074
      %v4491 = vunpack.c.l.b16 %v4075
      %v4492 = vunpack.c.l.b16 %v4076
      %v4493 = vunpack.c.l.b16 %v4077
      %v4494 = vunpack.c.l.b16 %v4078
      %v4495 = vunpack.c.l.b16 %v4079
      %v4496 = vunpack.c.l.b16 %v4080
      %v4497 = vunpack.c.l.b16 %v4081
      %v4498 = vunpack.c.l.b16 %v4082
      %v4499 = vunpack.c.l.b16 %v4083
      %v4500 = vunpack.c.l.b16 %v4084
      %v4501 = vunpack.c.l.b16 %v4085
      %v4502 = vunpack.c.l.b16 %v4086
      %v4503 = vunpack.c.l.b16 %v4087
      %v4504 = vunpack.c.l.b16 %v4088
      %v4505 = vunpack.c.l.b16 %v4089
      %v4506 = vunpack.c.l.b16 %v4090
      %v4507 = vunpack.c.l.b16 %v4091
      %v4508 = vunpack.c.l.b16 %v4092
      %v4509 = vunpack.c.l.b16 %v4093
      %v4510 = vunpack.c.l.b16 %v4094
      %v4511 = vunpack.c.l.b16 %v4095
      %v4512 = vunpack.c.l.b16 %v4096
      %v4513 = vunpack.c.l.b16 %v4097
      %v4514 = vunpack.c.l.b16 %v4098
      %v4515 = vunpack.c.l.b16 %v4099
      %v4516 = vunpack.c.l.b16 %v4100
      %v4517 = vunpack.c.l.b16 %v4101
      %v4518 = vunpack.c.l.b16 %v4102
      %v4519 = vunpack.c.l.b16 %v4103
      %v4520 = vunpack.c.l.b16 %v4104
      %v4521 = vunpack.c.l.b16 %v4105
      %v4522 = vunpack.c.l.b16 %v4106
      %v4523 = vunpack.c.l.b16 %v4107
      %v4524 = vunpack.c.l.b16 %v4108
      %v4525 = vunpack.c.l.b16 %v4109
      %v4526 = vunpack.c.l.b16 %v4110
      %v4527 = vunpack.c.l.b16 %v4111
      %v4528 = vunpack.c.l.b16 %v4112
      %v4529 = vunpack.c.l.b16 %v4113
      %v4530 = vunpack.c.l.b16 %v4114
      %v4531 = vunpack.c.l.b16 %v4115
      %v4532 = vunpack.c.l.b16 %v4116
      %v4533 = vunpack.c.l.b16 %v4117
      %v4534 = vunpack.c.l.b16 %v4118
      %v4535 = vunpack.c.l.b16 %v4119
      %v4536 = vunpack.c.l.b16 %v4120
      %v4537 = vunpack.c.l.b16 %v4121
      %v4538 = vunpack.c.l.b16 %v4122
      %v4539 = vunpack.c.l.b16 %v4123
      %v4540 = vunpack.c.l.b16 %v4124
      %v4541 = vunpack.c.l.b16 %v4125
      %v4542 = vunpack.c.l.b16 %v4126
      %v4543 = vunpack.c.l.b16 %v4127
      %v4544 = vunpack.c.l.b16 %v4128
      %v4545 = vunpack.c.l.b16 %v4129
      %v4546 = vunpack.c.l.b16 %v4130
      %v4547 = vunpack.c.l.b16 %v4131
      %v4548 = vunpack.c.l.b16 %v4132
      %v4549 = vunpack.c.l.b16 %v4133
      %v4550 = vunpack.c.l.b16 %v4134
      %v4551 = vunpack.c.l.b16 %v4135
      %v4552 = vunpack.c.l.b16 %v4136
      %v4553 = vunpack.c.l.b16 %v4137
      %v4554 = vunpack.c.l.b16 %v4138
      %v4555 = vunpack.c.l.b16 %v4139
      %v4556 = vunpack.c.l.b16 %v4140
      %v4557 = vunpack.c.l.b16 %v4141
      %v4558 = vunpack.c.l.b16 %v4142
      %v4559 = vunpack.c.l.b16 %v4143
      %v4560 = vunpack.c.l.b16 %v4144
      %v4561 = vunpack.c.l.b16 %v4145
      %v4562 = vunpack.c.l.b16 %v4146
      %v4563 = vunpack.c.l.b16 %v4147
      %v4564 = vunpack.c.l.b16 %v4148
      %v4565 = vunpack.c.l.b16 %v4149
      %v4566 = vunpack.c.l.b16 %v4150
      %v4567 = vunpack.c.l.b16 %v4151
      %v4568 = vunpack.c.l.b16 %v4152
      %v4569 = vunpack.c.l.b16 %v4153
      %v4570 = vunpack.c.l.b16 %v4154
      %v4571 = vunpack.c.l.b16 %v4155
      %v4572 = vunpack.c.l.b16 %v4156
      %v4573 = vunpack.c.l.b16 %v4157
      %v4574 = vunpack.c.l.b16 %v4158
      %v4575 = vunpack.c.l.b16 %v4159
      %v4576 = vunpack.c.l.b16 %v4160
      %v4577 = vunpack.c.l.b16 %v4161
      %v4578 = vunpack.c.l.b16 %v4162
      %v4579 = vunpack.c.l.b16 %v4163
      %v4580 = vunpack.c.l.b16 %v4164
      %v4581 = vunpack.c.l.b16 %v4165
      %v4582 = vunpack.c.l.b16 %v4166
      %v4583 = vunpack.c.l.b16 %v4167
      %v4584 = vunpack.c.l.b16 %v4168
      %v4585 = vunpack.c.l.b16 %v4169
      %v4586 = vunpack.c.l.b16 %v4170
      %v4587 = vunpack.c.l.b16 %v4171
      %v4588 = vunpack.c.l.b16 %v4172
      %v4589 = vunpack.c.l.b16 %v4173
      %v4590 = vunpack.c.l.b16 %v4174
      %v4591 = vunpack.c.l.b16 %v4175
      %v4592 = vunpack.c.l.b16 %v4176
      %v4593 = vunpack.c.l.b16 %v4177
      %v4594 = vunpack.c.l.b16 %v4178
      %v4595 = vunpack.c.l.b16 %v4179
      %v4596 = vunpack.c.l.b16 %v4180
      %v4597 = vunpack.c.l.b16 %v4181
      %v4598 = vunpack.c.l.b16 %v4182
      %v4599 = vunpack.c.l.b16 %v4183
      %v4600 = vunpack.c.l.b16 %v4184
      %v4601 = vunpack.c.l.b16 %v4185
      %v4602 = vunpack.c.l.b16 %v4186
      %v4603 = vunpack.c.l.b16 %v4187
      %v4604 = vunpack.c.l.b16 %v4188
      %v4605 = vunpack.c.l.b16 %v4189
      %v4606 = vunpack.c.l.b16 %v4190
      %v4607 = vunpack.c.l.b16 %v4191
      %v4608 = vunpack.c.l.b16 %v4192
      %v4609 = vunpack.c.l.b16 %v4193
      %v4610 = vunpack.c.l.b16 %v4194
      %v4611 = vunpack.c.l.b16 %v4195
      %v4612 = vunpack.c.l.b16 %v4196
      %v4613 = vunpack.c.l.b16 %v4197
      %v4614 = vunpack.c.l.b16 %v4198
      %v4615 = vunpack.c.l.b16 %v4199
      %v4616 = vsel %vm2880, %v4504, %v4488
      %v4617 = vsel %vm2882, %v4520, %v4616
      %v4618 = vsel %vm2884, %v4536, %v4617
      %v4619 = vsel %vm2886, %v4552, %v4618
      %v4620 = vsel %vm2888, %v4568, %v4619
      %v4621 = vsel %vm2890, %v4584, %v4620
      %v4622 = vsel %vm2892, %v4600, %v4621
      %v4623 = vsel %vm2880, %v4505, %v4489
      %v4624 = vsel %vm2882, %v4521, %v4623
      %v4625 = vsel %vm2884, %v4537, %v4624
      %v4626 = vsel %vm2886, %v4553, %v4625
      %v4627 = vsel %vm2888, %v4569, %v4626
      %v4628 = vsel %vm2890, %v4585, %v4627
      %v4629 = vsel %vm2892, %v4601, %v4628
      %v4630 = vsel %vm2880, %v4506, %v4490
      %v4631 = vsel %vm2882, %v4522, %v4630
      %v4632 = vsel %vm2884, %v4538, %v4631
      %v4633 = vsel %vm2886, %v4554, %v4632
      %v4634 = vsel %vm2888, %v4570, %v4633
      %v4635 = vsel %vm2890, %v4586, %v4634
      %v4636 = vsel %vm2892, %v4602, %v4635
      %v4637 = vsel %vm2880, %v4507, %v4491
      %v4638 = vsel %vm2882, %v4523, %v4637
      %v4639 = vsel %vm2884, %v4539, %v4638
      %v4640 = vsel %vm2886, %v4555, %v4639
      %v4641 = vsel %vm2888, %v4571, %v4640
      %v4642 = vsel %vm2890, %v4587, %v4641
      %v4643 = vsel %vm2892, %v4603, %v4642
      %v4644 = vsel %vm2880, %v4508, %v4492
      %v4645 = vsel %vm2882, %v4524, %v4644
      %v4646 = vsel %vm2884, %v4540, %v4645
      %v4647 = vsel %vm2886, %v4556, %v4646
      %v4648 = vsel %vm2888, %v4572, %v4647
      %v4649 = vsel %vm2890, %v4588, %v4648
      %v4650 = vsel %vm2892, %v4604, %v4649
      %v4651 = vsel %vm2880, %v4509, %v4493
      %v4652 = vsel %vm2882, %v4525, %v4651
      %v4653 = vsel %vm2884, %v4541, %v4652
      %v4654 = vsel %vm2886, %v4557, %v4653
      %v4655 = vsel %vm2888, %v4573, %v4654
      %v4656 = vsel %vm2890, %v4589, %v4655
      %v4657 = vsel %vm2892, %v4605, %v4656
      %v4658 = vsel %vm2880, %v4510, %v4494
      %v4659 = vsel %vm2882, %v4526, %v4658
      %v4660 = vsel %vm2884, %v4542, %v4659
      %v4661 = vsel %vm2886, %v4558, %v4660
      %v4662 = vsel %vm2888, %v4574, %v4661
      %v4663 = vsel %vm2890, %v4590, %v4662
      %v4664 = vsel %vm2892, %v4606, %v4663
      %v4665 = vsel %vm2880, %v4511, %v4495
      %v4666 = vsel %vm2882, %v4527, %v4665
      %v4667 = vsel %vm2884, %v4543, %v4666
      %v4668 = vsel %vm2886, %v4559, %v4667
      %v4669 = vsel %vm2888, %v4575, %v4668
      %v4670 = vsel %vm2890, %v4591, %v4669
      %v4671 = vsel %vm2892, %v4607, %v4670
      %v4672 = vsel %vm2880, %v4512, %v4496
      %v4673 = vsel %vm2882, %v4528, %v4672
      %v4674 = vsel %vm2884, %v4544, %v4673
      %v4675 = vsel %vm2886, %v4560, %v4674
      %v4676 = vsel %vm2888, %v4576, %v4675
      %v4677 = vsel %vm2890, %v4592, %v4676
      %v4678 = vsel %vm2892, %v4608, %v4677
      %v4679 = vsel %vm2880, %v4513, %v4497
      %v4680 = vsel %vm2882, %v4529, %v4679
      %v4681 = vsel %vm2884, %v4545, %v4680
      %v4682 = vsel %vm2886, %v4561, %v4681
      %v4683 = vsel %vm2888, %v4577, %v4682
      %v4684 = vsel %vm2890, %v4593, %v4683
      %v4685 = vsel %vm2892, %v4609, %v4684
      %v4686 = vsel %vm2880, %v4514, %v4498
      %v4687 = vsel %vm2882, %v4530, %v4686
      %v4688 = vsel %vm2884, %v4546, %v4687
      %v4689 = vsel %vm2886, %v4562, %v4688
      %v4690 = vsel %vm2888, %v4578, %v4689
      %v4691 = vsel %vm2890, %v4594, %v4690
      %v4692 = vsel %vm2892, %v4610, %v4691
      %v4693 = vsel %vm2880, %v4515, %v4499
      %v4694 = vsel %vm2882, %v4531, %v4693
      %v4695 = vsel %vm2884, %v4547, %v4694
      %v4696 = vsel %vm2886, %v4563, %v4695
      %v4697 = vsel %vm2888, %v4579, %v4696
      %v4698 = vsel %vm2890, %v4595, %v4697
      %v4699 = vsel %vm2892, %v4611, %v4698
      %v4700 = vsel %vm2880, %v4516, %v4500
      %v4701 = vsel %vm2882, %v4532, %v4700
      %v4702 = vsel %vm2884, %v4548, %v4701
      %v4703 = vsel %vm2886, %v4564, %v4702
      %v4704 = vsel %vm2888, %v4580, %v4703
      %v4705 = vsel %vm2890, %v4596, %v4704
      %v4706 = vsel %vm2892, %v4612, %v4705
      %v4707 = vsel %vm2880, %v4517, %v4501
      %v4708 = vsel %vm2882, %v4533, %v4707
      %v4709 = vsel %vm2884, %v4549, %v4708
      %v4710 = vsel %vm2886, %v4565, %v4709
      %v4711 = vsel %vm2888, %v4581, %v4710
      %v4712 = vsel %vm2890, %v4597, %v4711
      %v4713 = vsel %vm2892, %v4613, %v4712
      %v4714 = vsel %vm2880, %v4518, %v4502
      %v4715 = vsel %vm2882, %v4534, %v4714
      %v4716 = vsel %vm2884, %v4550, %v4715
      %v4717 = vsel %vm2886, %v4566, %v4716
      %v4718 = vsel %vm2888, %v4582, %v4717
      %v4719 = vsel %vm2890, %v4598, %v4718
      %v4720 = vsel %vm2892, %v4614, %v4719
      %v4721 = vsel %vm2880, %v4519, %v4503
      %v4722 = vsel %vm2882, %v4535, %v4721
      %v4723 = vsel %vm2884, %v4551, %v4722
      %v4724 = vsel %vm2886, %v4567, %v4723
      %v4725 = vsel %vm2888, %v4583, %v4724
      %v4726 = vsel %vm2890, %v4599, %v4725
      %v4727 = vsel %vm2892, %v4615, %v4726
      %v4728 = vpack.c.b16 %v4622, %v4622
      %v4729 = vpack.c.b16 %v4629, %v4629
      %v4730 = vpack.c.b16 %v4636, %v4636
      %v4731 = vpack.c.b16 %v4643, %v4643
      %v4732 = vpack.c.b16 %v4650, %v4650
      %v4733 = vpack.c.b16 %v4657, %v4657
      %v4734 = vpack.c.b16 %v4664, %v4664
      %v4735 = vpack.c.b16 %v4671, %v4671
      %v4736 = vpack.c.b16 %v4678, %v4678
      %v4737 = vpack.c.b16 %v4685, %v4685
      %v4738 = vpack.c.b16 %v4692, %v4692
      %v4739 = vpack.c.b16 %v4699, %v4699
      %v4740 = vpack.c.b16 %v4706, %v4706
      %v4741 = vpack.c.b16 %v4713, %v4713
      %v4742 = vpack.c.b16 %v4720, %v4720
      %v4743 = vpack.c.b16 %v4727, %v4727
      %v4920 = vunpack.c.l.b16 %v4200
      %v4921 = vunpack.c.l.b16 %v4201
      %v4922 = vunpack.c.l.b16 %v4202
      %v4923 = vunpack.c.l.b16 %v4203
      %v4924 = vunpack.c.l.b16 %v4204
      %v4925 = vunpack.c.l.b16 %v4205
      %v4926 = vunpack.c.l.b16 %v4206
      %v4927 = vunpack.c.l.b16 %v4207
      %v4928 = vunpack.c.l.b16 %v4208
      %v4929 = vunpack.c.l.b16 %v4209
      %v4930 = vunpack.c.l.b16 %v4210
      %v4931 = vunpack.c.l.b16 %v4211
      %v4932 = vunpack.c.l.b16 %v4212
      %v4933 = vunpack.c.l.b16 %v4213
      %v4934 = vunpack.c.l.b16 %v4214
      %v4935 = vunpack.c.l.b16 %v4215
      %v4936 = vunpack.c.l.b16 %v4216
      %v4937 = vunpack.c.l.b16 %v4217
      %v4938 = vunpack.c.l.b16 %v4218
      %v4939 = vunpack.c.l.b16 %v4219
      %v4940 = vunpack.c.l.b16 %v4220
      %v4941 = vunpack.c.l.b16 %v4221
      %v4942 = vunpack.c.l.b16 %v4222
      %v4943 = vunpack.c.l.b16 %v4223
      %v4944 = vunpack.c.l.b16 %v4224
      %v4945 = vunpack.c.l.b16 %v4225
      %v4946 = vunpack.c.l.b16 %v4226
      %v4947 = vunpack.c.l.b16 %v4227
      %v4948 = vunpack.c.l.b16 %v4228
      %v4949 = vunpack.c.l.b16 %v4229
      %v4950 = vunpack.c.l.b16 %v4230
      %v4951 = vunpack.c.l.b16 %v4231
      %v4952 = vunpack.c.l.b16 %v4232
      %v4953 = vunpack.c.l.b16 %v4233
      %v4954 = vunpack.c.l.b16 %v4234
      %v4955 = vunpack.c.l.b16 %v4235
      %v4956 = vunpack.c.l.b16 %v4236
      %v4957 = vunpack.c.l.b16 %v4237
      %v4958 = vunpack.c.l.b16 %v4238
      %v4959 = vunpack.c.l.b16 %v4239
      %v4960 = vunpack.c.l.b16 %v4240
      %v4961 = vunpack.c.l.b16 %v4241
      %v4962 = vunpack.c.l.b16 %v4242
      %v4963 = vunpack.c.l.b16 %v4243
      %v4964 = vunpack.c.l.b16 %v4244
      %v4965 = vunpack.c.l.b16 %v4245
      %v4966 = vunpack.c.l.b16 %v4246
      %v4967 = vunpack.c.l.b16 %v4247
      %v4968 = vunpack.c.l.b16 %v4248
      %v4969 = vunpack.c.l.b16 %v4249
      %v4970 = vunpack.c.l.b16 %v4250
      %v4971 = vunpack.c.l.b16 %v4251
      %v4972 = vunpack.c.l.b16 %v4252
      %v4973 = vunpack.c.l.b16 %v4253
      %v4974 = vunpack.c.l.b16 %v4254
      %v4975 = vunpack.c.l.b16 %v4255
      %v4976 = vunpack.c.l.b16 %v4256
      %v4977 = vunpack.c.l.b16 %v4257
      %v4978 = vunpack.c.l.b16 %v4258
      %v4979 = vunpack.c.l.b16 %v4259
      %v4980 = vunpack.c.l.b16 %v4260
      %v4981 = vunpack.c.l.b16 %v4261
      %v4982 = vunpack.c.l.b16 %v4262
      %v4983 = vunpack.c.l.b16 %v4263
      %v4984 = vunpack.c.l.b16 %v4264
      %v4985 = vunpack.c.l.b16 %v4265
      %v4986 = vunpack.c.l.b16 %v4266
      %v4987 = vunpack.c.l.b16 %v4267
      %v4988 = vunpack.c.l.b16 %v4268
      %v4989 = vunpack.c.l.b16 %v4269
      %v4990 = vunpack.c.l.b16 %v4270
      %v4991 = vunpack.c.l.b16 %v4271
      %v4992 = vunpack.c.l.b16 %v4272
      %v4993 = vunpack.c.l.b16 %v4273
      %v4994 = vunpack.c.l.b16 %v4274
      %v4995 = vunpack.c.l.b16 %v4275
      %v4996 = vunpack.c.l.b16 %v4276
      %v4997 = vunpack.c.l.b16 %v4277
      %v4998 = vunpack.c.l.b16 %v4278
      %v4999 = vunpack.c.l.b16 %v4279
      %v5000 = vunpack.c.l.b16 %v4280
      %v5001 = vunpack.c.l.b16 %v4281
      %v5002 = vunpack.c.l.b16 %v4282
      %v5003 = vunpack.c.l.b16 %v4283
      %v5004 = vunpack.c.l.b16 %v4284
      %v5005 = vunpack.c.l.b16 %v4285
      %v5006 = vunpack.c.l.b16 %v4286
      %v5007 = vunpack.c.l.b16 %v4287
      %v5008 = vunpack.c.l.b16 %v4288
      %v5009 = vunpack.c.l.b16 %v4289
      %v5010 = vunpack.c.l.b16 %v4290
      %v5011 = vunpack.c.l.b16 %v4291
      %v5012 = vunpack.c.l.b16 %v4292
      %v5013 = vunpack.c.l.b16 %v4293
      %v5014 = vunpack.c.l.b16 %v4294
      %v5015 = vunpack.c.l.b16 %v4295
      %v5016 = vunpack.c.l.b16 %v4296
      %v5017 = vunpack.c.l.b16 %v4297
      %v5018 = vunpack.c.l.b16 %v4298
      %v5019 = vunpack.c.l.b16 %v4299
      %v5020 = vunpack.c.l.b16 %v4300
      %v5021 = vunpack.c.l.b16 %v4301
      %v5022 = vunpack.c.l.b16 %v4302
      %v5023 = vunpack.c.l.b16 %v4303
      %v5024 = vunpack.c.l.b16 %v4304
      %v5025 = vunpack.c.l.b16 %v4305
      %v5026 = vunpack.c.l.b16 %v4306
      %v5027 = vunpack.c.l.b16 %v4307
      %v5028 = vunpack.c.l.b16 %v4308
      %v5029 = vunpack.c.l.b16 %v4309
      %v5030 = vunpack.c.l.b16 %v4310
      %v5031 = vunpack.c.l.b16 %v4311
      %v5032 = vunpack.c.l.b16 %v4312
      %v5033 = vunpack.c.l.b16 %v4313
      %v5034 = vunpack.c.l.b16 %v4314
      %v5035 = vunpack.c.l.b16 %v4315
      %v5036 = vunpack.c.l.b16 %v4316
      %v5037 = vunpack.c.l.b16 %v4317
      %v5038 = vunpack.c.l.b16 %v4318
      %v5039 = vunpack.c.l.b16 %v4319
      %v5040 = vunpack.c.l.b16 %v4320
      %v5041 = vunpack.c.l.b16 %v4321
      %v5042 = vunpack.c.l.b16 %v4322
      %v5043 = vunpack.c.l.b16 %v4323
      %v5044 = vunpack.c.l.b16 %v4324
      %v5045 = vunpack.c.l.b16 %v4325
      %v5046 = vunpack.c.l.b16 %v4326
      %v5047 = vunpack.c.l.b16 %v4327
      %v5048 = vunpack.c.l.b16 %v4328
      %v5049 = vunpack.c.l.b16 %v4329
      %v5050 = vunpack.c.l.b16 %v4330
      %v5051 = vunpack.c.l.b16 %v4331
      %v5052 = vunpack.c.l.b16 %v4332
      %v5053 = vunpack.c.l.b16 %v4333
      %v5054 = vunpack.c.l.b16 %v4334
      %v5055 = vunpack.c.l.b16 %v4335
      %v5056 = vunpack.c.l.b16 %v4336
      %v5057 = vunpack.c.l.b16 %v4337
      %v5058 = vunpack.c.l.b16 %v4338
      %v5059 = vunpack.c.l.b16 %v4339
      %v5060 = vunpack.c.l.b16 %v4340
      %v5061 = vunpack.c.l.b16 %v4341
      %v5062 = vunpack.c.l.b16 %v4342
      %v5063 = vunpack.c.l.b16 %v4343
      %v5064 = vunpack.c.l.b16 %v4344
      %v5065 = vunpack.c.l.b16 %v4345
      %v5066 = vunpack.c.l.b16 %v4346
      %v5067 = vunpack.c.l.b16 %v4347
      %v5068 = vunpack.c.l.b16 %v4348
      %v5069 = vunpack.c.l.b16 %v4349
      %v5070 = vunpack.c.l.b16 %v4350
      %v5071 = vunpack.c.l.b16 %v4351
      %v5072 = vunpack.c.l.b16 %v4352
      %v5073 = vunpack.c.l.b16 %v4353
      %v5074 = vunpack.c.l.b16 %v4354
      %v5075 = vunpack.c.l.b16 %v4355
      %v5076 = vunpack.c.l.b16 %v4356
      %v5077 = vunpack.c.l.b16 %v4357
      %v5078 = vunpack.c.l.b16 %v4358
      %v5079 = vunpack.c.l.b16 %v4359
      %v5080 = vsel %vm2880, %v4936, %v4920
      %v5081 = vsel %vm2882, %v4952, %v5080
      %v5082 = vsel %vm2884, %v4968, %v5081
      %v5083 = vsel %vm2886, %v4984, %v5082
      %v5084 = vsel %vm2888, %v5000, %v5083
      %v5085 = vsel %vm2890, %v5016, %v5084
      %v5086 = vsel %vm2892, %v5032, %v5085
      %v5087 = vsel %vm2880, %v4937, %v4921
      %v5088 = vsel %vm2882, %v4953, %v5087
      %v5089 = vsel %vm2884, %v4969, %v5088
      %v5090 = vsel %vm2886, %v4985, %v5089
      %v5091 = vsel %vm2888, %v5001, %v5090
      %v5092 = vsel %vm2890, %v5017, %v5091
      %v5093 = vsel %vm2892, %v5033, %v5092
      %v5094 = vsel %vm2880, %v4938, %v4922
      %v5095 = vsel %vm2882, %v4954, %v5094
      %v5096 = vsel %vm2884, %v4970, %v5095
      %v5097 = vsel %vm2886, %v4986, %v5096
      %v5098 = vsel %vm2888, %v5002, %v5097
      %v5099 = vsel %vm2890, %v5018, %v5098
      %v5100 = vsel %vm2892, %v5034, %v5099
      %v5101 = vsel %vm2880, %v4939, %v4923
      %v5102 = vsel %vm2882, %v4955, %v5101
      %v5103 = vsel %vm2884, %v4971, %v5102
      %v5104 = vsel %vm2886, %v4987, %v5103
      %v5105 = vsel %vm2888, %v5003, %v5104
      %v5106 = vsel %vm2890, %v5019, %v5105
      %v5107 = vsel %vm2892, %v5035, %v5106
      %v5108 = vsel %vm2880, %v4940, %v4924
      %v5109 = vsel %vm2882, %v4956, %v5108
      %v5110 = vsel %vm2884, %v4972, %v5109
      %v5111 = vsel %vm2886, %v4988, %v5110
      %v5112 = vsel %vm2888, %v5004, %v5111
      %v5113 = vsel %vm2890, %v5020, %v5112
      %v5114 = vsel %vm2892, %v5036, %v5113
      %v5115 = vsel %vm2880, %v4941, %v4925
      %v5116 = vsel %vm2882, %v4957, %v5115
      %v5117 = vsel %vm2884, %v4973, %v5116
      %v5118 = vsel %vm2886, %v4989, %v5117
      %v5119 = vsel %vm2888, %v5005, %v5118
      %v5120 = vsel %vm2890, %v5021, %v5119
      %v5121 = vsel %vm2892, %v5037, %v5120
      %v5122 = vsel %vm2880, %v4942, %v4926
      %v5123 = vsel %vm2882, %v4958, %v5122
      %v5124 = vsel %vm2884, %v4974, %v5123
      %v5125 = vsel %vm2886, %v4990, %v5124
      %v5126 = vsel %vm2888, %v5006, %v5125
      %v5127 = vsel %vm2890, %v5022, %v5126
      %v5128 = vsel %vm2892, %v5038, %v5127
      %v5129 = vsel %vm2880, %v4943, %v4927
      %v5130 = vsel %vm2882, %v4959, %v5129
      %v5131 = vsel %vm2884, %v4975, %v5130
      %v5132 = vsel %vm2886, %v4991, %v5131
      %v5133 = vsel %vm2888, %v5007, %v5132
      %v5134 = vsel %vm2890, %v5023, %v5133
      %v5135 = vsel %vm2892, %v5039, %v5134
      %v5136 = vsel %vm2880, %v4944, %v4928
      %v5137 = vsel %vm2882, %v4960, %v5136
      %v5138 = vsel %vm2884, %v4976, %v5137
      %v5139 = vsel %vm2886, %v4992, %v5138
      %v5140 = vsel %vm2888, %v5008, %v5139
      %v5141 = vsel %vm2890, %v5024, %v5140
      %v5142 = vsel %vm2892, %v5040, %v5141
      %v5143 = vsel %vm2880, %v4945, %v4929
      %v5144 = vsel %vm2882, %v4961, %v5143
      %v5145 = vsel %vm2884, %v4977, %v5144
      %v5146 = vsel %vm2886, %v4993, %v5145
      %v5147 = vsel %vm2888, %v5009, %v5146
      %v5148 = vsel %vm2890, %v5025, %v5147
      %v5149 = vsel %vm2892, %v5041, %v5148
      %v5150 = vsel %vm2880, %v4946, %v4930
      %v5151 = vsel %vm2882, %v4962, %v5150
      %v5152 = vsel %vm2884, %v4978, %v5151
      %v5153 = vsel %vm2886, %v4994, %v5152
      %v5154 = vsel %vm2888, %v5010, %v5153
      %v5155 = vsel %vm2890, %v5026, %v5154
      %v5156 = vsel %vm2892, %v5042, %v5155
      %v5157 = vsel %vm2880, %v4947, %v4931
      %v5158 = vsel %vm2882, %v4963, %v5157
      %v5159 = vsel %vm2884, %v4979, %v5158
      %v5160 = vsel %vm2886, %v4995, %v5159
      %v5161 = vsel %vm2888, %v5011, %v5160
      %v5162 = vsel %vm2890, %v5027, %v5161
      %v5163 = vsel %vm2892, %v5043, %v5162
      %v5164 = vsel %vm2880, %v4948, %v4932
      %v5165 = vsel %vm2882, %v4964, %v5164
      %v5166 = vsel %vm2884, %v4980, %v5165
      %v5167 = vsel %vm2886, %v4996, %v5166
      %v5168 = vsel %vm2888, %v5012, %v5167
      %v5169 = vsel %vm2890, %v5028, %v5168
      %v5170 = vsel %vm2892, %v5044, %v5169
      %v5171 = vsel %vm2880, %v4949, %v4933
      %v5172 = vsel %vm2882, %v4965, %v5171
      %v5173 = vsel %vm2884, %v4981, %v5172
      %v5174 = vsel %vm2886, %v4997, %v5173
      %v5175 = vsel %vm2888, %v5013, %v5174
      %v5176 = vsel %vm2890, %v5029, %v5175
      %v5177 = vsel %vm2892, %v5045, %v5176
      %v5178 = vsel %vm2880, %v4950, %v4934
      %v5179 = vsel %vm2882, %v4966, %v5178
      %v5180 = vsel %vm2884, %v4982, %v5179
      %v5181 = vsel %vm2886, %v4998, %v5180
      %v5182 = vsel %vm2888, %v5014, %v5181
      %v5183 = vsel %vm2890, %v5030, %v5182
      %v5184 = vsel %vm2892, %v5046, %v5183
      %v5185 = vsel %vm2880, %v4951, %v4935
      %v5186 = vsel %vm2882, %v4967, %v5185
      %v5187 = vsel %vm2884, %v4983, %v5186
      %v5188 = vsel %vm2886, %v4999, %v5187
      %v5189 = vsel %vm2888, %v5015, %v5188
      %v5190 = vsel %vm2890, %v5031, %v5189
      %v5191 = vsel %vm2892, %v5047, %v5190
      %v5192 = vsel %vm2880, %v5064, %v5048
      %v5193 = vsel %vm2880, %v5065, %v5049
      %v5194 = vsel %vm2880, %v5066, %v5050
      %v5195 = vsel %vm2880, %v5067, %v5051
      %v5196 = vsel %vm2880, %v5068, %v5052
      %v5197 = vsel %vm2880, %v5069, %v5053
      %v5198 = vsel %vm2880, %v5070, %v5054
      %v5199 = vsel %vm2880, %v5071, %v5055
      %v5200 = vsel %vm2880, %v5072, %v5056
      %v5201 = vsel %vm2880, %v5073, %v5057
      %v5202 = vsel %vm2880, %v5074, %v5058
      %v5203 = vsel %vm2880, %v5075, %v5059
      %v5204 = vsel %vm2880, %v5076, %v5060
      %v5205 = vsel %vm2880, %v5077, %v5061
      %v5206 = vsel %vm2880, %v5078, %v5062
      %v5207 = vsel %vm2880, %v5079, %v5063
      %v5208 = vpack.c.b16 %v5192, %v5086
      %v5209 = vpack.c.b16 %v5193, %v5093
      %v5210 = vpack.c.b16 %v5194, %v5100
      %v5211 = vpack.c.b16 %v5195, %v5107
      %v5212 = vpack.c.b16 %v5196, %v5114
      %v5213 = vpack.c.b16 %v5197, %v5121
      %v5214 = vpack.c.b16 %v5198, %v5128
      %v5215 = vpack.c.b16 %v5199, %v5135
      %v5216 = vpack.c.b16 %v5200, %v5142
      %v5217 = vpack.c.b16 %v5201, %v5149
      %v5218 = vpack.c.b16 %v5202, %v5156
      %v5219 = vpack.c.b16 %v5203, %v5163
      %v5220 = vpack.c.b16 %v5204, %v5170
      %v5221 = vpack.c.b16 %v5205, %v5177
      %v5222 = vpack.c.b16 %v5206, %v5184
      %v5223 = vpack.c.b16 %v5207, %v5191
      %5240 = vmatprep.subr.bf16.mxu0 0
      %5241 = vmatpush1.bf16.xpose.msra.mxu0 0
      %5242 = vmatprep.subr.bf16.mxu0 0
      %5243 = vmatpush1.bf16.xpose.msra.mxu0 0
      %5244 = vmatprep.subr.bf16.mxu0 0
      %5245 = vmatpush1.bf16.xpose.msra.mxu0 0
      %5246 = vmatprep.subr.bf16.mxu0 0
      %5247 = vmatpush1.bf16.xpose.msra.mxu0 0
      %5248 = vmatprep.subr.bf16.mxu0 0
      %5249 = vmatpush1.bf16.xpose.msra.mxu0 0
      %5250 = vmatprep.subr.bf16.mxu0 0
      %5251 = vmatpush1.bf16.xpose.msra.mxu0 0
      %5252 = vmatprep.subr.bf16.mxu0 0
      %5253 = vmatpush1.bf16.xpose.msra.mxu0 0
      %5254 = vmatprep.subr.bf16.mxu0 %v5209
      %5255 = vmatpush1.bf16.xpose.msra.mxu0 %v5208
      %5256 = vmatprep.subr.bf16.mxu0 0
      %5257 = vmatpush2.bf16.xpose.msra.mxu0 0
      %5258 = vmatprep.subr.bf16.mxu0 0
      %5259 = vmatpush2.bf16.xpose.msra.mxu0 0
      %5260 = vmatprep.subr.bf16.mxu0 0
      %5261 = vmatpush2.bf16.xpose.msra.mxu0 0
      %5262 = vmatprep.subr.bf16.mxu0 0
      %5263 = vmatpush2.bf16.xpose.msra.mxu0 0
      %5264 = vmatprep.subr.bf16.mxu0 0
      %5265 = vmatpush2.bf16.xpose.msra.mxu0 0
      %5266 = vmatprep.subr.bf16.mxu0 0
      %5267 = vmatpush2.bf16.xpose.msra.mxu0 0
      %5268 = vmatprep.subr.bf16.mxu0 0
      %5269 = vmatpush2.bf16.xpose.msra.mxu0 0
      %5270 = vmatprep.subr.bf16.mxu0 0
      %5271 = vmatpush2.bf16.xpose.msra.mxu0 0
      %5272 = vmatprep.mubr.bf16.mxu0 %v4729
      %5273 = vmatmul.mubr.bf16.gmra.mxu0 %v4728
      %v5274 = vpop.f32.mrf.mxu0
      %v5275 = vadd.f32 0.0, %v5274
      %v5276 = vpop.f32.mrf.mxu0
      %v5277 = vpop.f32.mrf.mxu0
      %v5278 = vpop.f32.mrf.mxu0
      %5279 = vdwg.mxu0
      %5280 = vmatprep.subr.bf16.mxu0 0
      %5281 = vmatpush1.bf16.xpose.msra.mxu0 0
      %5282 = vmatprep.subr.bf16.mxu0 0
      %5283 = vmatpush1.bf16.xpose.msra.mxu0 0
      %5284 = vmatprep.subr.bf16.mxu0 0
      %5285 = vmatpush1.bf16.xpose.msra.mxu0 0
      %5286 = vmatprep.subr.bf16.mxu0 0
      %5287 = vmatpush1.bf16.xpose.msra.mxu0 0
      %5288 = vmatprep.subr.bf16.mxu0 0
      %5289 = vmatpush1.bf16.xpose.msra.mxu0 0
      %5290 = vmatprep.subr.bf16.mxu0 0
      %5291 = vmatpush1.bf16.xpose.msra.mxu0 0
      %5292 = vmatprep.subr.bf16.mxu0 0
      %5293 = vmatpush1.bf16.xpose.msra.mxu0 0
      %5294 = vmatprep.subr.bf16.mxu0 %v5211
      %5295 = vmatpush1.bf16.xpose.msra.mxu0 %v5210
      %5296 = vmatprep.subr.bf16.mxu0 0
      %5297 = vmatpush2.bf16.xpose.msra.mxu0 0
      %5298 = vmatprep.subr.bf16.mxu0 0
      %5299 = vmatpush2.bf16.xpose.msra.mxu0 0
      %5300 = vmatprep.subr.bf16.mxu0 0
      %5301 = vmatpush2.bf16.xpose.msra.mxu0 0
      %5302 = vmatprep.subr.bf16.mxu0 0
      %5303 = vmatpush2.bf16.xpose.msra.mxu0 0
      %5304 = vmatprep.subr.bf16.mxu0 0
      %5305 = vmatpush2.bf16.xpose.msra.mxu0 0
      %5306 = vmatprep.subr.bf16.mxu0 0
      %5307 = vmatpush2.bf16.xpose.msra.mxu0 0
      %5308 = vmatprep.subr.bf16.mxu0 0
      %5309 = vmatpush2.bf16.xpose.msra.mxu0 0
      %5310 = vmatprep.subr.bf16.mxu0 0
      %5311 = vmatpush2.bf16.xpose.msra.mxu0 0
      %5312 = vmatprep.mubr.bf16.mxu0 %v4731
      %5313 = vmatmul.mubr.bf16.gmra.mxu0 %v4730
      %v5314 = vpop.f32.mrf.mxu0
      %v5315 = vadd.f32 %v5275, %v5314
      %v5316 = vpop.f32.mrf.mxu0
      %v5317 = vpop.f32.mrf.mxu0
      %v5318 = vpop.f32.mrf.mxu0
      %5319 = vdwg.mxu0
      %5320 = vmatprep.subr.bf16.mxu0 0
      %5321 = vmatpush1.bf16.xpose.msra.mxu0 0
      %5322 = vmatprep.subr.bf16.mxu0 0
      %5323 = vmatpush1.bf16.xpose.msra.mxu0 0
      %5324 = vmatprep.subr.bf16.mxu0 0
      %5325 = vmatpush1.bf16.xpose.msra.mxu0 0
      %5326 = vmatprep.subr.bf16.mxu0 0
      %5327 = vmatpush1.bf16.xpose.msra.mxu0 0
      %5328 = vmatprep.subr.bf16.mxu0 0
      %5329 = vmatpush1.bf16.xpose.msra.mxu0 0
      %5330 = vmatprep.subr.bf16.mxu0 0
      %5331 = vmatpush1.bf16.xpose.msra.mxu0 0
      %5332 = vmatprep.subr.bf16.mxu0 0
      %5333 = vmatpush1.bf16.xpose.msra.mxu0 0
      %5334 = vmatprep.subr.bf16.mxu0 %v5213
      %5335 = vmatpush1.bf16.xpose.msra.mxu0 %v5212
      %5336 = vmatprep.subr.bf16.mxu0 0
      %5337 = vmatpush2.bf16.xpose.msra.mxu0 0
      %5338 = vmatprep.subr.bf16.mxu0 0
      %5339 = vmatpush2.bf16.xpose.msra.mxu0 0
      %5340 = vmatprep.subr.bf16.mxu0 0
      %5341 = vmatpush2.bf16.xpose.msra.mxu0 0
      %5342 = vmatprep.subr.bf16.mxu0 0
      %5343 = vmatpush2.bf16.xpose.msra.mxu0 0
      %5344 = vmatprep.subr.bf16.mxu0 0
      %5345 = vmatpush2.bf16.xpose.msra.mxu0 0
      %5346 = vmatprep.subr.bf16.mxu0 0
      %5347 = vmatpush2.bf16.xpose.msra.mxu0 0
      %5348 = vmatprep.subr.bf16.mxu0 0
      %5349 = vmatpush2.bf16.xpose.msra.mxu0 0
      %5350 = vmatprep.subr.bf16.mxu0 0
      %5351 = vmatpush2.bf16.xpose.msra.mxu0 0
      %5352 = vmatprep.mubr.bf16.mxu0 %v4733
      %5353 = vmatmul.mubr.bf16.gmra.mxu0 %v4732
      %v5354 = vpop.f32.mrf.mxu0
      %v5355 = vadd.f32 %v5315, %v5354
      %v5356 = vpop.f32.mrf.mxu0
      %v5357 = vpop.f32.mrf.mxu0
      %v5358 = vpop.f32.mrf.mxu0
      %5359 = vdwg.mxu0
      %5360 = vmatprep.subr.bf16.mxu0 0
      %5361 = vmatpush1.bf16.xpose.msra.mxu0 0
      %5362 = vmatprep.subr.bf16.mxu0 0
      %5363 = vmatpush1.bf16.xpose.msra.mxu0 0
      %5364 = vmatprep.subr.bf16.mxu0 0
      %5365 = vmatpush1.bf16.xpose.msra.mxu0 0
      %5366 = vmatprep.subr.bf16.mxu0 0
      %5367 = vmatpush1.bf16.xpose.msra.mxu0 0
      %5368 = vmatprep.subr.bf16.mxu0 0
      %5369 = vmatpush1.bf16.xpose.msra.mxu0 0
      %5370 = vmatprep.subr.bf16.mxu0 0
      %5371 = vmatpush1.bf16.xpose.msra.mxu0 0
      %5372 = vmatprep.subr.bf16.mxu0 0
      %5373 = vmatpush1.bf16.xpose.msra.mxu0 0
      %5374 = vmatprep.subr.bf16.mxu0 %v5215
      %5375 = vmatpush1.bf16.xpose.msra.mxu0 %v5214
      %5376 = vmatprep.subr.bf16.mxu0 0
      %5377 = vmatpush2.bf16.xpose.msra.mxu0 0
      %5378 = vmatprep.subr.bf16.mxu0 0
      %5379 = vmatpush2.bf16.xpose.msra.mxu0 0
      %5380 = vmatprep.subr.bf16.mxu0 0
      %5381 = vmatpush2.bf16.xpose.msra.mxu0 0
      %5382 = vmatprep.subr.bf16.mxu0 0
      %5383 = vmatpush2.bf16.xpose.msra.mxu0 0
      %5384 = vmatprep.subr.bf16.mxu0 0
      %5385 = vmatpush2.bf16.xpose.msra.mxu0 0
      %5386 = vmatprep.subr.bf16.mxu0 0
      %5387 = vmatpush2.bf16.xpose.msra.mxu0 0
      %5388 = vmatprep.subr.bf16.mxu0 0
      %5389 = vmatpush2.bf16.xpose.msra.mxu0 0
      %5390 = vmatprep.subr.bf16.mxu0 0
      %5391 = vmatpush2.bf16.xpose.msra.mxu0 0
      %5392 = vmatprep.mubr.bf16.mxu0 %v4735
      %5393 = vmatmul.mubr.bf16.gmra.mxu0 %v4734
      %v5394 = vpop.f32.mrf.mxu0
      %v5395 = vadd.f32 %v5355, %v5394
      %v5396 = vpop.f32.mrf.mxu0
      %v5397 = vpop.f32.mrf.mxu0
      %v5398 = vpop.f32.mrf.mxu0
      %5399 = vdwg.mxu0
      %5400 = vmatprep.subr.bf16.mxu0 0
      %5401 = vmatpush1.bf16.xpose.msra.mxu0 0
      %5402 = vmatprep.subr.bf16.mxu0 0
      %5403 = vmatpush1.bf16.xpose.msra.mxu0 0
      %5404 = vmatprep.subr.bf16.mxu0 0
      %5405 = vmatpush1.bf16.xpose.msra.mxu0 0
      %5406 = vmatprep.subr.bf16.mxu0 0
      %5407 = vmatpush1.bf16.xpose.msra.mxu0 0
      %5408 = vmatprep.subr.bf16.mxu0 0
      %5409 = vmatpush1.bf16.xpose.msra.mxu0 0
      %5410 = vmatprep.subr.bf16.mxu0 0
      %5411 = vmatpush1.bf16.xpose.msra.mxu0 0
      %5412 = vmatprep.subr.bf16.mxu0 0
      %5413 = vmatpush1.bf16.xpose.msra.mxu0 0
      %5414 = vmatprep.subr.bf16.mxu0 %v5217
      %5415 = vmatpush1.bf16.xpose.msra.mxu0 %v5216
      %5416 = vmatprep.subr.bf16.mxu0 0
      %5417 = vmatpush2.bf16.xpose.msra.mxu0 0
      %5418 = vmatprep.subr.bf16.mxu0 0
      %5419 = vmatpush2.bf16.xpose.msra.mxu0 0
      %5420 = vmatprep.subr.bf16.mxu0 0
      %5421 = vmatpush2.bf16.xpose.msra.mxu0 0
      %5422 = vmatprep.subr.bf16.mxu0 0
      %5423 = vmatpush2.bf16.xpose.msra.mxu0 0
      %5424 = vmatprep.subr.bf16.mxu0 0
      %5425 = vmatpush2.bf16.xpose.msra.mxu0 0
      %5426 = vmatprep.subr.bf16.mxu0 0
      %5427 = vmatpush2.bf16.xpose.msra.mxu0 0
      %5428 = vmatprep.subr.bf16.mxu0 0
      %5429 = vmatpush2.bf16.xpose.msra.mxu0 0
      %5430 = vmatprep.subr.bf16.mxu0 0
      %5431 = vmatpush2.bf16.xpose.msra.mxu0 0
      %5432 = vmatprep.mubr.bf16.mxu0 %v4737
      %5433 = vmatmul.mubr.bf16.gmra.mxu0 %v4736
      %v5434 = vpop.f32.mrf.mxu0
      %v5435 = vadd.f32 %v5395, %v5434
      %v5436 = vpop.f32.mrf.mxu0
      %v5437 = vpop.f32.mrf.mxu0
      %v5438 = vpop.f32.mrf.mxu0
      %5439 = vdwg.mxu0
      %5440 = vmatprep.subr.bf16.mxu0 0
      %5441 = vmatpush1.bf16.xpose.msra.mxu0 0
      %5442 = vmatprep.subr.bf16.mxu0 0
      %5443 = vmatpush1.bf16.xpose.msra.mxu0 0
      %5444 = vmatprep.subr.bf16.mxu0 0
      %5445 = vmatpush1.bf16.xpose.msra.mxu0 0
      %5446 = vmatprep.subr.bf16.mxu0 0
      %5447 = vmatpush1.bf16.xpose.msra.mxu0 0
      %5448 = vmatprep.subr.bf16.mxu0 0
      %5449 = vmatpush1.bf16.xpose.msra.mxu0 0
      %5450 = vmatprep.subr.bf16.mxu0 0
      %5451 = vmatpush1.bf16.xpose.msra.mxu0 0
      %5452 = vmatprep.subr.bf16.mxu0 0
      %5453 = vmatpush1.bf16.xpose.msra.mxu0 0
      %5454 = vmatprep.subr.bf16.mxu0 %v5219
      %5455 = vmatpush1.bf16.xpose.msra.mxu0 %v5218
      %5456 = vmatprep.subr.bf16.mxu0 0
      %5457 = vmatpush2.bf16.xpose.msra.mxu0 0
      %5458 = vmatprep.subr.bf16.mxu0 0
      %5459 = vmatpush2.bf16.xpose.msra.mxu0 0
      %5460 = vmatprep.subr.bf16.mxu0 0
      %5461 = vmatpush2.bf16.xpose.msra.mxu0 0
      %5462 = vmatprep.subr.bf16.mxu0 0
      %5463 = vmatpush2.bf16.xpose.msra.mxu0 0
      %5464 = vmatprep.subr.bf16.mxu0 0
      %5465 = vmatpush2.bf16.xpose.msra.mxu0 0
      %5466 = vmatprep.subr.bf16.mxu0 0
      %5467 = vmatpush2.bf16.xpose.msra.mxu0 0
      %5468 = vmatprep.subr.bf16.mxu0 0
      %5469 = vmatpush2.bf16.xpose.msra.mxu0 0
      %5470 = vmatprep.subr.bf16.mxu0 0
      %5471 = vmatpush2.bf16.xpose.msra.mxu0 0
      %5472 = vmatprep.mubr.bf16.mxu0 %v4739
      %5473 = vmatmul.mubr.bf16.gmra.mxu0 %v4738
      %v5474 = vpop.f32.mrf.mxu0
      %v5475 = vadd.f32 %v5435, %v5474
      %v5476 = vpop.f32.mrf.mxu0
      %v5477 = vpop.f32.mrf.mxu0
      %v5478 = vpop.f32.mrf.mxu0
      %5479 = vdwg.mxu0
      %5480 = vmatprep.subr.bf16.mxu0 0
      %5481 = vmatpush1.bf16.xpose.msra.mxu0 0
      %5482 = vmatprep.subr.bf16.mxu0 0
      %5483 = vmatpush1.bf16.xpose.msra.mxu0 0
      %5484 = vmatprep.subr.bf16.mxu0 0
      %5485 = vmatpush1.bf16.xpose.msra.mxu0 0
      %5486 = vmatprep.subr.bf16.mxu0 0
      %5487 = vmatpush1.bf16.xpose.msra.mxu0 0
      %5488 = vmatprep.subr.bf16.mxu0 0
      %5489 = vmatpush1.bf16.xpose.msra.mxu0 0
      %5490 = vmatprep.subr.bf16.mxu0 0
      %5491 = vmatpush1.bf16.xpose.msra.mxu0 0
      %5492 = vmatprep.subr.bf16.mxu0 0
      %5493 = vmatpush1.bf16.xpose.msra.mxu0 0
      %5494 = vmatprep.subr.bf16.mxu0 %v5221
      %5495 = vmatpush1.bf16.xpose.msra.mxu0 %v5220
      %5496 = vmatprep.subr.bf16.mxu0 0
      %5497 = vmatpush2.bf16.xpose.msra.mxu0 0
      %5498 = vmatprep.subr.bf16.mxu0 0
      %5499 = vmatpush2.bf16.xpose.msra.mxu0 0
      %5500 = vmatprep.subr.bf16.mxu0 0
      %5501 = vmatpush2.bf16.xpose.msra.mxu0 0
      %5502 = vmatprep.subr.bf16.mxu0 0
      %5503 = vmatpush2.bf16.xpose.msra.mxu0 0
      %5504 = vmatprep.subr.bf16.mxu0 0
      %5505 = vmatpush2.bf16.xpose.msra.mxu0 0
      %5506 = vmatprep.subr.bf16.mxu0 0
      %5507 = vmatpush2.bf16.xpose.msra.mxu0 0
      %5508 = vmatprep.subr.bf16.mxu0 0
      %5509 = vmatpush2.bf16.xpose.msra.mxu0 0
      %5510 = vmatprep.subr.bf16.mxu0 0
      %5511 = vmatpush2.bf16.xpose.msra.mxu0 0
      %5512 = vmatprep.mubr.bf16.mxu0 %v4741
      %5513 = vmatmul.mubr.bf16.gmra.mxu0 %v4740
      %v5514 = vpop.f32.mrf.mxu0
      %v5515 = vadd.f32 %v5475, %v5514
      %v5516 = vpop.f32.mrf.mxu0
      %v5517 = vpop.f32.mrf.mxu0
      %v5518 = vpop.f32.mrf.mxu0
      %5519 = vdwg.mxu0
      %5520 = vmatprep.subr.bf16.mxu0 0
      %5521 = vmatpush1.bf16.xpose.msra.mxu0 0
      %5522 = vmatprep.subr.bf16.mxu0 0
      %5523 = vmatpush1.bf16.xpose.msra.mxu0 0
      %5524 = vmatprep.subr.bf16.mxu0 0
      %5525 = vmatpush1.bf16.xpose.msra.mxu0 0
      %5526 = vmatprep.subr.bf16.mxu0 0
      %5527 = vmatpush1.bf16.xpose.msra.mxu0 0
      %5528 = vmatprep.subr.bf16.mxu0 0
      %5529 = vmatpush1.bf16.xpose.msra.mxu0 0
      %5530 = vmatprep.subr.bf16.mxu0 0
      %5531 = vmatpush1.bf16.xpose.msra.mxu0 0
      %5532 = vmatprep.subr.bf16.mxu0 0
      %5533 = vmatpush1.bf16.xpose.msra.mxu0 0
      %5534 = vmatprep.subr.bf16.mxu0 %v5223
      %5535 = vmatpush1.bf16.xpose.msra.mxu0 %v5222
      %5536 = vmatprep.subr.bf16.mxu0 0
      %5537 = vmatpush2.bf16.xpose.msra.mxu0 0
      %5538 = vmatprep.subr.bf16.mxu0 0
      %5539 = vmatpush2.bf16.xpose.msra.mxu0 0
      %5540 = vmatprep.subr.bf16.mxu0 0
      %5541 = vmatpush2.bf16.xpose.msra.mxu0 0
      %5542 = vmatprep.subr.bf16.mxu0 0
      %5543 = vmatpush2.bf16.xpose.msra.mxu0 0
      %5544 = vmatprep.subr.bf16.mxu0 0
      %5545 = vmatpush2.bf16.xpose.msra.mxu0 0
      %5546 = vmatprep.subr.bf16.mxu0 0
      %5547 = vmatpush2.bf16.xpose.msra.mxu0 0
      %5548 = vmatprep.subr.bf16.mxu0 0
      %5549 = vmatpush2.bf16.xpose.msra.mxu0 0
      %5550 = vmatprep.subr.bf16.mxu0 0
      %5551 = vmatpush2.bf16.xpose.msra.mxu0 0
      %5552 = vmatprep.mubr.bf16.mxu0 %v4743
      %5553 = vmatmul.mubr.bf16.gmra.mxu0 %v4742
      %v5554 = vpop.f32.mrf.mxu0
      %v5555 = vadd.f32 %v5515, %v5554
      %v5556 = vpop.f32.mrf.mxu0
      %v5557 = vpop.f32.mrf.mxu0
      %v5558 = vpop.f32.mrf.mxu0
      %5559 = vdwg.mxu0
      %v5560 = vlaneseq
      %v5561 = vshrl.u32 %v5560, 7
      %v5562 = vsub.s32 0, %v5561
      %v5563 = vrot.slane %v4069, %v5562
      %v5564 = vadd.f32 %v3031, %v5563
      %v5565 = vmul.f32 %v5555, 2.0
      %v5566 = vsub.f32 %v5564, %v5565
      %v5567 = vmax.f32 %v5566, 0.0
      %v5568 = vrsqrt.pop %v5567
      %v5569 = vmul.f32 %v5567, %v5568
      %vm5570 = vcmp.eq.f32.partialorder %v5567, inf
      %v5571 = vsel %vm5570, %v5567, %v5569
      %vm5572 = vcmp.eq.f32.partialorder %v5567, 0.0
      %v5573 = vand.u32 %v5567, 2147483648
      %v5574 = vsel %vm5572, %v5573, %v5571
      %v5575 = vld [vmem:[%s2] sm:$0xff]
      %v5576 = vld [vmem:[%s2 + $0x8] sm:$0x3]
      %vm5577 = vcmask 80896
      %v5579 = vsel %vm5577, %v5574, 0
      %vm5581 = vcmask 1041408
      %v5583 = vsel %vm5581, %v5576, 0
      %5585 = vmatprep.subr.mxu0 0.0
      %5586 = vmatpush1.msra.mxu0 0.0
      %5587 = vmatprep.subr.mxu0 0.0
      %5588 = vmatpush1.msra.mxu0 0.0
      %5589 = vmatprep.subr.mxu0 0.0
      %5590 = vmatpush1.msra.mxu0 0.0
      %5591 = vmatprep.subr.mxu0 0.0
      %5592 = vmatpush1.msra.mxu0 0.0
      %5593 = vmatprep.subr.mxu0 0.0
      %5594 = vmatpush1.msra.mxu0 0.0
      %5595 = vmatprep.subr.mxu0 0.0
      %5596 = vmatpush1.msra.mxu0 0.0
      %5597 = vmatprep.subr.mxu0 0.0
      %5598 = vmatpush1.msra.mxu0 0.0
      %5599 = vmatprep.subr.mxu0 0.0
      %5600 = vmatpush1.msra.mxu0 0.0
      %5601 = vmatprep.subr.mxu0 0.0
      %5602 = vmatpush1.msra.mxu0 0.0
      %5603 = vmatprep.subr.mxu0 0.0
      %5604 = vmatpush1.msra.mxu0 0.0
      %5605 = vmatprep.subr.mxu0 0.0
      %5606 = vmatpush1.msra.mxu0 0.0
      %5607 = vmatprep.subr.mxu0 0.0
      %5608 = vmatpush1.msra.mxu0 0.0
      %5609 = vmatprep.subr.mxu0 0.0
      %5610 = vmatpush1.msra.mxu0 0.0
      %5611 = vmatprep.subr.mxu0 0.0
      %5612 = vmatpush1.msra.mxu0 0.0
      %5613 = vmatprep.subr.mxu0 0.0
      %5614 = vmatpush1.msra.mxu0 %v5583
      %5615 = vmatprep.subr.mxu0 0.0
      %5616 = vmatpush1.msra.mxu0 %v5575
      %5617 = vmatprep.subr.mxu0 0.0
      %5618 = vmatpush2.msra.mxu0 0.0
      %5619 = vmatprep.subr.mxu0 0.0
      %5620 = vmatpush2.msra.mxu0 0.0
      %5621 = vmatprep.subr.mxu0 0.0
      %5622 = vmatpush2.msra.mxu0 0.0
      %5623 = vmatprep.subr.mxu0 0.0
      %5624 = vmatpush2.msra.mxu0 0.0
      %5625 = vmatprep.subr.mxu0 0.0
      %5626 = vmatpush2.msra.mxu0 0.0
      %5627 = vmatprep.subr.mxu0 0.0
      %5628 = vmatpush2.msra.mxu0 0.0
      %5629 = vmatprep.subr.mxu0 0.0
      %5630 = vmatpush2.msra.mxu0 0.0
      %5631 = vmatprep.subr.mxu0 0.0
      %5632 = vmatpush2.msra.mxu0 0.0
      %5633 = vmatprep.subr.mxu0 0.0
      %5634 = vmatpush2.msra.mxu0 0.0
      %5635 = vmatprep.subr.mxu0 0.0
      %5636 = vmatpush2.msra.mxu0 0.0
      %5637 = vmatprep.subr.mxu0 0.0
      %5638 = vmatpush2.msra.mxu0 0.0
      %5639 = vmatprep.subr.mxu0 0.0
      %5640 = vmatpush2.msra.mxu0 0.0
      %5641 = vmatprep.subr.mxu0 0.0
      %5642 = vmatpush2.msra.mxu0 0.0
      %5643 = vmatprep.subr.mxu0 0.0
      %5644 = vmatpush2.msra.mxu0 0.0
      %5645 = vmatprep.subr.mxu0 0.0
      %5646 = vmatpush2.msra.mxu0 0.0
      %5647 = vmatprep.subr.mxu0 0.0
      %5648 = vmatpush2.msra.mxu0 0.0
      %5649 = vmatprep.mubr.f32.mxu0 0.0
      %5650 = vmatmul.mubr.f32.gmra.mxu0 %v5579
      %v5651 = vpop.f32.mrf.mxu0
      %v5652 = vadd.f32 0.0, %v5651
      %v5653 = vpop.f32.mrf.mxu0
      %5654 = vdwg.mxu0
      %vm5655 = vcmask 39936
      %5656 = vst.msk [vmem:[%s173] sm:$0xff] %vm5655, %v5652
      %p5657 = scmp.lt.s32.totalorder %s14, 2
      %s5658 = scalar_select %p5657, %s14, 2
      %s5659 = smul.addr %s5658, 8
      %s5660 = scalar_lea.vmem %s3, %s5659
      // Predicated region
      $region33: #{e_dist_forward.1} parent=31 // pred_check
        %p5661 = pneg %p100
      $region34: #{e_dist_forward.1} parent=31 // pred_check_branch
        %5663 = sbr.rel (%p5661) target = $region36
      $region35: #{e_dist_forward.1} parent=31 // pred_region
        _
      $region36: #{e_dist_forward.1} parent=31 // pred_fallthru
        _
    $region32: #{e_dist_forward.1} parent=5 // pred_fallthru
      _
    %p5664 = scmp.le.s32.totalorder 2, %s9
    // Predicated region
    $region37: #{e_dist_forward.1} parent=5 // pred_check
      %p5665 = pneg %p5664
    $region38: #{e_dist_forward.1} parent=5 // pred_check_branch
      %5667 = sbr.rel (%p5665) target = $region40
    $region39: #{e_dist_forward.1} parent=5 // pred_region
      %s5668 = ssub.s32 %s9, 2
      // Predicated region
      $region41: #{e_dist_forward.1} parent=39 // pred_check
        %p5669 = pneg %p106
      $region42: #{e_dist_forward.1} parent=39 // pred_check_branch
        %5671 = sbr.rel (%p5669) target = $region44
      $region43: #{e_dist_forward.1} parent=39 // pred_region
        %p5672 = scmp.lt.s32.totalorder %s15, 2
        %s5673 = scalar_select %p5672, %s15, 2
        %s5674 = smul.addr %s5673, 8
        %s5675 = scalar_lea.vmem %s3, %s5674
      $region44: #{e_dist_forward.1} parent=39 // pred_fallthru
        _
    $region40: #{e_dist_forward.1} parent=5 // pred_fallthru
      _
  $region6: #{e_dist_forward.1} parent=0 // loop_footer
    %s13 = sadd.s32 1, %s9
  $region7: #{e_dist_forward.1} parent=0 // loop_footer_branch
    %8 = sbr.rel target = $region3
  $region8: #{e_dist_forward.1} parent=0 // loop_exit
    _

</llo_original>
